<compile_context>
chip_gen: v7x
topology: tpu7x:2x2x1
jax: 0.10.0
libtpu: 0.0.40
codegen_flags: <defaults>
</compile_context>

<pallas_src>
import functools

import jax
import jax.numpy as jnp
from jax.experimental import pallas as pl
from jax.experimental.pallas import tpu as pltpu


SUB = 8      # sublanes per vreg
LANE = 128   # lanes per vreg
TILE = SUB * LANE  # batch elements handled per grid step (one vreg per value)


# ----------------------------- plain-JAX glue (parameter setup) --------------

def _rpy2r(rpy):
    """roll-pitch-yaw (3,) -> rotation matrix (3,3); R = Rz(y) @ Ry(p) @ Rx(r)."""
    r, p, y = rpy[0], rpy[1], rpy[2]
    cr, sr = jnp.cos(r), jnp.sin(r)
    cp, sp = jnp.cos(p), jnp.sin(p)
    cy, sy = jnp.cos(y), jnp.sin(y)
    row0 = jnp.stack([cy * cp, cy * sp * sr - sy * cr, cy * sp * cr + sy * sr])
    row1 = jnp.stack([sy * cp, sy * sp * sr + cy * cr, sy * sp * cr - cy * sr])
    row2 = jnp.stack([-sp, cp * sr, cp * cr])
    return jnp.stack([row0, row1, row2])


def _pr2t(pos, R):
    """position (3,) + rotation (3,3) -> homogeneous transform (4,4)."""
    top = jnp.concatenate([R, pos.reshape(3, 1)], axis=1)
    bot = jnp.array([[0.0, 0.0, 0.0, 1.0]], dtype=jnp.float32)
    return jnp.concatenate([top, bot], axis=0)


def _twist_params(tw):
    """tw: (n_joint, 6) -> (n_joint, 12) per-joint scalar table for SMEM.

    Layout per joint: [w0,w1,w2, v0,v1,v2, a, 1/a, 1/a^2, 1/a^3, a^2, small].
    Reciprocals are computed here (scalar, once) so the kernel never divides.
    """
    tw = tw.astype(jnp.float32)
    w = tw[:, 0:3]
    v = tw[:, 3:6]
    a2 = jnp.sum(w * w, axis=1)
    a = jnp.sqrt(a2)
    small = a2 < 1e-12
    safe = jnp.where(small, jnp.ones_like(a), a)
    inv_a = jnp.where(small, jnp.zeros_like(a), 1.0 / safe)
    inv_a2 = inv_a * inv_a
    inv_a3 = inv_a2 * inv_a
    flag = small.astype(jnp.float32)
    cols = [w, v, a[:, None], inv_a[:, None], inv_a2[:, None],
            inv_a3[:, None], a2[:, None], flag[:, None]]
    return jnp.concatenate(cols, axis=1)


# ----------------------------- Pallas kernel ---------------------------------

def poe_kernel(q_ref, rev_ref, pri_ref, bt_ref,
               outs_ref, revls_ref, prisls_ref, *, branchLs):
    n_joint = len(branchLs)

    ones = jnp.ones((SUB, LANE), jnp.float32)
    zeros = jnp.zeros((SUB, LANE), jnp.float32)

    # Carried SE(3) state (out = [R p; 0 1]) — each entry one full vreg tile.
    R = [[ones if i == k else zeros for k in range(3)] for i in range(3)]
    p = [zeros, zeros, zeros]

    def load_twist(par_ref, j):
        b = 12 * j
        w = [par_ref[b + 0], par_ref[b + 1], par_ref[b + 2]]
        v = [par_ref[b + 3], par_ref[b + 4], par_ref[b + 5]]
        a = par_ref[b + 6]
        inv_a = par_ref[b + 7]
        inv_a2 = par_ref[b + 8]
        inv_a3 = par_ref[b + 9]
        a2 = par_ref[b + 10]
        flag = par_ref[b + 11]           # 1.0 iff |w| ~ 0
        return w, v, a, inv_a, inv_a2, inv_a3, a2, flag

    def cross_s(a, b):                   # scalar (sreg) cross product
        return [a[1] * b[2] - a[2] * b[1],
                a[2] * b[0] - a[0] * b[2],
                a[0] * b[1] - a[1] * b[0]]

    def adinv_angular(R, w):
        # R^T w : angular part of Ad(T)^-1 [w; v]   (w scalar, R vector tiles)
        return [R[0][i] * w[0] + R[1][i] * w[1] + R[2][i] * w[2]
                for i in range(3)]

    def adinv_linear(R, p, w, v):
        # R^T (v - p x w) : linear part of Ad(T)^-1 [w; v]
        cx = [p[1] * w[2] - p[2] * w[1],
              p[2] * w[0] - p[0] * w[2],
              p[0] * w[1] - p[1] * w[0]]
        t = [v[k] - cx[k] for k in range(3)]
        return [R[0][i] * t[0] + R[1][i] * t[1] + R[2][i] * t[2]
                for i in range(3)]

    def screw_exp(w, v, a, inv_a, inv_a2, inv_a3, a2, flag, q):
        # exact exp([w; v] * q)  (srodrigues).  Parameter-only math is scalar;
        # only phi, sin/cos, s1..s3 and the ER/Ep assembly are vector ops.
        phi = a * q
        sinp = jnp.sin(phi)
        cosp = jnp.cos(phi)
        q2 = q * q
        # small-angle series limits (q, q^2/2, q^3/6) folded in branchlessly:
        # when flag==1 the inv_a* terms are exactly 0 (set in the wrapper).
        s1 = sinp * inv_a + flag * q
        s2 = (1.0 - cosp) * inv_a2 + flag * (0.5 * q2)
        s3 = (phi - sinp) * inv_a3 + flag * (q2 * q * (1.0 / 6.0))
        # K = skew(w), K^2 = w w^T - |w|^2 I, K v = w x v  -> all scalar.
        K = [[0.0, -w[2], w[1]],
             [w[2], 0.0, -w[0]],
             [-w[1], w[0], 0.0]]
        K2 = [[w[i] * w[k] - (a2 if i == k else 0.0) for k in range(3)]
              for i in range(3)]
        Kv = cross_s(w, v)
        K2v = cross_s(w, Kv)
        ER = []
        for i in range(3):
            row = []
            for k in range(3):
                if i == k:
                    row.append(1.0 + s2 * K2[i][k])
                else:
                    row.append(s1 * K[i][k] + s2 * K2[i][k])
            ER.append(row)
        Ep = [q * v[i] + s2 * Kv[i] + s3 * K2v[i] for i in range(3)]
        return ER, Ep

    def compose(R, p, ER, Ep):
        # out' = out @ E for SE(3); ER/Ep entries may be vectors or scalars.
        Rn = [[R[i][0] * ER[0][k] + R[i][1] * ER[1][k] + R[i][2] * ER[2][k]
               for k in range(3)] for i in range(3)]
        pn = [R[i][0] * Ep[0] + R[i][1] * Ep[1] + R[i][2] * Ep[2] + p[i]
              for i in range(3)]
        return Rn, pn

    branch_idx = 0
    for j in range(n_joint):
        q_rev = q_ref[2 * j]        # (8, 128) batch tile
        q_pri = q_ref[2 * j + 1]

        wr, vr, ar, iar, iar2, iar3, a2r, fr = load_twist(rev_ref, j)
        wp, vp, ap, iap, iap2, iap3, a2p, fp = load_twist(pri_ref, j)

        # --- revolute twist output (uses out BEFORE the revolute exponential) ---
        wb = adinv_angular(R, wr)
        vb = adinv_linear(R, p, wr, vr)
        # make_revolute: (1 - w*v/w*w)*v elementwise == (1 - w_i v_i) v_i for
        # w_i != 0 (algebraically simplified; avoids the 0/0 NaN of the literal
        # PyTorch expression and removes three vector divides per joint).
        for i in range(3):
            revls_ref[6 * j + i] = wb[i]
            revls_ref[6 * j + 3 + i] = (1.0 - wb[i] * vb[i]) * vb[i]

        ER, Ep = screw_exp(wr, vr, ar, iar, iar2, iar3, a2r, fr, q_rev)
        R, p = compose(R, p, ER, Ep)

        # --- prismatic twist output (uses out AFTER the revolute exponential) ---
        vbp = adinv_linear(R, p, wp, vp)
        for i in range(3):
            prisls_ref[6 * j + i] = zeros        # make_prismatic zeroes angular
            prisls_ref[6 * j + 3 + i] = vbp[i]

        ER, Ep = screw_exp(wp, vp, ap, iap, iap2, iap3, a2p, fp, q_pri)
        R, p = compose(R, p, ER, Ep)

        # --- branch output: out @ pr2t(position, rpy2r(orientation)) ---
        if branchLs[j]:
            RM = [[bt_ref[16 * j + 4 * i + k] for k in range(3)] for i in range(3)]
            pM = [bt_ref[16 * j + 4 * i + 3] for i in range(3)]
            Rt, pt = compose(R, p, RM, pM)
            base = 16 * branch_idx
            for i in range(3):
                for k in range(3):
                    outs_ref[base + 4 * i + k] = Rt[i][k]
                outs_ref[base + 4 * i + 3] = pt[i]
            outs_ref[base + 12] = zeros
            outs_ref[base + 13] = zeros
            outs_ref[base + 14] = zeros
            outs_ref[base + 15] = ones
            branch_idx += 1


# ----------------------------- wrapper ---------------------------------------

def poe_forward(q_value, revolute, prismatic, position, orientation, branchLs):
    """q_value: (B, n_joint, 2) float32.  Returns (outs, revoluteTwistls, prismaticTwistls)."""
    B, n_joint, _ = q_value.shape
    branchLs = tuple(int(bool(b)) for b in branchLs)
    assert n_joint == len(branchLs)
    n_branch = sum(branchLs)
    assert n_branch >= 1, "need at least one branch joint"

    nb = max(1, -(-B // TILE))          # grid steps over the batch
    B_pad = nb * TILE

    # lane-major q, padded to full (8,128) tiles: (n_joint*2, B_pad/128, 128)
    q2 = jnp.transpose(q_value.astype(jnp.float32), (1, 2, 0)).reshape(n_joint * 2, B)
    q2 = jnp.pad(q2, ((0, 0), (0, B_pad - B)))
    q2 = q2.reshape(n_joint * 2, B_pad // LANE, LANE)

    # Per-joint scalar tables (SMEM): twist params + derived reciprocals, and
    # the constant branch transforms pr2t(position, rpy2r(orientation)).
    rev_par = _twist_params(revolute).reshape(-1)                    # (n_joint*12,)
    pri_par = _twist_params(prismatic).reshape(-1)                   # (n_joint*12,)
    bts = [_pr2t(position[j].reshape(-1),
                 _rpy2r(orientation[j].reshape(-1))).reshape(-1)
           for j in range(n_joint)]
    bt = jnp.concatenate(bts).astype(jnp.float32)                    # (n_joint*16,)

    kernel = functools.partial(poe_kernel, branchLs=branchLs)

    grid_spec = pltpu.PrefetchScalarGridSpec(
        num_scalar_prefetch=0,
        grid=(nb,),
        in_specs=[
            pl.BlockSpec((n_joint * 2, SUB, LANE), lambda i: (0, i, 0)),   # q (VMEM)
            pl.BlockSpec(memory_space=pltpu.MemorySpace.SMEM),             # revolute table
            pl.BlockSpec(memory_space=pltpu.MemorySpace.SMEM),             # prismatic table
            pl.BlockSpec(memory_space=pltpu.MemorySpace.SMEM),             # branch transforms
        ],
        out_specs=(
            pl.BlockSpec((n_branch * 16, SUB, LANE), lambda i: (0, i, 0)),
            pl.BlockSpec((n_joint * 6, SUB, LANE), lambda i: (0, i, 0)),
            pl.BlockSpec((n_joint * 6, SUB, LANE), lambda i: (0, i, 0)),
        ),
    )

    outs_flat, rev_flat, pris_flat = pl.pallas_call(
        kernel,
        out_shape=(
            jax.ShapeDtypeStruct((n_branch * 16, B_pad // LANE, LANE), jnp.float32),
            jax.ShapeDtypeStruct((n_joint * 6, B_pad // LANE, LANE), jnp.float32),
            jax.ShapeDtypeStruct((n_joint * 6, B_pad // LANE, LANE), jnp.float32),
        ),
        grid_spec=grid_spec,
        compiler_params=pltpu.CompilerParams(
            dimension_semantics=("parallel",)),
    )(q2, rev_par, pri_par, bt)

    # Single layout pass back to the PyTorch-facing layout (reshape is free;
    # only one transpose per output remains).
    outs = outs_flat.reshape(n_branch, 4, 4, B_pad)[..., :B].transpose(3, 0, 1, 2)
    revls = rev_flat.reshape(n_joint, 6, B_pad)[..., :B].transpose(2, 0, 1)
    prisls = pris_flat.reshape(n_joint, 6, B_pad)[..., :B].transpose(2, 0, 1)
    return outs, revls, prisls


# ----------------------------- demo ------------------------------------------

if __name__ == "__main__":
    key = jax.random.PRNGKey(0)
    branchLs = [0, 1, 1]          # n_joint = 3, two branch outputs
    n_joint = len(branchLs)
    B = 8

    k1, k2, k3, k4, k5 = jax.random.split(key, 5)
    # Deterministic parameter init matching twist.__init__ shapes (uniform(-1, 1)).
    revolute = jax.random.uniform(k1, (n_joint, 6), minval=-1.0, maxval=1.0, dtype=jnp.float32)
    prismatic = jax.random.uniform(k2, (n_joint, 6), minval=-1.0, maxval=1.0, dtype=jnp.float32)
    position = jax.random.uniform(k3, (n_joint, 3), minval=-1.0, maxval=1.0, dtype=jnp.float32)
    orientation = jax.random.uniform(k4, (n_joint, 3), minval=-1.0, maxval=1.0, dtype=jnp.float32)
    q_value = jax.random.uniform(k5, (B, n_joint, 2), minval=-1.0, maxval=1.0, dtype=jnp.float32)

    outs, revls, prisls = poe_forward(q_value, revolute, prismatic,
                                      position, orientation, branchLs)
    (outs, revls, prisls) = jax.block_until_ready((outs, revls, prisls))

    n_branch = sum(1 for b in branchLs if b)
    assert outs.shape == (B, n_branch, 4, 4)
    assert revls.shape == (B, n_joint, 6)
    assert prisls.shape == (B, n_joint, 6)
    assert bool(jnp.all(jnp.isfinite(outs)))
    assert bool(jnp.all(jnp.isfinite(revls)))
    assert bool(jnp.all(jnp.isfinite(prisls)))

    print("KERNEL_OK")
</pallas_src>

<mosaic_0001>
module attributes {stable_mosaic.version = 11 : i64} {
  func.func @poe_kernel(%arg0: i32, %arg1: memref<6x8x128xf32, #tpu.memory_space<vmem>>, %arg2: memref<36xf32, #tpu.memory_space<smem>>, %arg3: memref<36xf32, #tpu.memory_space<smem>>, %arg4: memref<48xf32, #tpu.memory_space<smem>>, %arg5: memref<32x8x128xf32, #tpu.memory_space<vmem>>, %arg6: memref<18x8x128xf32, #tpu.memory_space<vmem>>, %arg7: memref<18x8x128xf32, #tpu.memory_space<vmem>>) attributes {dimension_semantics = [#tpu.dimension_semantics<parallel>], iteration_bounds = array<i64: 1>, scalar_prefetch = 0 : i64, scratch_operands = 0 : i64, tpu.core_type = #tpu.core_type<tc>, window_params = [{transform_indices = @transform_0, window_bounds = array<i64: 6, 8, 128>}, {transform_indices = @transform_1, window_bounds = array<i64: 36>}, {transform_indices = @transform_2, window_bounds = array<i64: 36>}, {transform_indices = @transform_3, window_bounds = array<i64: 48>}, {transform_indices = @transform_4, window_bounds = array<i64: 32, 8, 128>}, {transform_indices = @transform_5, window_bounds = array<i64: 18, 8, 128>}, {transform_indices = @transform_6, window_bounds = array<i64: 18, 8, 128>}]} {
    %cst = arith.constant 1.000000e+00 : f32
    %0 = vector.broadcast %cst : f32 to vector<8x128xf32>
    %cst_0 = arith.constant 0.000000e+00 : f32
    %1 = vector.broadcast %cst_0 : f32 to vector<8x128xf32>
    %c0 = arith.constant 0 : index
    %c0_1 = arith.constant 0 : index
    %c0_2 = arith.constant 0 : index
    %2 = vector.load %arg1[%c0, %c0_1, %c0_2] : memref<6x8x128xf32, #tpu.memory_space<vmem>>, vector<1x8x128xf32>
    %3 = vector.shape_cast %2 : vector<1x8x128xf32> to vector<8x128xf32>
    %c1 = arith.constant 1 : index
    %c0_3 = arith.constant 0 : index
    %c0_4 = arith.constant 0 : index
    %4 = vector.load %arg1[%c1, %c0_3, %c0_4] : memref<6x8x128xf32, #tpu.memory_space<vmem>>, vector<1x8x128xf32>
    %5 = vector.shape_cast %4 : vector<1x8x128xf32> to vector<8x128xf32>
    %c0_5 = arith.constant 0 : index
    %6 = memref.load %arg2[%c0_5] : memref<36xf32, #tpu.memory_space<smem>>
    %c1_6 = arith.constant 1 : index
    %7 = memref.load %arg2[%c1_6] : memref<36xf32, #tpu.memory_space<smem>>
    %c2 = arith.constant 2 : index
    %8 = memref.load %arg2[%c2] : memref<36xf32, #tpu.memory_space<smem>>
    %c3 = arith.constant 3 : index
    %9 = memref.load %arg2[%c3] : memref<36xf32, #tpu.memory_space<smem>>
    %c4 = arith.constant 4 : index
    %10 = memref.load %arg2[%c4] : memref<36xf32, #tpu.memory_space<smem>>
    %c5 = arith.constant 5 : index
    %11 = memref.load %arg2[%c5] : memref<36xf32, #tpu.memory_space<smem>>
    %c6 = arith.constant 6 : index
    %12 = memref.load %arg2[%c6] : memref<36xf32, #tpu.memory_space<smem>>
    %c7 = arith.constant 7 : index
    %13 = memref.load %arg2[%c7] : memref<36xf32, #tpu.memory_space<smem>>
    %c8 = arith.constant 8 : index
    %14 = memref.load %arg2[%c8] : memref<36xf32, #tpu.memory_space<smem>>
    %c9 = arith.constant 9 : index
    %15 = memref.load %arg2[%c9] : memref<36xf32, #tpu.memory_space<smem>>
    %c10 = arith.constant 10 : index
    %16 = memref.load %arg2[%c10] : memref<36xf32, #tpu.memory_space<smem>>
    %c11 = arith.constant 11 : index
    %17 = memref.load %arg2[%c11] : memref<36xf32, #tpu.memory_space<smem>>
    %c0_7 = arith.constant 0 : index
    %18 = memref.load %arg3[%c0_7] : memref<36xf32, #tpu.memory_space<smem>>
    %c1_8 = arith.constant 1 : index
    %19 = memref.load %arg3[%c1_8] : memref<36xf32, #tpu.memory_space<smem>>
    %c2_9 = arith.constant 2 : index
    %20 = memref.load %arg3[%c2_9] : memref<36xf32, #tpu.memory_space<smem>>
    %c3_10 = arith.constant 3 : index
    %21 = memref.load %arg3[%c3_10] : memref<36xf32, #tpu.memory_space<smem>>
    %c4_11 = arith.constant 4 : index
    %22 = memref.load %arg3[%c4_11] : memref<36xf32, #tpu.memory_space<smem>>
    %c5_12 = arith.constant 5 : index
    %23 = memref.load %arg3[%c5_12] : memref<36xf32, #tpu.memory_space<smem>>
    %c6_13 = arith.constant 6 : index
    %24 = memref.load %arg3[%c6_13] : memref<36xf32, #tpu.memory_space<smem>>
    %c7_14 = arith.constant 7 : index
    %25 = memref.load %arg3[%c7_14] : memref<36xf32, #tpu.memory_space<smem>>
    %c8_15 = arith.constant 8 : index
    %26 = memref.load %arg3[%c8_15] : memref<36xf32, #tpu.memory_space<smem>>
    %c9_16 = arith.constant 9 : index
    %27 = memref.load %arg3[%c9_16] : memref<36xf32, #tpu.memory_space<smem>>
    %c10_17 = arith.constant 10 : index
    %28 = memref.load %arg3[%c10_17] : memref<36xf32, #tpu.memory_space<smem>>
    %c11_18 = arith.constant 11 : index
    %29 = memref.load %arg3[%c11_18] : memref<36xf32, #tpu.memory_space<smem>>
    %30 = vector.broadcast %6 : f32 to vector<8x128xf32>
    %31 = arith.mulf %0, %30 : vector<8x128xf32>
    %32 = vector.broadcast %7 : f32 to vector<8x128xf32>
    %33 = arith.mulf %1, %32 : vector<8x128xf32>
    %34 = arith.addf %31, %33 : vector<8x128xf32>
    %35 = vector.broadcast %8 : f32 to vector<8x128xf32>
    %36 = arith.mulf %1, %35 : vector<8x128xf32>
    %37 = arith.addf %34, %36 : vector<8x128xf32>
    %38 = vector.broadcast %6 : f32 to vector<8x128xf32>
    %39 = arith.mulf %1, %38 : vector<8x128xf32>
    %40 = vector.broadcast %7 : f32 to vector<8x128xf32>
    %41 = arith.mulf %0, %40 : vector<8x128xf32>
    %42 = arith.addf %39, %41 : vector<8x128xf32>
    %43 = vector.broadcast %8 : f32 to vector<8x128xf32>
    %44 = arith.mulf %1, %43 : vector<8x128xf32>
    %45 = arith.addf %42, %44 : vector<8x128xf32>
    %46 = vector.broadcast %6 : f32 to vector<8x128xf32>
    %47 = arith.mulf %1, %46 : vector<8x128xf32>
    %48 = vector.broadcast %7 : f32 to vector<8x128xf32>
    %49 = arith.mulf %1, %48 : vector<8x128xf32>
    %50 = arith.addf %47, %49 : vector<8x128xf32>
    %51 = vector.broadcast %8 : f32 to vector<8x128xf32>
    %52 = arith.mulf %0, %51 : vector<8x128xf32>
    %53 = arith.addf %50, %52 : vector<8x128xf32>
    %54 = vector.broadcast %8 : f32 to vector<8x128xf32>
    %55 = arith.mulf %1, %54 : vector<8x128xf32>
    %56 = vector.broadcast %7 : f32 to vector<8x128xf32>
    %57 = arith.mulf %1, %56 : vector<8x128xf32>
    %58 = arith.subf %55, %57 : vector<8x128xf32>
    %59 = vector.broadcast %6 : f32 to vector<8x128xf32>
    %60 = arith.mulf %1, %59 : vector<8x128xf32>
    %61 = vector.broadcast %8 : f32 to vector<8x128xf32>
    %62 = arith.mulf %1, %61 : vector<8x128xf32>
    %63 = arith.subf %60, %62 : vector<8x128xf32>
    %64 = vector.broadcast %7 : f32 to vector<8x128xf32>
    %65 = arith.mulf %1, %64 : vector<8x128xf32>
    %66 = vector.broadcast %6 : f32 to vector<8x128xf32>
    %67 = arith.mulf %1, %66 : vector<8x128xf32>
    %68 = arith.subf %65, %67 : vector<8x128xf32>
    %69 = vector.broadcast %9 : f32 to vector<8x128xf32>
    %70 = arith.subf %69, %58 : vector<8x128xf32>
    %71 = vector.broadcast %10 : f32 to vector<8x128xf32>
    %72 = arith.subf %71, %63 : vector<8x128xf32>
    %73 = vector.broadcast %11 : f32 to vector<8x128xf32>
    %74 = arith.subf %73, %68 : vector<8x128xf32>
    %75 = arith.mulf %0, %70 : vector<8x128xf32>
    %76 = arith.mulf %1, %72 : vector<8x128xf32>
    %77 = arith.addf %75, %76 : vector<8x128xf32>
    %78 = arith.mulf %1, %74 : vector<8x128xf32>
    %79 = arith.addf %77, %78 : vector<8x128xf32>
    %80 = arith.mulf %1, %70 : vector<8x128xf32>
    %81 = arith.mulf %0, %72 : vector<8x128xf32>
    %82 = arith.addf %80, %81 : vector<8x128xf32>
    %83 = arith.mulf %1, %74 : vector<8x128xf32>
    %84 = arith.addf %82, %83 : vector<8x128xf32>
    %85 = arith.mulf %1, %70 : vector<8x128xf32>
    %86 = arith.mulf %1, %72 : vector<8x128xf32>
    %87 = arith.addf %85, %86 : vector<8x128xf32>
    %88 = arith.mulf %0, %74 : vector<8x128xf32>
    %89 = arith.addf %87, %88 : vector<8x128xf32>
    %c0_19 = arith.constant 0 : index
    %c0_20 = arith.constant 0 : index
    %c0_21 = arith.constant 0 : index
    %90 = vector.load %arg6[%c0_19, %c0_20, %c0_21] : memref<18x8x128xf32, #tpu.memory_space<vmem>>, vector<1x8x128xf32>
    %91 = vector.shape_cast %90 : vector<1x8x128xf32> to vector<8x128xf32>
    %92 = vector.shape_cast %37 : vector<8x128xf32> to vector<1x8x128xf32>
    tpu.vector_store %arg6[%c0_19, %c0_20, %c0_21], %92 {strides = array<i32>} : memref<18x8x128xf32, #tpu.memory_space<vmem>>, vector<1x8x128xf32>,
    %93 = arith.mulf %37, %79 : vector<8x128xf32>
    %cst_22 = arith.constant 1.000000e+00 : f32
    %94 = vector.broadcast %cst_22 : f32 to vector<8x128xf32>
    %95 = arith.subf %94, %93 : vector<8x128xf32>
    %96 = arith.mulf %95, %79 : vector<8x128xf32>
    %c3_23 = arith.constant 3 : index
    %c0_24 = arith.constant 0 : index
    %c0_25 = arith.constant 0 : index
    %97 = vector.load %arg6[%c3_23, %c0_24, %c0_25] : memref<18x8x128xf32, #tpu.memory_space<vmem>>, vector<1x8x128xf32>
    %98 = vector.shape_cast %97 : vector<1x8x128xf32> to vector<8x128xf32>
    %99 = vector.shape_cast %96 : vector<8x128xf32> to vector<1x8x128xf32>
    tpu.vector_store %arg6[%c3_23, %c0_24, %c0_25], %99 {strides = array<i32>} : memref<18x8x128xf32, #tpu.memory_space<vmem>>, vector<1x8x128xf32>,
    %c1_26 = arith.constant 1 : index
    %c0_27 = arith.constant 0 : index
    %c0_28 = arith.constant 0 : index
    %100 = vector.load %arg6[%c1_26, %c0_27, %c0_28] : memref<18x8x128xf32, #tpu.memory_space<vmem>>, vector<1x8x128xf32>
    %101 = vector.shape_cast %100 : vector<1x8x128xf32> to vector<8x128xf32>
    %102 = vector.shape_cast %45 : vector<8x128xf32> to vector<1x8x128xf32>
    tpu.vector_store %arg6[%c1_26, %c0_27, %c0_28], %102 {strides = array<i32>} : memref<18x8x128xf32, #tpu.memory_space<vmem>>, vector<1x8x128xf32>,
    %103 = arith.mulf %45, %84 : vector<8x128xf32>
    %cst_29 = arith.constant 1.000000e+00 : f32
    %104 = vector.broadcast %cst_29 : f32 to vector<8x128xf32>
    %105 = arith.subf %104, %103 : vector<8x128xf32>
    %106 = arith.mulf %105, %84 : vector<8x128xf32>
    %c4_30 = arith.constant 4 : index
    %c0_31 = arith.constant 0 : index
    %c0_32 = arith.constant 0 : index
    %107 = vector.load %arg6[%c4_30, %c0_31, %c0_32] : memref<18x8x128xf32, #tpu.memory_space<vmem>>, vector<1x8x128xf32>
    %108 = vector.shape_cast %107 : vector<1x8x128xf32> to vector<8x128xf32>
    %109 = vector.shape_cast %106 : vector<8x128xf32> to vector<1x8x128xf32>
    tpu.vector_store %arg6[%c4_30, %c0_31, %c0_32], %109 {strides = array<i32>} : memref<18x8x128xf32, #tpu.memory_space<vmem>>, vector<1x8x128xf32>,
    %c2_33 = arith.constant 2 : index
    %c0_34 = arith.constant 0 : index
    %c0_35 = arith.constant 0 : index
    %110 = vector.load %arg6[%c2_33, %c0_34, %c0_35] : memref<18x8x128xf32, #tpu.memory_space<vmem>>, vector<1x8x128xf32>
    %111 = vector.shape_cast %110 : vector<1x8x128xf32> to vector<8x128xf32>
    %112 = vector.shape_cast %53 : vector<8x128xf32> to vector<1x8x128xf32>
    tpu.vector_store %arg6[%c2_33, %c0_34, %c0_35], %112 {strides = array<i32>} : memref<18x8x128xf32, #tpu.memory_space<vmem>>, vector<1x8x128xf32>,
    %113 = arith.mulf %53, %89 : vector<8x128xf32>
    %cst_36 = arith.constant 1.000000e+00 : f32
    %114 = vector.broadcast %cst_36 : f32 to vector<8x128xf32>
    %115 = arith.subf %114, %113 : vector<8x128xf32>
    %116 = arith.mulf %115, %89 : vector<8x128xf32>
    %c5_37 = arith.constant 5 : index
    %c0_38 = arith.constant 0 : index
    %c0_39 = arith.constant 0 : index
    %117 = vector.load %arg6[%c5_37, %c0_38, %c0_39] : memref<18x8x128xf32, #tpu.memory_space<vmem>>, vector<1x8x128xf32>
    %118 = vector.shape_cast %117 : vector<1x8x128xf32> to vector<8x128xf32>
    %119 = vector.shape_cast %116 : vector<8x128xf32> to vector<1x8x128xf32>
    tpu.vector_store %arg6[%c5_37, %c0_38, %c0_39], %119 {strides = array<i32>} : memref<18x8x128xf32, #tpu.memory_space<vmem>>, vector<1x8x128xf32>,
    %120 = vector.broadcast %12 : f32 to vector<8x128xf32>
    %121 = arith.mulf %120, %3 : vector<8x128xf32>
    %122 = math.sin %121 : vector<8x128xf32>
    %123 = math.cos %121 : vector<8x128xf32>
    %124 = arith.mulf %3, %3 : vector<8x128xf32>
    %125 = vector.broadcast %13 : f32 to vector<8x128xf32>
    %126 = arith.mulf %122, %125 : vector<8x128xf32>
    %127 = vector.broadcast %17 : f32 to vector<8x128xf32>
    %128 = arith.mulf %127, %3 : vector<8x128xf32>
    %129 = arith.addf %126, %128 : vector<8x128xf32>
    %cst_40 = arith.constant 1.000000e+00 : f32
    %130 = vector.broadcast %cst_40 : f32 to vector<8x128xf32>
    %131 = arith.subf %130, %123 : vector<8x128xf32>
    %132 = vector.broadcast %14 : f32 to vector<8x128xf32>
    %133 = arith.mulf %131, %132 : vector<8x128xf32>
    %cst_41 = arith.constant 5.000000e-01 : f32
    %134 = vector.broadcast %cst_41 : f32 to vector<8x128xf32>
    %135 = arith.mulf %134, %124 : vector<8x128xf32>
    %136 = vector.broadcast %17 : f32 to vector<8x128xf32>
    %137 = arith.mulf %136, %135 : vector<8x128xf32>
    %138 = arith.addf %133, %137 : vector<8x128xf32>
    %139 = arith.subf %121, %122 : vector<8x128xf32>
    %140 = vector.broadcast %15 : f32 to vector<8x128xf32>
    %141 = arith.mulf %139, %140 : vector<8x128xf32>
    %142 = arith.mulf %124, %3 : vector<8x128xf32>
    %cst_42 = arith.constant 0.166666672 : f32
    %143 = vector.broadcast %cst_42 : f32 to vector<8x128xf32>
    %144 = arith.mulf %142, %143 : vector<8x128xf32>
    %145 = vector.broadcast %17 : f32 to vector<8x128xf32>
    %146 = arith.mulf %145, %144 : vector<8x128xf32>
    %147 = arith.addf %141, %146 : vector<8x128xf32>
    %cst_43 = arith.constant 0.000000e+00 : f32
    %148 = arith.subf %cst_43, %8 : f32
    %cst_44 = arith.constant 0.000000e+00 : f32
    %149 = arith.subf %cst_44, %6 : f32
    %cst_45 = arith.constant 0.000000e+00 : f32
    %150 = arith.subf %cst_45, %7 : f32
    %151 = arith.mulf %6, %6 : f32
    %152 = arith.subf %151, %16 : f32
    %153 = arith.mulf %6, %7 : f32
    %cst_46 = arith.constant 0.000000e+00 : f32
    %154 = arith.subf %153, %cst_46 : f32
    %155 = arith.mulf %6, %8 : f32
    %cst_47 = arith.constant 0.000000e+00 : f32
    %156 = arith.subf %155, %cst_47 : f32
    %157 = arith.mulf %7, %6 : f32
    %cst_48 = arith.constant 0.000000e+00 : f32
    %158 = arith.subf %157, %cst_48 : f32
    %159 = arith.mulf %7, %7 : f32
    %160 = arith.subf %159, %16 : f32
    %161 = arith.mulf %7, %8 : f32
    %cst_49 = arith.constant 0.000000e+00 : f32
    %162 = arith.subf %161, %cst_49 : f32
    %163 = arith.mulf %8, %6 : f32
    %cst_50 = arith.constant 0.000000e+00 : f32
    %164 = arith.subf %163, %cst_50 : f32
    %165 = arith.mulf %8, %7 : f32
    %cst_51 = arith.constant 0.000000e+00 : f32
    %166 = arith.subf %165, %cst_51 : f32
    %167 = arith.mulf %8, %8 : f32
    %168 = arith.subf %167, %16 : f32
    %169 = arith.mulf %7, %11 : f32
    %170 = arith.mulf %8, %10 : f32
    %171 = arith.subf %169, %170 : f32
    %172 = arith.mulf %8, %9 : f32
    %173 = arith.mulf %6, %11 : f32
    %174 = arith.subf %172, %173 : f32
    %175 = arith.mulf %6, %10 : f32
    %176 = arith.mulf %7, %9 : f32
    %177 = arith.subf %175, %176 : f32
    %178 = arith.mulf %7, %177 : f32
    %179 = arith.mulf %8, %174 : f32
    %180 = arith.subf %178, %179 : f32
    %181 = arith.mulf %8, %171 : f32
    %182 = arith.mulf %6, %177 : f32
    %183 = arith.subf %181, %182 : f32
    %184 = arith.mulf %6, %174 : f32
    %185 = arith.mulf %7, %171 : f32
    %186 = arith.subf %184, %185 : f32
    %187 = vector.broadcast %152 : f32 to vector<8x128xf32>
    %188 = arith.mulf %138, %187 : vector<8x128xf32>
    %cst_52 = arith.constant 1.000000e+00 : f32
    %189 = vector.broadcast %cst_52 : f32 to vector<8x128xf32>
    %190 = arith.addf %189, %188 : vector<8x128xf32>
    %191 = vector.broadcast %148 : f32 to vector<8x128xf32>
    %192 = arith.mulf %129, %191 : vector<8x128xf32>
    %193 = vector.broadcast %154 : f32 to vector<8x128xf32>
    %194 = arith.mulf %138, %193 : vector<8x128xf32>
    %195 = arith.addf %192, %194 : vector<8x128xf32>
    %196 = vector.broadcast %7 : f32 to vector<8x128xf32>
    %197 = arith.mulf %129, %196 : vector<8x128xf32>
    %198 = vector.broadcast %156 : f32 to vector<8x128xf32>
    %199 = arith.mulf %138, %198 : vector<8x128xf32>
    %200 = arith.addf %197, %199 : vector<8x128xf32>
    %201 = vector.broadcast %8 : f32 to vector<8x128xf32>
    %202 = arith.mulf %129, %201 : vector<8x128xf32>
    %203 = vector.broadcast %158 : f32 to vector<8x128xf32>
    %204 = arith.mulf %138, %203 : vector<8x128xf32>
    %205 = arith.addf %202, %204 : vector<8x128xf32>
    %206 = vector.broadcast %160 : f32 to vector<8x128xf32>
    %207 = arith.mulf %138, %206 : vector<8x128xf32>
    %cst_53 = arith.constant 1.000000e+00 : f32
    %208 = vector.broadcast %cst_53 : f32 to vector<8x128xf32>
    %209 = arith.addf %208, %207 : vector<8x128xf32>
    %210 = vector.broadcast %149 : f32 to vector<8x128xf32>
    %211 = arith.mulf %129, %210 : vector<8x128xf32>
    %212 = vector.broadcast %162 : f32 to vector<8x128xf32>
    %213 = arith.mulf %138, %212 : vector<8x128xf32>
    %214 = arith.addf %211, %213 : vector<8x128xf32>
    %215 = vector.broadcast %150 : f32 to vector<8x128xf32>
    %216 = arith.mulf %129, %215 : vector<8x128xf32>
    %217 = vector.broadcast %164 : f32 to vector<8x128xf32>
    %218 = arith.mulf %138, %217 : vector<8x128xf32>
    %219 = arith.addf %216, %218 : vector<8x128xf32>
    %220 = vector.broadcast %6 : f32 to vector<8x128xf32>
    %221 = arith.mulf %129, %220 : vector<8x128xf32>
    %222 = vector.broadcast %166 : f32 to vector<8x128xf32>
    %223 = arith.mulf %138, %222 : vector<8x128xf32>
    %224 = arith.addf %221, %223 : vector<8x128xf32>
    %225 = vector.broadcast %168 : f32 to vector<8x128xf32>
    %226 = arith.mulf %138, %225 : vector<8x128xf32>
    %cst_54 = arith.constant 1.000000e+00 : f32
    %227 = vector.broadcast %cst_54 : f32 to vector<8x128xf32>
    %228 = arith.addf %227, %226 : vector<8x128xf32>
    %229 = vector.broadcast %9 : f32 to vector<8x128xf32>
    %230 = arith.mulf %3, %229 : vector<8x128xf32>
    %231 = vector.broadcast %171 : f32 to vector<8x128xf32>
    %232 = arith.mulf %138, %231 : vector<8x128xf32>
    %233 = arith.addf %230, %232 : vector<8x128xf32>
    %234 = vector.broadcast %180 : f32 to vector<8x128xf32>
    %235 = arith.mulf %147, %234 : vector<8x128xf32>
    %236 = arith.addf %233, %235 : vector<8x128xf32>
    %237 = vector.broadcast %10 : f32 to vector<8x128xf32>
    %238 = arith.mulf %3, %237 : vector<8x128xf32>
    %239 = vector.broadcast %174 : f32 to vector<8x128xf32>
    %240 = arith.mulf %138, %239 : vector<8x128xf32>
    %241 = arith.addf %238, %240 : vector<8x128xf32>
    %242 = vector.broadcast %183 : f32 to vector<8x128xf32>
    %243 = arith.mulf %147, %242 : vector<8x128xf32>
    %244 = arith.addf %241, %243 : vector<8x128xf32>
    %245 = vector.broadcast %11 : f32 to vector<8x128xf32>
    %246 = arith.mulf %3, %245 : vector<8x128xf32>
    %247 = vector.broadcast %177 : f32 to vector<8x128xf32>
    %248 = arith.mulf %138, %247 : vector<8x128xf32>
    %249 = arith.addf %246, %248 : vector<8x128xf32>
    %250 = vector.broadcast %186 : f32 to vector<8x128xf32>
    %251 = arith.mulf %147, %250 : vector<8x128xf32>
    %252 = arith.addf %249, %251 : vector<8x128xf32>
    %253 = arith.mulf %0, %190 : vector<8x128xf32>
    %254 = arith.mulf %1, %205 : vector<8x128xf32>
    %255 = arith.addf %253, %254 : vector<8x128xf32>
    %256 = arith.mulf %1, %219 : vector<8x128xf32>
    %257 = arith.addf %255, %256 : vector<8x128xf32>
    %258 = arith.mulf %0, %195 : vector<8x128xf32>
    %259 = arith.mulf %1, %209 : vector<8x128xf32>
    %260 = arith.addf %258, %259 : vector<8x128xf32>
    %261 = arith.mulf %1, %224 : vector<8x128xf32>
    %262 = arith.addf %260, %261 : vector<8x128xf32>
    %263 = arith.mulf %0, %200 : vector<8x128xf32>
    %264 = arith.mulf %1, %214 : vector<8x128xf32>
    %265 = arith.addf %263, %264 : vector<8x128xf32>
    %266 = arith.mulf %1, %228 : vector<8x128xf32>
    %267 = arith.addf %265, %266 : vector<8x128xf32>
    %268 = arith.mulf %1, %190 : vector<8x128xf32>
    %269 = arith.mulf %0, %205 : vector<8x128xf32>
    %270 = arith.addf %268, %269 : vector<8x128xf32>
    %271 = arith.mulf %1, %219 : vector<8x128xf32>
    %272 = arith.addf %270, %271 : vector<8x128xf32>
    %273 = arith.mulf %1, %195 : vector<8x128xf32>
    %274 = arith.mulf %0, %209 : vector<8x128xf32>
    %275 = arith.addf %273, %274 : vector<8x128xf32>
    %276 = arith.mulf %1, %224 : vector<8x128xf32>
    %277 = arith.addf %275, %276 : vector<8x128xf32>
    %278 = arith.mulf %1, %200 : vector<8x128xf32>
    %279 = arith.mulf %0, %214 : vector<8x128xf32>
    %280 = arith.addf %278, %279 : vector<8x128xf32>
    %281 = arith.mulf %1, %228 : vector<8x128xf32>
    %282 = arith.addf %280, %281 : vector<8x128xf32>
    %283 = arith.mulf %1, %190 : vector<8x128xf32>
    %284 = arith.mulf %1, %205 : vector<8x128xf32>
    %285 = arith.addf %283, %284 : vector<8x128xf32>
    %286 = arith.mulf %0, %219 : vector<8x128xf32>
    %287 = arith.addf %285, %286 : vector<8x128xf32>
    %288 = arith.mulf %1, %195 : vector<8x128xf32>
    %289 = arith.mulf %1, %209 : vector<8x128xf32>
    %290 = arith.addf %288, %289 : vector<8x128xf32>
    %291 = arith.mulf %0, %224 : vector<8x128xf32>
    %292 = arith.addf %290, %291 : vector<8x128xf32>
    %293 = arith.mulf %1, %200 : vector<8x128xf32>
    %294 = arith.mulf %1, %214 : vector<8x128xf32>
    %295 = arith.addf %293, %294 : vector<8x128xf32>
    %296 = arith.mulf %0, %228 : vector<8x128xf32>
    %297 = arith.addf %295, %296 : vector<8x128xf32>
    %298 = arith.mulf %0, %236 : vector<8x128xf32>
    %299 = arith.mulf %1, %244 : vector<8x128xf32>
    %300 = arith.addf %298, %299 : vector<8x128xf32>
    %301 = arith.mulf %1, %252 : vector<8x128xf32>
    %302 = arith.addf %300, %301 : vector<8x128xf32>
    %303 = arith.addf %302, %1 : vector<8x128xf32>
    %304 = arith.mulf %1, %236 : vector<8x128xf32>
    %305 = arith.mulf %0, %244 : vector<8x128xf32>
    %306 = arith.addf %304, %305 : vector<8x128xf32>
    %307 = arith.mulf %1, %252 : vector<8x128xf32>
    %308 = arith.addf %306, %307 : vector<8x128xf32>
    %309 = arith.addf %308, %1 : vector<8x128xf32>
    %310 = arith.mulf %1, %236 : vector<8x128xf32>
    %311 = arith.mulf %1, %244 : vector<8x128xf32>
    %312 = arith.addf %310, %311 : vector<8x128xf32>
    %313 = arith.mulf %0, %252 : vector<8x128xf32>
    %314 = arith.addf %312, %313 : vector<8x128xf32>
    %315 = arith.addf %314, %1 : vector<8x128xf32>
    %316 = vector.broadcast %20 : f32 to vector<8x128xf32>
    %317 = arith.mulf %309, %316 : vector<8x128xf32>
    %318 = vector.broadcast %19 : f32 to vector<8x128xf32>
    %319 = arith.mulf %315, %318 : vector<8x128xf32>
    %320 = arith.subf %317, %319 : vector<8x128xf32>
    %321 = vector.broadcast %18 : f32 to vector<8x128xf32>
    %322 = arith.mulf %315, %321 : vector<8x128xf32>
    %323 = vector.broadcast %20 : f32 to vector<8x128xf32>
    %324 = arith.mulf %303, %323 : vector<8x128xf32>
    %325 = arith.subf %322, %324 : vector<8x128xf32>
    %326 = vector.broadcast %19 : f32 to vector<8x128xf32>
    %327 = arith.mulf %303, %326 : vector<8x128xf32>
    %328 = vector.broadcast %18 : f32 to vector<8x128xf32>
    %329 = arith.mulf %309, %328 : vector<8x128xf32>
    %330 = arith.subf %327, %329 : vector<8x128xf32>
    %331 = vector.broadcast %21 : f32 to vector<8x128xf32>
    %332 = arith.subf %331, %320 : vector<8x128xf32>
    %333 = vector.broadcast %22 : f32 to vector<8x128xf32>
    %334 = arith.subf %333, %325 : vector<8x128xf32>
    %335 = vector.broadcast %23 : f32 to vector<8x128xf32>
    %336 = arith.subf %335, %330 : vector<8x128xf32>
    %337 = arith.mulf %257, %332 : vector<8x128xf32>
    %338 = arith.mulf %272, %334 : vector<8x128xf32>
    %339 = arith.addf %337, %338 : vector<8x128xf32>
    %340 = arith.mulf %287, %336 : vector<8x128xf32>
    %341 = arith.addf %339, %340 : vector<8x128xf32>
    %342 = arith.mulf %262, %332 : vector<8x128xf32>
    %343 = arith.mulf %277, %334 : vector<8x128xf32>
    %344 = arith.addf %342, %343 : vector<8x128xf32>
    %345 = arith.mulf %292, %336 : vector<8x128xf32>
    %346 = arith.addf %344, %345 : vector<8x128xf32>
    %347 = arith.mulf %267, %332 : vector<8x128xf32>
    %348 = arith.mulf %282, %334 : vector<8x128xf32>
    %349 = arith.addf %347, %348 : vector<8x128xf32>
    %350 = arith.mulf %297, %336 : vector<8x128xf32>
    %351 = arith.addf %349, %350 : vector<8x128xf32>
    %c0_55 = arith.constant 0 : index
    %c0_56 = arith.constant 0 : index
    %c0_57 = arith.constant 0 : index
    %352 = vector.load %arg7[%c0_55, %c0_56, %c0_57] : memref<18x8x128xf32, #tpu.memory_space<vmem>>, vector<1x8x128xf32>
    %353 = vector.shape_cast %352 : vector<1x8x128xf32> to vector<8x128xf32>
    %354 = vector.shape_cast %1 : vector<8x128xf32> to vector<1x8x128xf32>
    tpu.vector_store %arg7[%c0_55, %c0_56, %c0_57], %354 {strides = array<i32>} : memref<18x8x128xf32, #tpu.memory_space<vmem>>, vector<1x8x128xf32>,
    %c3_58 = arith.constant 3 : index
    %c0_59 = arith.constant 0 : index
    %c0_60 = arith.constant 0 : index
    %355 = vector.load %arg7[%c3_58, %c0_59, %c0_60] : memref<18x8x128xf32, #tpu.memory_space<vmem>>, vector<1x8x128xf32>
    %356 = vector.shape_cast %355 : vector<1x8x128xf32> to vector<8x128xf32>
    %357 = vector.shape_cast %341 : vector<8x128xf32> to vector<1x8x128xf32>
    tpu.vector_store %arg7[%c3_58, %c0_59, %c0_60], %357 {strides = array<i32>} : memref<18x8x128xf32, #tpu.memory_space<vmem>>, vector<1x8x128xf32>,
    %c1_61 = arith.constant 1 : index
    %c0_62 = arith.constant 0 : index
    %c0_63 = arith.constant 0 : index
    %358 = vector.load %arg7[%c1_61, %c0_62, %c0_63] : memref<18x8x128xf32, #tpu.memory_space<vmem>>, vector<1x8x128xf32>
    %359 = vector.shape_cast %358 : vector<1x8x128xf32> to vector<8x128xf32>
    %360 = vector.shape_cast %1 : vector<8x128xf32> to vector<1x8x128xf32>
    tpu.vector_store %arg7[%c1_61, %c0_62, %c0_63], %360 {strides = array<i32>} : memref<18x8x128xf32, #tpu.memory_space<vmem>>, vector<1x8x128xf32>,
    %c4_64 = arith.constant 4 : index
    %c0_65 = arith.constant 0 : index
    %c0_66 = arith.constant 0 : index
    %361 = vector.load %arg7[%c4_64, %c0_65, %c0_66] : memref<18x8x128xf32, #tpu.memory_space<vmem>>, vector<1x8x128xf32>
    %362 = vector.shape_cast %361 : vector<1x8x128xf32> to vector<8x128xf32>
    %363 = vector.shape_cast %346 : vector<8x128xf32> to vector<1x8x128xf32>
    tpu.vector_store %arg7[%c4_64, %c0_65, %c0_66], %363 {strides = array<i32>} : memref<18x8x128xf32, #tpu.memory_space<vmem>>, vector<1x8x128xf32>,
    %c2_67 = arith.constant 2 : index
    %c0_68 = arith.constant 0 : index
    %c0_69 = arith.constant 0 : index
    %364 = vector.load %arg7[%c2_67, %c0_68, %c0_69] : memref<18x8x128xf32, #tpu.memory_space<vmem>>, vector<1x8x128xf32>
    %365 = vector.shape_cast %364 : vector<1x8x128xf32> to vector<8x128xf32>
    %366 = vector.shape_cast %1 : vector<8x128xf32> to vector<1x8x128xf32>
    tpu.vector_store %arg7[%c2_67, %c0_68, %c0_69], %366 {strides = array<i32>} : memref<18x8x128xf32, #tpu.memory_space<vmem>>, vector<1x8x128xf32>,
    %c5_70 = arith.constant 5 : index
    %c0_71 = arith.constant 0 : index
    %c0_72 = arith.constant 0 : index
    %367 = vector.load %arg7[%c5_70, %c0_71, %c0_72] : memref<18x8x128xf32, #tpu.memory_space<vmem>>, vector<1x8x128xf32>
    %368 = vector.shape_cast %367 : vector<1x8x128xf32> to vector<8x128xf32>
    %369 = vector.shape_cast %351 : vector<8x128xf32> to vector<1x8x128xf32>
    tpu.vector_store %arg7[%c5_70, %c0_71, %c0_72], %369 {strides = array<i32>} : memref<18x8x128xf32, #tpu.memory_space<vmem>>, vector<1x8x128xf32>,
    %370 = vector.broadcast %24 : f32 to vector<8x128xf32>
    %371 = arith.mulf %370, %5 : vector<8x128xf32>
    %372 = math.sin %371 : vector<8x128xf32>
    %373 = math.cos %371 : vector<8x128xf32>
    %374 = arith.mulf %5, %5 : vector<8x128xf32>
    %375 = vector.broadcast %25 : f32 to vector<8x128xf32>
    %376 = arith.mulf %372, %375 : vector<8x128xf32>
    %377 = vector.broadcast %29 : f32 to vector<8x128xf32>
    %378 = arith.mulf %377, %5 : vector<8x128xf32>
    %379 = arith.addf %376, %378 : vector<8x128xf32>
    %cst_73 = arith.constant 1.000000e+00 : f32
    %380 = vector.broadcast %cst_73 : f32 to vector<8x128xf32>
    %381 = arith.subf %380, %373 : vector<8x128xf32>
    %382 = vector.broadcast %26 : f32 to vector<8x128xf32>
    %383 = arith.mulf %381, %382 : vector<8x128xf32>
    %cst_74 = arith.constant 5.000000e-01 : f32
    %384 = vector.broadcast %cst_74 : f32 to vector<8x128xf32>
    %385 = arith.mulf %384, %374 : vector<8x128xf32>
    %386 = vector.broadcast %29 : f32 to vector<8x128xf32>
    %387 = arith.mulf %386, %385 : vector<8x128xf32>
    %388 = arith.addf %383, %387 : vector<8x128xf32>
    %389 = arith.subf %371, %372 : vector<8x128xf32>
    %390 = vector.broadcast %27 : f32 to vector<8x128xf32>
    %391 = arith.mulf %389, %390 : vector<8x128xf32>
    %392 = arith.mulf %374, %5 : vector<8x128xf32>
    %cst_75 = arith.constant 0.166666672 : f32
    %393 = vector.broadcast %cst_75 : f32 to vector<8x128xf32>
    %394 = arith.mulf %392, %393 : vector<8x128xf32>
    %395 = vector.broadcast %29 : f32 to vector<8x128xf32>
    %396 = arith.mulf %395, %394 : vector<8x128xf32>
    %397 = arith.addf %391, %396 : vector<8x128xf32>
    %cst_76 = arith.constant 0.000000e+00 : f32
    %398 = arith.subf %cst_76, %20 : f32
    %cst_77 = arith.constant 0.000000e+00 : f32
    %399 = arith.subf %cst_77, %18 : f32
    %cst_78 = arith.constant 0.000000e+00 : f32
    %400 = arith.subf %cst_78, %19 : f32
    %401 = arith.mulf %18, %18 : f32
    %402 = arith.subf %401, %28 : f32
    %403 = arith.mulf %18, %19 : f32
    %cst_79 = arith.constant 0.000000e+00 : f32
    %404 = arith.subf %403, %cst_79 : f32
    %405 = arith.mulf %18, %20 : f32
    %cst_80 = arith.constant 0.000000e+00 : f32
    %406 = arith.subf %405, %cst_80 : f32
    %407 = arith.mulf %19, %18 : f32
    %cst_81 = arith.constant 0.000000e+00 : f32
    %408 = arith.subf %407, %cst_81 : f32
    %409 = arith.mulf %19, %19 : f32
    %410 = arith.subf %409, %28 : f32
    %411 = arith.mulf %19, %20 : f32
    %cst_82 = arith.constant 0.000000e+00 : f32
    %412 = arith.subf %411, %cst_82 : f32
    %413 = arith.mulf %20, %18 : f32
    %cst_83 = arith.constant 0.000000e+00 : f32
    %414 = arith.subf %413, %cst_83 : f32
    %415 = arith.mulf %20, %19 : f32
    %cst_84 = arith.constant 0.000000e+00 : f32
    %416 = arith.subf %415, %cst_84 : f32
    %417 = arith.mulf %20, %20 : f32
    %418 = arith.subf %417, %28 : f32
    %419 = arith.mulf %19, %23 : f32
    %420 = arith.mulf %20, %22 : f32
    %421 = arith.subf %419, %420 : f32
    %422 = arith.mulf %20, %21 : f32
    %423 = arith.mulf %18, %23 : f32
    %424 = arith.subf %422, %423 : f32
    %425 = arith.mulf %18, %22 : f32
    %426 = arith.mulf %19, %21 : f32
    %427 = arith.subf %425, %426 : f32
    %428 = arith.mulf %19, %427 : f32
    %429 = arith.mulf %20, %424 : f32
    %430 = arith.subf %428, %429 : f32
    %431 = arith.mulf %20, %421 : f32
    %432 = arith.mulf %18, %427 : f32
    %433 = arith.subf %431, %432 : f32
    %434 = arith.mulf %18, %424 : f32
    %435 = arith.mulf %19, %421 : f32
    %436 = arith.subf %434, %435 : f32
    %437 = vector.broadcast %402 : f32 to vector<8x128xf32>
    %438 = arith.mulf %388, %437 : vector<8x128xf32>
    %cst_85 = arith.constant 1.000000e+00 : f32
    %439 = vector.broadcast %cst_85 : f32 to vector<8x128xf32>
    %440 = arith.addf %439, %438 : vector<8x128xf32>
    %441 = vector.broadcast %398 : f32 to vector<8x128xf32>
    %442 = arith.mulf %379, %441 : vector<8x128xf32>
    %443 = vector.broadcast %404 : f32 to vector<8x128xf32>
    %444 = arith.mulf %388, %443 : vector<8x128xf32>
    %445 = arith.addf %442, %444 : vector<8x128xf32>
    %446 = vector.broadcast %19 : f32 to vector<8x128xf32>
    %447 = arith.mulf %379, %446 : vector<8x128xf32>
    %448 = vector.broadcast %406 : f32 to vector<8x128xf32>
    %449 = arith.mulf %388, %448 : vector<8x128xf32>
    %450 = arith.addf %447, %449 : vector<8x128xf32>
    %451 = vector.broadcast %20 : f32 to vector<8x128xf32>
    %452 = arith.mulf %379, %451 : vector<8x128xf32>
    %453 = vector.broadcast %408 : f32 to vector<8x128xf32>
    %454 = arith.mulf %388, %453 : vector<8x128xf32>
    %455 = arith.addf %452, %454 : vector<8x128xf32>
    %456 = vector.broadcast %410 : f32 to vector<8x128xf32>
    %457 = arith.mulf %388, %456 : vector<8x128xf32>
    %cst_86 = arith.constant 1.000000e+00 : f32
    %458 = vector.broadcast %cst_86 : f32 to vector<8x128xf32>
    %459 = arith.addf %458, %457 : vector<8x128xf32>
    %460 = vector.broadcast %399 : f32 to vector<8x128xf32>
    %461 = arith.mulf %379, %460 : vector<8x128xf32>
    %462 = vector.broadcast %412 : f32 to vector<8x128xf32>
    %463 = arith.mulf %388, %462 : vector<8x128xf32>
    %464 = arith.addf %461, %463 : vector<8x128xf32>
    %465 = vector.broadcast %400 : f32 to vector<8x128xf32>
    %466 = arith.mulf %379, %465 : vector<8x128xf32>
    %467 = vector.broadcast %414 : f32 to vector<8x128xf32>
    %468 = arith.mulf %388, %467 : vector<8x128xf32>
    %469 = arith.addf %466, %468 : vector<8x128xf32>
    %470 = vector.broadcast %18 : f32 to vector<8x128xf32>
    %471 = arith.mulf %379, %470 : vector<8x128xf32>
    %472 = vector.broadcast %416 : f32 to vector<8x128xf32>
    %473 = arith.mulf %388, %472 : vector<8x128xf32>
    %474 = arith.addf %471, %473 : vector<8x128xf32>
    %475 = vector.broadcast %418 : f32 to vector<8x128xf32>
    %476 = arith.mulf %388, %475 : vector<8x128xf32>
    %cst_87 = arith.constant 1.000000e+00 : f32
    %477 = vector.broadcast %cst_87 : f32 to vector<8x128xf32>
    %478 = arith.addf %477, %476 : vector<8x128xf32>
    %479 = vector.broadcast %21 : f32 to vector<8x128xf32>
    %480 = arith.mulf %5, %479 : vector<8x128xf32>
    %481 = vector.broadcast %421 : f32 to vector<8x128xf32>
    %482 = arith.mulf %388, %481 : vector<8x128xf32>
    %483 = arith.addf %480, %482 : vector<8x128xf32>
    %484 = vector.broadcast %430 : f32 to vector<8x128xf32>
    %485 = arith.mulf %397, %484 : vector<8x128xf32>
    %486 = arith.addf %483, %485 : vector<8x128xf32>
    %487 = vector.broadcast %22 : f32 to vector<8x128xf32>
    %488 = arith.mulf %5, %487 : vector<8x128xf32>
    %489 = vector.broadcast %424 : f32 to vector<8x128xf32>
    %490 = arith.mulf %388, %489 : vector<8x128xf32>
    %491 = arith.addf %488, %490 : vector<8x128xf32>
    %492 = vector.broadcast %433 : f32 to vector<8x128xf32>
    %493 = arith.mulf %397, %492 : vector<8x128xf32>
    %494 = arith.addf %491, %493 : vector<8x128xf32>
    %495 = vector.broadcast %23 : f32 to vector<8x128xf32>
    %496 = arith.mulf %5, %495 : vector<8x128xf32>
    %497 = vector.broadcast %427 : f32 to vector<8x128xf32>
    %498 = arith.mulf %388, %497 : vector<8x128xf32>
    %499 = arith.addf %496, %498 : vector<8x128xf32>
    %500 = vector.broadcast %436 : f32 to vector<8x128xf32>
    %501 = arith.mulf %397, %500 : vector<8x128xf32>
    %502 = arith.addf %499, %501 : vector<8x128xf32>
    %503 = arith.mulf %257, %440 : vector<8x128xf32>
    %504 = arith.mulf %262, %455 : vector<8x128xf32>
    %505 = arith.addf %503, %504 : vector<8x128xf32>
    %506 = arith.mulf %267, %469 : vector<8x128xf32>
    %507 = arith.addf %505, %506 : vector<8x128xf32>
    %508 = arith.mulf %257, %445 : vector<8x128xf32>
    %509 = arith.mulf %262, %459 : vector<8x128xf32>
    %510 = arith.addf %508, %509 : vector<8x128xf32>
    %511 = arith.mulf %267, %474 : vector<8x128xf32>
    %512 = arith.addf %510, %511 : vector<8x128xf32>
    %513 = arith.mulf %257, %450 : vector<8x128xf32>
    %514 = arith.mulf %262, %464 : vector<8x128xf32>
    %515 = arith.addf %513, %514 : vector<8x128xf32>
    %516 = arith.mulf %267, %478 : vector<8x128xf32>
    %517 = arith.addf %515, %516 : vector<8x128xf32>
    %518 = arith.mulf %272, %440 : vector<8x128xf32>
    %519 = arith.mulf %277, %455 : vector<8x128xf32>
    %520 = arith.addf %518, %519 : vector<8x128xf32>
    %521 = arith.mulf %282, %469 : vector<8x128xf32>
    %522 = arith.addf %520, %521 : vector<8x128xf32>
    %523 = arith.mulf %272, %445 : vector<8x128xf32>
    %524 = arith.mulf %277, %459 : vector<8x128xf32>
    %525 = arith.addf %523, %524 : vector<8x128xf32>
    %526 = arith.mulf %282, %474 : vector<8x128xf32>
    %527 = arith.addf %525, %526 : vector<8x128xf32>
    %528 = arith.mulf %272, %450 : vector<8x128xf32>
    %529 = arith.mulf %277, %464 : vector<8x128xf32>
    %530 = arith.addf %528, %529 : vector<8x128xf32>
    %531 = arith.mulf %282, %478 : vector<8x128xf32>
    %532 = arith.addf %530, %531 : vector<8x128xf32>
    %533 = arith.mulf %287, %440 : vector<8x128xf32>
    %534 = arith.mulf %292, %455 : vector<8x128xf32>
    %535 = arith.addf %533, %534 : vector<8x128xf32>
    %536 = arith.mulf %297, %469 : vector<8x128xf32>
    %537 = arith.addf %535, %536 : vector<8x128xf32>
    %538 = arith.mulf %287, %445 : vector<8x128xf32>
    %539 = arith.mulf %292, %459 : vector<8x128xf32>
    %540 = arith.addf %538, %539 : vector<8x128xf32>
    %541 = arith.mulf %297, %474 : vector<8x128xf32>
    %542 = arith.addf %540, %541 : vector<8x128xf32>
    %543 = arith.mulf %287, %450 : vector<8x128xf32>
    %544 = arith.mulf %292, %464 : vector<8x128xf32>
    %545 = arith.addf %543, %544 : vector<8x128xf32>
    %546 = arith.mulf %297, %478 : vector<8x128xf32>
    %547 = arith.addf %545, %546 : vector<8x128xf32>
    %548 = arith.mulf %257, %486 : vector<8x128xf32>
    %549 = arith.mulf %262, %494 : vector<8x128xf32>
    %550 = arith.addf %548, %549 : vector<8x128xf32>
    %551 = arith.mulf %267, %502 : vector<8x128xf32>
    %552 = arith.addf %550, %551 : vector<8x128xf32>
    %553 = arith.addf %552, %303 : vector<8x128xf32>
    %554 = arith.mulf %272, %486 : vector<8x128xf32>
    %555 = arith.mulf %277, %494 : vector<8x128xf32>
    %556 = arith.addf %554, %555 : vector<8x128xf32>
    %557 = arith.mulf %282, %502 : vector<8x128xf32>
    %558 = arith.addf %556, %557 : vector<8x128xf32>
    %559 = arith.addf %558, %309 : vector<8x128xf32>
    %560 = arith.mulf %287, %486 : vector<8x128xf32>
    %561 = arith.mulf %292, %494 : vector<8x128xf32>
    %562 = arith.addf %560, %561 : vector<8x128xf32>
    %563 = arith.mulf %297, %502 : vector<8x128xf32>
    %564 = arith.addf %562, %563 : vector<8x128xf32>
    %565 = arith.addf %564, %315 : vector<8x128xf32>
    %c2_88 = arith.constant 2 : index
    %c0_89 = arith.constant 0 : index
    %c0_90 = arith.constant 0 : index
    %566 = vector.load %arg1[%c2_88, %c0_89, %c0_90] : memref<6x8x128xf32, #tpu.memory_space<vmem>>, vector<1x8x128xf32>
    %567 = vector.shape_cast %566 : vector<1x8x128xf32> to vector<8x128xf32>
    %c3_91 = arith.constant 3 : index
    %c0_92 = arith.constant 0 : index
    %c0_93 = arith.constant 0 : index
    %568 = vector.load %arg1[%c3_91, %c0_92, %c0_93] : memref<6x8x128xf32, #tpu.memory_space<vmem>>, vector<1x8x128xf32>
    %569 = vector.shape_cast %568 : vector<1x8x128xf32> to vector<8x128xf32>
    %c12 = arith.constant 12 : index
    %570 = memref.load %arg2[%c12] : memref<36xf32, #tpu.memory_space<smem>>
    %c13 = arith.constant 13 : index
    %571 = memref.load %arg2[%c13] : memref<36xf32, #tpu.memory_space<smem>>
    %c14 = arith.constant 14 : index
    %572 = memref.load %arg2[%c14] : memref<36xf32, #tpu.memory_space<smem>>
    %c15 = arith.constant 15 : index
    %573 = memref.load %arg2[%c15] : memref<36xf32, #tpu.memory_space<smem>>
    %c16 = arith.constant 16 : index
    %574 = memref.load %arg2[%c16] : memref<36xf32, #tpu.memory_space<smem>>
    %c17 = arith.constant 17 : index
    %575 = memref.load %arg2[%c17] : memref<36xf32, #tpu.memory_space<smem>>
    %c18 = arith.constant 18 : index
    %576 = memref.load %arg2[%c18] : memref<36xf32, #tpu.memory_space<smem>>
    %c19 = arith.constant 19 : index
    %577 = memref.load %arg2[%c19] : memref<36xf32, #tpu.memory_space<smem>>
    %c20 = arith.constant 20 : index
    %578 = memref.load %arg2[%c20] : memref<36xf32, #tpu.memory_space<smem>>
    %c21 = arith.constant 21 : index
    %579 = memref.load %arg2[%c21] : memref<36xf32, #tpu.memory_space<smem>>
    %c22 = arith.constant 22 : index
    %580 = memref.load %arg2[%c22] : memref<36xf32, #tpu.memory_space<smem>>
    %c23 = arith.constant 23 : index
    %581 = memref.load %arg2[%c23] : memref<36xf32, #tpu.memory_space<smem>>
    %c12_94 = arith.constant 12 : index
    %582 = memref.load %arg3[%c12_94] : memref<36xf32, #tpu.memory_space<smem>>
    %c13_95 = arith.constant 13 : index
    %583 = memref.load %arg3[%c13_95] : memref<36xf32, #tpu.memory_space<smem>>
    %c14_96 = arith.constant 14 : index
    %584 = memref.load %arg3[%c14_96] : memref<36xf32, #tpu.memory_space<smem>>
    %c15_97 = arith.constant 15 : index
    %585 = memref.load %arg3[%c15_97] : memref<36xf32, #tpu.memory_space<smem>>
    %c16_98 = arith.constant 16 : index
    %586 = memref.load %arg3[%c16_98] : memref<36xf32, #tpu.memory_space<smem>>
    %c17_99 = arith.constant 17 : index
    %587 = memref.load %arg3[%c17_99] : memref<36xf32, #tpu.memory_space<smem>>
    %c18_100 = arith.constant 18 : index
    %588 = memref.load %arg3[%c18_100] : memref<36xf32, #tpu.memory_space<smem>>
    %c19_101 = arith.constant 19 : index
    %589 = memref.load %arg3[%c19_101] : memref<36xf32, #tpu.memory_space<smem>>
    %c20_102 = arith.constant 20 : index
    %590 = memref.load %arg3[%c20_102] : memref<36xf32, #tpu.memory_space<smem>>
    %c21_103 = arith.constant 21 : index
    %591 = memref.load %arg3[%c21_103] : memref<36xf32, #tpu.memory_space<smem>>
    %c22_104 = arith.constant 22 : index
    %592 = memref.load %arg3[%c22_104] : memref<36xf32, #tpu.memory_space<smem>>
    %c23_105 = arith.constant 23 : index
    %593 = memref.load %arg3[%c23_105] : memref<36xf32, #tpu.memory_space<smem>>
    %594 = vector.broadcast %570 : f32 to vector<8x128xf32>
    %595 = arith.mulf %507, %594 : vector<8x128xf32>
    %596 = vector.broadcast %571 : f32 to vector<8x128xf32>
    %597 = arith.mulf %522, %596 : vector<8x128xf32>
    %598 = arith.addf %595, %597 : vector<8x128xf32>
    %599 = vector.broadcast %572 : f32 to vector<8x128xf32>
    %600 = arith.mulf %537, %599 : vector<8x128xf32>
    %601 = arith.addf %598, %600 : vector<8x128xf32>
    %602 = vector.broadcast %570 : f32 to vector<8x128xf32>
    %603 = arith.mulf %512, %602 : vector<8x128xf32>
    %604 = vector.broadcast %571 : f32 to vector<8x128xf32>
    %605 = arith.mulf %527, %604 : vector<8x128xf32>
    %606 = arith.addf %603, %605 : vector<8x128xf32>
    %607 = vector.broadcast %572 : f32 to vector<8x128xf32>
    %608 = arith.mulf %542, %607 : vector<8x128xf32>
    %609 = arith.addf %606, %608 : vector<8x128xf32>
    %610 = vector.broadcast %570 : f32 to vector<8x128xf32>
    %611 = arith.mulf %517, %610 : vector<8x128xf32>
    %612 = vector.broadcast %571 : f32 to vector<8x128xf32>
    %613 = arith.mulf %532, %612 : vector<8x128xf32>
    %614 = arith.addf %611, %613 : vector<8x128xf32>
    %615 = vector.broadcast %572 : f32 to vector<8x128xf32>
    %616 = arith.mulf %547, %615 : vector<8x128xf32>
    %617 = arith.addf %614, %616 : vector<8x128xf32>
    %618 = vector.broadcast %572 : f32 to vector<8x128xf32>
    %619 = arith.mulf %559, %618 : vector<8x128xf32>
    %620 = vector.broadcast %571 : f32 to vector<8x128xf32>
    %621 = arith.mulf %565, %620 : vector<8x128xf32>
    %622 = arith.subf %619, %621 : vector<8x128xf32>
    %623 = vector.broadcast %570 : f32 to vector<8x128xf32>
    %624 = arith.mulf %565, %623 : vector<8x128xf32>
    %625 = vector.broadcast %572 : f32 to vector<8x128xf32>
    %626 = arith.mulf %553, %625 : vector<8x128xf32>
    %627 = arith.subf %624, %626 : vector<8x128xf32>
    %628 = vector.broadcast %571 : f32 to vector<8x128xf32>
    %629 = arith.mulf %553, %628 : vector<8x128xf32>
    %630 = vector.broadcast %570 : f32 to vector<8x128xf32>
    %631 = arith.mulf %559, %630 : vector<8x128xf32>
    %632 = arith.subf %629, %631 : vector<8x128xf32>
    %633 = vector.broadcast %573 : f32 to vector<8x128xf32>
    %634 = arith.subf %633, %622 : vector<8x128xf32>
    %635 = vector.broadcast %574 : f32 to vector<8x128xf32>
    %636 = arith.subf %635, %627 : vector<8x128xf32>
    %637 = vector.broadcast %575 : f32 to vector<8x128xf32>
    %638 = arith.subf %637, %632 : vector<8x128xf32>
    %639 = arith.mulf %507, %634 : vector<8x128xf32>
    %640 = arith.mulf %522, %636 : vector<8x128xf32>
    %641 = arith.addf %639, %640 : vector<8x128xf32>
    %642 = arith.mulf %537, %638 : vector<8x128xf32>
    %643 = arith.addf %641, %642 : vector<8x128xf32>
    %644 = arith.mulf %512, %634 : vector<8x128xf32>
    %645 = arith.mulf %527, %636 : vector<8x128xf32>
    %646 = arith.addf %644, %645 : vector<8x128xf32>
    %647 = arith.mulf %542, %638 : vector<8x128xf32>
    %648 = arith.addf %646, %647 : vector<8x128xf32>
    %649 = arith.mulf %517, %634 : vector<8x128xf32>
    %650 = arith.mulf %532, %636 : vector<8x128xf32>
    %651 = arith.addf %649, %650 : vector<8x128xf32>
    %652 = arith.mulf %547, %638 : vector<8x128xf32>
    %653 = arith.addf %651, %652 : vector<8x128xf32>
    %c6_106 = arith.constant 6 : index
    %c0_107 = arith.constant 0 : index
    %c0_108 = arith.constant 0 : index
    %654 = vector.load %arg6[%c6_106, %c0_107, %c0_108] : memref<18x8x128xf32, #tpu.memory_space<vmem>>, vector<1x8x128xf32>
    %655 = vector.shape_cast %654 : vector<1x8x128xf32> to vector<8x128xf32>
    %656 = vector.shape_cast %601 : vector<8x128xf32> to vector<1x8x128xf32>
    tpu.vector_store %arg6[%c6_106, %c0_107, %c0_108], %656 {strides = array<i32>} : memref<18x8x128xf32, #tpu.memory_space<vmem>>, vector<1x8x128xf32>,
    %657 = arith.mulf %601, %643 : vector<8x128xf32>
    %cst_109 = arith.constant 1.000000e+00 : f32
    %658 = vector.broadcast %cst_109 : f32 to vector<8x128xf32>
    %659 = arith.subf %658, %657 : vector<8x128xf32>
    %660 = arith.mulf %659, %643 : vector<8x128xf32>
    %c9_110 = arith.constant 9 : index
    %c0_111 = arith.constant 0 : index
    %c0_112 = arith.constant 0 : index
    %661 = vector.load %arg6[%c9_110, %c0_111, %c0_112] : memref<18x8x128xf32, #tpu.memory_space<vmem>>, vector<1x8x128xf32>
    %662 = vector.shape_cast %661 : vector<1x8x128xf32> to vector<8x128xf32>
    %663 = vector.shape_cast %660 : vector<8x128xf32> to vector<1x8x128xf32>
    tpu.vector_store %arg6[%c9_110, %c0_111, %c0_112], %663 {strides = array<i32>} : memref<18x8x128xf32, #tpu.memory_space<vmem>>, vector<1x8x128xf32>,
    %c7_113 = arith.constant 7 : index
    %c0_114 = arith.constant 0 : index
    %c0_115 = arith.constant 0 : index
    %664 = vector.load %arg6[%c7_113, %c0_114, %c0_115] : memref<18x8x128xf32, #tpu.memory_space<vmem>>, vector<1x8x128xf32>
    %665 = vector.shape_cast %664 : vector<1x8x128xf32> to vector<8x128xf32>
    %666 = vector.shape_cast %609 : vector<8x128xf32> to vector<1x8x128xf32>
    tpu.vector_store %arg6[%c7_113, %c0_114, %c0_115], %666 {strides = array<i32>} : memref<18x8x128xf32, #tpu.memory_space<vmem>>, vector<1x8x128xf32>,
    %667 = arith.mulf %609, %648 : vector<8x128xf32>
    %cst_116 = arith.constant 1.000000e+00 : f32
    %668 = vector.broadcast %cst_116 : f32 to vector<8x128xf32>
    %669 = arith.subf %668, %667 : vector<8x128xf32>
    %670 = arith.mulf %669, %648 : vector<8x128xf32>
    %c10_117 = arith.constant 10 : index
    %c0_118 = arith.constant 0 : index
    %c0_119 = arith.constant 0 : index
    %671 = vector.load %arg6[%c10_117, %c0_118, %c0_119] : memref<18x8x128xf32, #tpu.memory_space<vmem>>, vector<1x8x128xf32>
    %672 = vector.shape_cast %671 : vector<1x8x128xf32> to vector<8x128xf32>
    %673 = vector.shape_cast %670 : vector<8x128xf32> to vector<1x8x128xf32>
    tpu.vector_store %arg6[%c10_117, %c0_118, %c0_119], %673 {strides = array<i32>} : memref<18x8x128xf32, #tpu.memory_space<vmem>>, vector<1x8x128xf32>,
    %c8_120 = arith.constant 8 : index
    %c0_121 = arith.constant 0 : index
    %c0_122 = arith.constant 0 : index
    %674 = vector.load %arg6[%c8_120, %c0_121, %c0_122] : memref<18x8x128xf32, #tpu.memory_space<vmem>>, vector<1x8x128xf32>
    %675 = vector.shape_cast %674 : vector<1x8x128xf32> to vector<8x128xf32>
    %676 = vector.shape_cast %617 : vector<8x128xf32> to vector<1x8x128xf32>
    tpu.vector_store %arg6[%c8_120, %c0_121, %c0_122], %676 {strides = array<i32>} : memref<18x8x128xf32, #tpu.memory_space<vmem>>, vector<1x8x128xf32>,
    %677 = arith.mulf %617, %653 : vector<8x128xf32>
    %cst_123 = arith.constant 1.000000e+00 : f32
    %678 = vector.broadcast %cst_123 : f32 to vector<8x128xf32>
    %679 = arith.subf %678, %677 : vector<8x128xf32>
    %680 = arith.mulf %679, %653 : vector<8x128xf32>
    %c11_124 = arith.constant 11 : index
    %c0_125 = arith.constant 0 : index
    %c0_126 = arith.constant 0 : index
    %681 = vector.load %arg6[%c11_124, %c0_125, %c0_126] : memref<18x8x128xf32, #tpu.memory_space<vmem>>, vector<1x8x128xf32>
    %682 = vector.shape_cast %681 : vector<1x8x128xf32> to vector<8x128xf32>
    %683 = vector.shape_cast %680 : vector<8x128xf32> to vector<1x8x128xf32>
    tpu.vector_store %arg6[%c11_124, %c0_125, %c0_126], %683 {strides = array<i32>} : memref<18x8x128xf32, #tpu.memory_space<vmem>>, vector<1x8x128xf32>,
    %684 = vector.broadcast %576 : f32 to vector<8x128xf32>
    %685 = arith.mulf %684, %567 : vector<8x128xf32>
    %686 = math.sin %685 : vector<8x128xf32>
    %687 = math.cos %685 : vector<8x128xf32>
    %688 = arith.mulf %567, %567 : vector<8x128xf32>
    %689 = vector.broadcast %577 : f32 to vector<8x128xf32>
    %690 = arith.mulf %686, %689 : vector<8x128xf32>
    %691 = vector.broadcast %581 : f32 to vector<8x128xf32>
    %692 = arith.mulf %691, %567 : vector<8x128xf32>
    %693 = arith.addf %690, %692 : vector<8x128xf32>
    %cst_127 = arith.constant 1.000000e+00 : f32
    %694 = vector.broadcast %cst_127 : f32 to vector<8x128xf32>
    %695 = arith.subf %694, %687 : vector<8x128xf32>
    %696 = vector.broadcast %578 : f32 to vector<8x128xf32>
    %697 = arith.mulf %695, %696 : vector<8x128xf32>
    %cst_128 = arith.constant 5.000000e-01 : f32
    %698 = vector.broadcast %cst_128 : f32 to vector<8x128xf32>
    %699 = arith.mulf %698, %688 : vector<8x128xf32>
    %700 = vector.broadcast %581 : f32 to vector<8x128xf32>
    %701 = arith.mulf %700, %699 : vector<8x128xf32>
    %702 = arith.addf %697, %701 : vector<8x128xf32>
    %703 = arith.subf %685, %686 : vector<8x128xf32>
    %704 = vector.broadcast %579 : f32 to vector<8x128xf32>
    %705 = arith.mulf %703, %704 : vector<8x128xf32>
    %706 = arith.mulf %688, %567 : vector<8x128xf32>
    %cst_129 = arith.constant 0.166666672 : f32
    %707 = vector.broadcast %cst_129 : f32 to vector<8x128xf32>
    %708 = arith.mulf %706, %707 : vector<8x128xf32>
    %709 = vector.broadcast %581 : f32 to vector<8x128xf32>
    %710 = arith.mulf %709, %708 : vector<8x128xf32>
    %711 = arith.addf %705, %710 : vector<8x128xf32>
    %cst_130 = arith.constant 0.000000e+00 : f32
    %712 = arith.subf %cst_130, %572 : f32
    %cst_131 = arith.constant 0.000000e+00 : f32
    %713 = arith.subf %cst_131, %570 : f32
    %cst_132 = arith.constant 0.000000e+00 : f32
    %714 = arith.subf %cst_132, %571 : f32
    %715 = arith.mulf %570, %570 : f32
    %716 = arith.subf %715, %580 : f32
    %717 = arith.mulf %570, %571 : f32
    %cst_133 = arith.constant 0.000000e+00 : f32
    %718 = arith.subf %717, %cst_133 : f32
    %719 = arith.mulf %570, %572 : f32
    %cst_134 = arith.constant 0.000000e+00 : f32
    %720 = arith.subf %719, %cst_134 : f32
    %721 = arith.mulf %571, %570 : f32
    %cst_135 = arith.constant 0.000000e+00 : f32
    %722 = arith.subf %721, %cst_135 : f32
    %723 = arith.mulf %571, %571 : f32
    %724 = arith.subf %723, %580 : f32
    %725 = arith.mulf %571, %572 : f32
    %cst_136 = arith.constant 0.000000e+00 : f32
    %726 = arith.subf %725, %cst_136 : f32
    %727 = arith.mulf %572, %570 : f32
    %cst_137 = arith.constant 0.000000e+00 : f32
    %728 = arith.subf %727, %cst_137 : f32
    %729 = arith.mulf %572, %571 : f32
    %cst_138 = arith.constant 0.000000e+00 : f32
    %730 = arith.subf %729, %cst_138 : f32
    %731 = arith.mulf %572, %572 : f32
    %732 = arith.subf %731, %580 : f32
    %733 = arith.mulf %571, %575 : f32
    %734 = arith.mulf %572, %574 : f32
    %735 = arith.subf %733, %734 : f32
    %736 = arith.mulf %572, %573 : f32
    %737 = arith.mulf %570, %575 : f32
    %738 = arith.subf %736, %737 : f32
    %739 = arith.mulf %570, %574 : f32
    %740 = arith.mulf %571, %573 : f32
    %741 = arith.subf %739, %740 : f32
    %742 = arith.mulf %571, %741 : f32
    %743 = arith.mulf %572, %738 : f32
    %744 = arith.subf %742, %743 : f32
    %745 = arith.mulf %572, %735 : f32
    %746 = arith.mulf %570, %741 : f32
    %747 = arith.subf %745, %746 : f32
    %748 = arith.mulf %570, %738 : f32
    %749 = arith.mulf %571, %735 : f32
    %750 = arith.subf %748, %749 : f32
    %751 = vector.broadcast %716 : f32 to vector<8x128xf32>
    %752 = arith.mulf %702, %751 : vector<8x128xf32>
    %cst_139 = arith.constant 1.000000e+00 : f32
    %753 = vector.broadcast %cst_139 : f32 to vector<8x128xf32>
    %754 = arith.addf %753, %752 : vector<8x128xf32>
    %755 = vector.broadcast %712 : f32 to vector<8x128xf32>
    %756 = arith.mulf %693, %755 : vector<8x128xf32>
    %757 = vector.broadcast %718 : f32 to vector<8x128xf32>
    %758 = arith.mulf %702, %757 : vector<8x128xf32>
    %759 = arith.addf %756, %758 : vector<8x128xf32>
    %760 = vector.broadcast %571 : f32 to vector<8x128xf32>
    %761 = arith.mulf %693, %760 : vector<8x128xf32>
    %762 = vector.broadcast %720 : f32 to vector<8x128xf32>
    %763 = arith.mulf %702, %762 : vector<8x128xf32>
    %764 = arith.addf %761, %763 : vector<8x128xf32>
    %765 = vector.broadcast %572 : f32 to vector<8x128xf32>
    %766 = arith.mulf %693, %765 : vector<8x128xf32>
    %767 = vector.broadcast %722 : f32 to vector<8x128xf32>
    %768 = arith.mulf %702, %767 : vector<8x128xf32>
    %769 = arith.addf %766, %768 : vector<8x128xf32>
    %770 = vector.broadcast %724 : f32 to vector<8x128xf32>
    %771 = arith.mulf %702, %770 : vector<8x128xf32>
    %cst_140 = arith.constant 1.000000e+00 : f32
    %772 = vector.broadcast %cst_140 : f32 to vector<8x128xf32>
    %773 = arith.addf %772, %771 : vector<8x128xf32>
    %774 = vector.broadcast %713 : f32 to vector<8x128xf32>
    %775 = arith.mulf %693, %774 : vector<8x128xf32>
    %776 = vector.broadcast %726 : f32 to vector<8x128xf32>
    %777 = arith.mulf %702, %776 : vector<8x128xf32>
    %778 = arith.addf %775, %777 : vector<8x128xf32>
    %779 = vector.broadcast %714 : f32 to vector<8x128xf32>
    %780 = arith.mulf %693, %779 : vector<8x128xf32>
    %781 = vector.broadcast %728 : f32 to vector<8x128xf32>
    %782 = arith.mulf %702, %781 : vector<8x128xf32>
    %783 = arith.addf %780, %782 : vector<8x128xf32>
    %784 = vector.broadcast %570 : f32 to vector<8x128xf32>
    %785 = arith.mulf %693, %784 : vector<8x128xf32>
    %786 = vector.broadcast %730 : f32 to vector<8x128xf32>
    %787 = arith.mulf %702, %786 : vector<8x128xf32>
    %788 = arith.addf %785, %787 : vector<8x128xf32>
    %789 = vector.broadcast %732 : f32 to vector<8x128xf32>
    %790 = arith.mulf %702, %789 : vector<8x128xf32>
    %cst_141 = arith.constant 1.000000e+00 : f32
    %791 = vector.broadcast %cst_141 : f32 to vector<8x128xf32>
    %792 = arith.addf %791, %790 : vector<8x128xf32>
    %793 = vector.broadcast %573 : f32 to vector<8x128xf32>
    %794 = arith.mulf %567, %793 : vector<8x128xf32>
    %795 = vector.broadcast %735 : f32 to vector<8x128xf32>
    %796 = arith.mulf %702, %795 : vector<8x128xf32>
    %797 = arith.addf %794, %796 : vector<8x128xf32>
    %798 = vector.broadcast %744 : f32 to vector<8x128xf32>
    %799 = arith.mulf %711, %798 : vector<8x128xf32>
    %800 = arith.addf %797, %799 : vector<8x128xf32>
    %801 = vector.broadcast %574 : f32 to vector<8x128xf32>
    %802 = arith.mulf %567, %801 : vector<8x128xf32>
    %803 = vector.broadcast %738 : f32 to vector<8x128xf32>
    %804 = arith.mulf %702, %803 : vector<8x128xf32>
    %805 = arith.addf %802, %804 : vector<8x128xf32>
    %806 = vector.broadcast %747 : f32 to vector<8x128xf32>
    %807 = arith.mulf %711, %806 : vector<8x128xf32>
    %808 = arith.addf %805, %807 : vector<8x128xf32>
    %809 = vector.broadcast %575 : f32 to vector<8x128xf32>
    %810 = arith.mulf %567, %809 : vector<8x128xf32>
    %811 = vector.broadcast %741 : f32 to vector<8x128xf32>
    %812 = arith.mulf %702, %811 : vector<8x128xf32>
    %813 = arith.addf %810, %812 : vector<8x128xf32>
    %814 = vector.broadcast %750 : f32 to vector<8x128xf32>
    %815 = arith.mulf %711, %814 : vector<8x128xf32>
    %816 = arith.addf %813, %815 : vector<8x128xf32>
    %817 = arith.mulf %507, %754 : vector<8x128xf32>
    %818 = arith.mulf %512, %769 : vector<8x128xf32>
    %819 = arith.addf %817, %818 : vector<8x128xf32>
    %820 = arith.mulf %517, %783 : vector<8x128xf32>
    %821 = arith.addf %819, %820 : vector<8x128xf32>
    %822 = arith.mulf %507, %759 : vector<8x128xf32>
    %823 = arith.mulf %512, %773 : vector<8x128xf32>
    %824 = arith.addf %822, %823 : vector<8x128xf32>
    %825 = arith.mulf %517, %788 : vector<8x128xf32>
    %826 = arith.addf %824, %825 : vector<8x128xf32>
    %827 = arith.mulf %507, %764 : vector<8x128xf32>
    %828 = arith.mulf %512, %778 : vector<8x128xf32>
    %829 = arith.addf %827, %828 : vector<8x128xf32>
    %830 = arith.mulf %517, %792 : vector<8x128xf32>
    %831 = arith.addf %829, %830 : vector<8x128xf32>
    %832 = arith.mulf %522, %754 : vector<8x128xf32>
    %833 = arith.mulf %527, %769 : vector<8x128xf32>
    %834 = arith.addf %832, %833 : vector<8x128xf32>
    %835 = arith.mulf %532, %783 : vector<8x128xf32>
    %836 = arith.addf %834, %835 : vector<8x128xf32>
    %837 = arith.mulf %522, %759 : vector<8x128xf32>
    %838 = arith.mulf %527, %773 : vector<8x128xf32>
    %839 = arith.addf %837, %838 : vector<8x128xf32>
    %840 = arith.mulf %532, %788 : vector<8x128xf32>
    %841 = arith.addf %839, %840 : vector<8x128xf32>
    %842 = arith.mulf %522, %764 : vector<8x128xf32>
    %843 = arith.mulf %527, %778 : vector<8x128xf32>
    %844 = arith.addf %842, %843 : vector<8x128xf32>
    %845 = arith.mulf %532, %792 : vector<8x128xf32>
    %846 = arith.addf %844, %845 : vector<8x128xf32>
    %847 = arith.mulf %537, %754 : vector<8x128xf32>
    %848 = arith.mulf %542, %769 : vector<8x128xf32>
    %849 = arith.addf %847, %848 : vector<8x128xf32>
    %850 = arith.mulf %547, %783 : vector<8x128xf32>
    %851 = arith.addf %849, %850 : vector<8x128xf32>
    %852 = arith.mulf %537, %759 : vector<8x128xf32>
    %853 = arith.mulf %542, %773 : vector<8x128xf32>
    %854 = arith.addf %852, %853 : vector<8x128xf32>
    %855 = arith.mulf %547, %788 : vector<8x128xf32>
    %856 = arith.addf %854, %855 : vector<8x128xf32>
    %857 = arith.mulf %537, %764 : vector<8x128xf32>
    %858 = arith.mulf %542, %778 : vector<8x128xf32>
    %859 = arith.addf %857, %858 : vector<8x128xf32>
    %860 = arith.mulf %547, %792 : vector<8x128xf32>
    %861 = arith.addf %859, %860 : vector<8x128xf32>
    %862 = arith.mulf %507, %800 : vector<8x128xf32>
    %863 = arith.mulf %512, %808 : vector<8x128xf32>
    %864 = arith.addf %862, %863 : vector<8x128xf32>
    %865 = arith.mulf %517, %816 : vector<8x128xf32>
    %866 = arith.addf %864, %865 : vector<8x128xf32>
    %867 = arith.addf %866, %553 : vector<8x128xf32>
    %868 = arith.mulf %522, %800 : vector<8x128xf32>
    %869 = arith.mulf %527, %808 : vector<8x128xf32>
    %870 = arith.addf %868, %869 : vector<8x128xf32>
    %871 = arith.mulf %532, %816 : vector<8x128xf32>
    %872 = arith.addf %870, %871 : vector<8x128xf32>
    %873 = arith.addf %872, %559 : vector<8x128xf32>
    %874 = arith.mulf %537, %800 : vector<8x128xf32>
    %875 = arith.mulf %542, %808 : vector<8x128xf32>
    %876 = arith.addf %874, %875 : vector<8x128xf32>
    %877 = arith.mulf %547, %816 : vector<8x128xf32>
    %878 = arith.addf %876, %877 : vector<8x128xf32>
    %879 = arith.addf %878, %565 : vector<8x128xf32>
    %880 = vector.broadcast %584 : f32 to vector<8x128xf32>
    %881 = arith.mulf %873, %880 : vector<8x128xf32>
    %882 = vector.broadcast %583 : f32 to vector<8x128xf32>
    %883 = arith.mulf %879, %882 : vector<8x128xf32>
    %884 = arith.subf %881, %883 : vector<8x128xf32>
    %885 = vector.broadcast %582 : f32 to vector<8x128xf32>
    %886 = arith.mulf %879, %885 : vector<8x128xf32>
    %887 = vector.broadcast %584 : f32 to vector<8x128xf32>
    %888 = arith.mulf %867, %887 : vector<8x128xf32>
    %889 = arith.subf %886, %888 : vector<8x128xf32>
    %890 = vector.broadcast %583 : f32 to vector<8x128xf32>
    %891 = arith.mulf %867, %890 : vector<8x128xf32>
    %892 = vector.broadcast %582 : f32 to vector<8x128xf32>
    %893 = arith.mulf %873, %892 : vector<8x128xf32>
    %894 = arith.subf %891, %893 : vector<8x128xf32>
    %895 = vector.broadcast %585 : f32 to vector<8x128xf32>
    %896 = arith.subf %895, %884 : vector<8x128xf32>
    %897 = vector.broadcast %586 : f32 to vector<8x128xf32>
    %898 = arith.subf %897, %889 : vector<8x128xf32>
    %899 = vector.broadcast %587 : f32 to vector<8x128xf32>
    %900 = arith.subf %899, %894 : vector<8x128xf32>
    %901 = arith.mulf %821, %896 : vector<8x128xf32>
    %902 = arith.mulf %836, %898 : vector<8x128xf32>
    %903 = arith.addf %901, %902 : vector<8x128xf32>
    %904 = arith.mulf %851, %900 : vector<8x128xf32>
    %905 = arith.addf %903, %904 : vector<8x128xf32>
    %906 = arith.mulf %826, %896 : vector<8x128xf32>
    %907 = arith.mulf %841, %898 : vector<8x128xf32>
    %908 = arith.addf %906, %907 : vector<8x128xf32>
    %909 = arith.mulf %856, %900 : vector<8x128xf32>
    %910 = arith.addf %908, %909 : vector<8x128xf32>
    %911 = arith.mulf %831, %896 : vector<8x128xf32>
    %912 = arith.mulf %846, %898 : vector<8x128xf32>
    %913 = arith.addf %911, %912 : vector<8x128xf32>
    %914 = arith.mulf %861, %900 : vector<8x128xf32>
    %915 = arith.addf %913, %914 : vector<8x128xf32>
    %c6_142 = arith.constant 6 : index
    %c0_143 = arith.constant 0 : index
    %c0_144 = arith.constant 0 : index
    %916 = vector.load %arg7[%c6_142, %c0_143, %c0_144] : memref<18x8x128xf32, #tpu.memory_space<vmem>>, vector<1x8x128xf32>
    %917 = vector.shape_cast %916 : vector<1x8x128xf32> to vector<8x128xf32>
    %918 = vector.shape_cast %1 : vector<8x128xf32> to vector<1x8x128xf32>
    tpu.vector_store %arg7[%c6_142, %c0_143, %c0_144], %918 {strides = array<i32>} : memref<18x8x128xf32, #tpu.memory_space<vmem>>, vector<1x8x128xf32>,
    %c9_145 = arith.constant 9 : index
    %c0_146 = arith.constant 0 : index
    %c0_147 = arith.constant 0 : index
    %919 = vector.load %arg7[%c9_145, %c0_146, %c0_147] : memref<18x8x128xf32, #tpu.memory_space<vmem>>, vector<1x8x128xf32>
    %920 = vector.shape_cast %919 : vector<1x8x128xf32> to vector<8x128xf32>
    %921 = vector.shape_cast %905 : vector<8x128xf32> to vector<1x8x128xf32>
    tpu.vector_store %arg7[%c9_145, %c0_146, %c0_147], %921 {strides = array<i32>} : memref<18x8x128xf32, #tpu.memory_space<vmem>>, vector<1x8x128xf32>,
    %c7_148 = arith.constant 7 : index
    %c0_149 = arith.constant 0 : index
    %c0_150 = arith.constant 0 : index
    %922 = vector.load %arg7[%c7_148, %c0_149, %c0_150] : memref<18x8x128xf32, #tpu.memory_space<vmem>>, vector<1x8x128xf32>
    %923 = vector.shape_cast %922 : vector<1x8x128xf32> to vector<8x128xf32>
    %924 = vector.shape_cast %1 : vector<8x128xf32> to vector<1x8x128xf32>
    tpu.vector_store %arg7[%c7_148, %c0_149, %c0_150], %924 {strides = array<i32>} : memref<18x8x128xf32, #tpu.memory_space<vmem>>, vector<1x8x128xf32>,
    %c10_151 = arith.constant 10 : index
    %c0_152 = arith.constant 0 : index
    %c0_153 = arith.constant 0 : index
    %925 = vector.load %arg7[%c10_151, %c0_152, %c0_153] : memref<18x8x128xf32, #tpu.memory_space<vmem>>, vector<1x8x128xf32>
    %926 = vector.shape_cast %925 : vector<1x8x128xf32> to vector<8x128xf32>
    %927 = vector.shape_cast %910 : vector<8x128xf32> to vector<1x8x128xf32>
    tpu.vector_store %arg7[%c10_151, %c0_152, %c0_153], %927 {strides = array<i32>} : memref<18x8x128xf32, #tpu.memory_space<vmem>>, vector<1x8x128xf32>,
    %c8_154 = arith.constant 8 : index
    %c0_155 = arith.constant 0 : index
    %c0_156 = arith.constant 0 : index
    %928 = vector.load %arg7[%c8_154, %c0_155, %c0_156] : memref<18x8x128xf32, #tpu.memory_space<vmem>>, vector<1x8x128xf32>
    %929 = vector.shape_cast %928 : vector<1x8x128xf32> to vector<8x128xf32>
    %930 = vector.shape_cast %1 : vector<8x128xf32> to vector<1x8x128xf32>
    tpu.vector_store %arg7[%c8_154, %c0_155, %c0_156], %930 {strides = array<i32>} : memref<18x8x128xf32, #tpu.memory_space<vmem>>, vector<1x8x128xf32>,
    %c11_157 = arith.constant 11 : index
    %c0_158 = arith.constant 0 : index
    %c0_159 = arith.constant 0 : index
    %931 = vector.load %arg7[%c11_157, %c0_158, %c0_159] : memref<18x8x128xf32, #tpu.memory_space<vmem>>, vector<1x8x128xf32>
    %932 = vector.shape_cast %931 : vector<1x8x128xf32> to vector<8x128xf32>
    %933 = vector.shape_cast %915 : vector<8x128xf32> to vector<1x8x128xf32>
    tpu.vector_store %arg7[%c11_157, %c0_158, %c0_159], %933 {strides = array<i32>} : memref<18x8x128xf32, #tpu.memory_space<vmem>>, vector<1x8x128xf32>,
    %934 = vector.broadcast %588 : f32 to vector<8x128xf32>
    %935 = arith.mulf %934, %569 : vector<8x128xf32>
    %936 = math.sin %935 : vector<8x128xf32>
    %937 = math.cos %935 : vector<8x128xf32>
    %938 = arith.mulf %569, %569 : vector<8x128xf32>
    %939 = vector.broadcast %589 : f32 to vector<8x128xf32>
    %940 = arith.mulf %936, %939 : vector<8x128xf32>
    %941 = vector.broadcast %593 : f32 to vector<8x128xf32>
    %942 = arith.mulf %941, %569 : vector<8x128xf32>
    %943 = arith.addf %940, %942 : vector<8x128xf32>
    %cst_160 = arith.constant 1.000000e+00 : f32
    %944 = vector.broadcast %cst_160 : f32 to vector<8x128xf32>
    %945 = arith.subf %944, %937 : vector<8x128xf32>
    %946 = vector.broadcast %590 : f32 to vector<8x128xf32>
    %947 = arith.mulf %945, %946 : vector<8x128xf32>
    %cst_161 = arith.constant 5.000000e-01 : f32
    %948 = vector.broadcast %cst_161 : f32 to vector<8x128xf32>
    %949 = arith.mulf %948, %938 : vector<8x128xf32>
    %950 = vector.broadcast %593 : f32 to vector<8x128xf32>
    %951 = arith.mulf %950, %949 : vector<8x128xf32>
    %952 = arith.addf %947, %951 : vector<8x128xf32>
    %953 = arith.subf %935, %936 : vector<8x128xf32>
    %954 = vector.broadcast %591 : f32 to vector<8x128xf32>
    %955 = arith.mulf %953, %954 : vector<8x128xf32>
    %956 = arith.mulf %938, %569 : vector<8x128xf32>
    %cst_162 = arith.constant 0.166666672 : f32
    %957 = vector.broadcast %cst_162 : f32 to vector<8x128xf32>
    %958 = arith.mulf %956, %957 : vector<8x128xf32>
    %959 = vector.broadcast %593 : f32 to vector<8x128xf32>
    %960 = arith.mulf %959, %958 : vector<8x128xf32>
    %961 = arith.addf %955, %960 : vector<8x128xf32>
    %cst_163 = arith.constant 0.000000e+00 : f32
    %962 = arith.subf %cst_163, %584 : f32
    %cst_164 = arith.constant 0.000000e+00 : f32
    %963 = arith.subf %cst_164, %582 : f32
    %cst_165 = arith.constant 0.000000e+00 : f32
    %964 = arith.subf %cst_165, %583 : f32
    %965 = arith.mulf %582, %582 : f32
    %966 = arith.subf %965, %592 : f32
    %967 = arith.mulf %582, %583 : f32
    %cst_166 = arith.constant 0.000000e+00 : f32
    %968 = arith.subf %967, %cst_166 : f32
    %969 = arith.mulf %582, %584 : f32
    %cst_167 = arith.constant 0.000000e+00 : f32
    %970 = arith.subf %969, %cst_167 : f32
    %971 = arith.mulf %583, %582 : f32
    %cst_168 = arith.constant 0.000000e+00 : f32
    %972 = arith.subf %971, %cst_168 : f32
    %973 = arith.mulf %583, %583 : f32
    %974 = arith.subf %973, %592 : f32
    %975 = arith.mulf %583, %584 : f32
    %cst_169 = arith.constant 0.000000e+00 : f32
    %976 = arith.subf %975, %cst_169 : f32
    %977 = arith.mulf %584, %582 : f32
    %cst_170 = arith.constant 0.000000e+00 : f32
    %978 = arith.subf %977, %cst_170 : f32
    %979 = arith.mulf %584, %583 : f32
    %cst_171 = arith.constant 0.000000e+00 : f32
    %980 = arith.subf %979, %cst_171 : f32
    %981 = arith.mulf %584, %584 : f32
    %982 = arith.subf %981, %592 : f32
    %983 = arith.mulf %583, %587 : f32
    %984 = arith.mulf %584, %586 : f32
    %985 = arith.subf %983, %984 : f32
    %986 = arith.mulf %584, %585 : f32
    %987 = arith.mulf %582, %587 : f32
    %988 = arith.subf %986, %987 : f32
    %989 = arith.mulf %582, %586 : f32
    %990 = arith.mulf %583, %585 : f32
    %991 = arith.subf %989, %990 : f32
    %992 = arith.mulf %583, %991 : f32
    %993 = arith.mulf %584, %988 : f32
    %994 = arith.subf %992, %993 : f32
    %995 = arith.mulf %584, %985 : f32
    %996 = arith.mulf %582, %991 : f32
    %997 = arith.subf %995, %996 : f32
    %998 = arith.mulf %582, %988 : f32
    %999 = arith.mulf %583, %985 : f32
    %1000 = arith.subf %998, %999 : f32
    %1001 = vector.broadcast %966 : f32 to vector<8x128xf32>
    %1002 = arith.mulf %952, %1001 : vector<8x128xf32>
    %cst_172 = arith.constant 1.000000e+00 : f32
    %1003 = vector.broadcast %cst_172 : f32 to vector<8x128xf32>
    %1004 = arith.addf %1003, %1002 : vector<8x128xf32>
    %1005 = vector.broadcast %962 : f32 to vector<8x128xf32>
    %1006 = arith.mulf %943, %1005 : vector<8x128xf32>
    %1007 = vector.broadcast %968 : f32 to vector<8x128xf32>
    %1008 = arith.mulf %952, %1007 : vector<8x128xf32>
    %1009 = arith.addf %1006, %1008 : vector<8x128xf32>
    %1010 = vector.broadcast %583 : f32 to vector<8x128xf32>
    %1011 = arith.mulf %943, %1010 : vector<8x128xf32>
    %1012 = vector.broadcast %970 : f32 to vector<8x128xf32>
    %1013 = arith.mulf %952, %1012 : vector<8x128xf32>
    %1014 = arith.addf %1011, %1013 : vector<8x128xf32>
    %1015 = vector.broadcast %584 : f32 to vector<8x128xf32>
    %1016 = arith.mulf %943, %1015 : vector<8x128xf32>
    %1017 = vector.broadcast %972 : f32 to vector<8x128xf32>
    %1018 = arith.mulf %952, %1017 : vector<8x128xf32>
    %1019 = arith.addf %1016, %1018 : vector<8x128xf32>
    %1020 = vector.broadcast %974 : f32 to vector<8x128xf32>
    %1021 = arith.mulf %952, %1020 : vector<8x128xf32>
    %cst_173 = arith.constant 1.000000e+00 : f32
    %1022 = vector.broadcast %cst_173 : f32 to vector<8x128xf32>
    %1023 = arith.addf %1022, %1021 : vector<8x128xf32>
    %1024 = vector.broadcast %963 : f32 to vector<8x128xf32>
    %1025 = arith.mulf %943, %1024 : vector<8x128xf32>
    %1026 = vector.broadcast %976 : f32 to vector<8x128xf32>
    %1027 = arith.mulf %952, %1026 : vector<8x128xf32>
    %1028 = arith.addf %1025, %1027 : vector<8x128xf32>
    %1029 = vector.broadcast %964 : f32 to vector<8x128xf32>
    %1030 = arith.mulf %943, %1029 : vector<8x128xf32>
    %1031 = vector.broadcast %978 : f32 to vector<8x128xf32>
    %1032 = arith.mulf %952, %1031 : vector<8x128xf32>
    %1033 = arith.addf %1030, %1032 : vector<8x128xf32>
    %1034 = vector.broadcast %582 : f32 to vector<8x128xf32>
    %1035 = arith.mulf %943, %1034 : vector<8x128xf32>
    %1036 = vector.broadcast %980 : f32 to vector<8x128xf32>
    %1037 = arith.mulf %952, %1036 : vector<8x128xf32>
    %1038 = arith.addf %1035, %1037 : vector<8x128xf32>
    %1039 = vector.broadcast %982 : f32 to vector<8x128xf32>
    %1040 = arith.mulf %952, %1039 : vector<8x128xf32>
    %cst_174 = arith.constant 1.000000e+00 : f32
    %1041 = vector.broadcast %cst_174 : f32 to vector<8x128xf32>
    %1042 = arith.addf %1041, %1040 : vector<8x128xf32>
    %1043 = vector.broadcast %585 : f32 to vector<8x128xf32>
    %1044 = arith.mulf %569, %1043 : vector<8x128xf32>
    %1045 = vector.broadcast %985 : f32 to vector<8x128xf32>
    %1046 = arith.mulf %952, %1045 : vector<8x128xf32>
    %1047 = arith.addf %1044, %1046 : vector<8x128xf32>
    %1048 = vector.broadcast %994 : f32 to vector<8x128xf32>
    %1049 = arith.mulf %961, %1048 : vector<8x128xf32>
    %1050 = arith.addf %1047, %1049 : vector<8x128xf32>
    %1051 = vector.broadcast %586 : f32 to vector<8x128xf32>
    %1052 = arith.mulf %569, %1051 : vector<8x128xf32>
    %1053 = vector.broadcast %988 : f32 to vector<8x128xf32>
    %1054 = arith.mulf %952, %1053 : vector<8x128xf32>
    %1055 = arith.addf %1052, %1054 : vector<8x128xf32>
    %1056 = vector.broadcast %997 : f32 to vector<8x128xf32>
    %1057 = arith.mulf %961, %1056 : vector<8x128xf32>
    %1058 = arith.addf %1055, %1057 : vector<8x128xf32>
    %1059 = vector.broadcast %587 : f32 to vector<8x128xf32>
    %1060 = arith.mulf %569, %1059 : vector<8x128xf32>
    %1061 = vector.broadcast %991 : f32 to vector<8x128xf32>
    %1062 = arith.mulf %952, %1061 : vector<8x128xf32>
    %1063 = arith.addf %1060, %1062 : vector<8x128xf32>
    %1064 = vector.broadcast %1000 : f32 to vector<8x128xf32>
    %1065 = arith.mulf %961, %1064 : vector<8x128xf32>
    %1066 = arith.addf %1063, %1065 : vector<8x128xf32>
    %1067 = arith.mulf %821, %1004 : vector<8x128xf32>
    %1068 = arith.mulf %826, %1019 : vector<8x128xf32>
    %1069 = arith.addf %1067, %1068 : vector<8x128xf32>
    %1070 = arith.mulf %831, %1033 : vector<8x128xf32>
    %1071 = arith.addf %1069, %1070 : vector<8x128xf32>
    %1072 = arith.mulf %821, %1009 : vector<8x128xf32>
    %1073 = arith.mulf %826, %1023 : vector<8x128xf32>
    %1074 = arith.addf %1072, %1073 : vector<8x128xf32>
    %1075 = arith.mulf %831, %1038 : vector<8x128xf32>
    %1076 = arith.addf %1074, %1075 : vector<8x128xf32>
    %1077 = arith.mulf %821, %1014 : vector<8x128xf32>
    %1078 = arith.mulf %826, %1028 : vector<8x128xf32>
    %1079 = arith.addf %1077, %1078 : vector<8x128xf32>
    %1080 = arith.mulf %831, %1042 : vector<8x128xf32>
    %1081 = arith.addf %1079, %1080 : vector<8x128xf32>
    %1082 = arith.mulf %836, %1004 : vector<8x128xf32>
    %1083 = arith.mulf %841, %1019 : vector<8x128xf32>
    %1084 = arith.addf %1082, %1083 : vector<8x128xf32>
    %1085 = arith.mulf %846, %1033 : vector<8x128xf32>
    %1086 = arith.addf %1084, %1085 : vector<8x128xf32>
    %1087 = arith.mulf %836, %1009 : vector<8x128xf32>
    %1088 = arith.mulf %841, %1023 : vector<8x128xf32>
    %1089 = arith.addf %1087, %1088 : vector<8x128xf32>
    %1090 = arith.mulf %846, %1038 : vector<8x128xf32>
    %1091 = arith.addf %1089, %1090 : vector<8x128xf32>
    %1092 = arith.mulf %836, %1014 : vector<8x128xf32>
    %1093 = arith.mulf %841, %1028 : vector<8x128xf32>
    %1094 = arith.addf %1092, %1093 : vector<8x128xf32>
    %1095 = arith.mulf %846, %1042 : vector<8x128xf32>
    %1096 = arith.addf %1094, %1095 : vector<8x128xf32>
    %1097 = arith.mulf %851, %1004 : vector<8x128xf32>
    %1098 = arith.mulf %856, %1019 : vector<8x128xf32>
    %1099 = arith.addf %1097, %1098 : vector<8x128xf32>
    %1100 = arith.mulf %861, %1033 : vector<8x128xf32>
    %1101 = arith.addf %1099, %1100 : vector<8x128xf32>
    %1102 = arith.mulf %851, %1009 : vector<8x128xf32>
    %1103 = arith.mulf %856, %1023 : vector<8x128xf32>
    %1104 = arith.addf %1102, %1103 : vector<8x128xf32>
    %1105 = arith.mulf %861, %1038 : vector<8x128xf32>
    %1106 = arith.addf %1104, %1105 : vector<8x128xf32>
    %1107 = arith.mulf %851, %1014 : vector<8x128xf32>
    %1108 = arith.mulf %856, %1028 : vector<8x128xf32>
    %1109 = arith.addf %1107, %1108 : vector<8x128xf32>
    %1110 = arith.mulf %861, %1042 : vector<8x128xf32>
    %1111 = arith.addf %1109, %1110 : vector<8x128xf32>
    %1112 = arith.mulf %821, %1050 : vector<8x128xf32>
    %1113 = arith.mulf %826, %1058 : vector<8x128xf32>
    %1114 = arith.addf %1112, %1113 : vector<8x128xf32>
    %1115 = arith.mulf %831, %1066 : vector<8x128xf32>
    %1116 = arith.addf %1114, %1115 : vector<8x128xf32>
    %1117 = arith.addf %1116, %867 : vector<8x128xf32>
    %1118 = arith.mulf %836, %1050 : vector<8x128xf32>
    %1119 = arith.mulf %841, %1058 : vector<8x128xf32>
    %1120 = arith.addf %1118, %1119 : vector<8x128xf32>
    %1121 = arith.mulf %846, %1066 : vector<8x128xf32>
    %1122 = arith.addf %1120, %1121 : vector<8x128xf32>
    %1123 = arith.addf %1122, %873 : vector<8x128xf32>
    %1124 = arith.mulf %851, %1050 : vector<8x128xf32>
    %1125 = arith.mulf %856, %1058 : vector<8x128xf32>
    %1126 = arith.addf %1124, %1125 : vector<8x128xf32>
    %1127 = arith.mulf %861, %1066 : vector<8x128xf32>
    %1128 = arith.addf %1126, %1127 : vector<8x128xf32>
    %1129 = arith.addf %1128, %879 : vector<8x128xf32>
    %c16_175 = arith.constant 16 : index
    %1130 = memref.load %arg4[%c16_175] : memref<48xf32, #tpu.memory_space<smem>>
    %c17_176 = arith.constant 17 : index
    %1131 = memref.load %arg4[%c17_176] : memref<48xf32, #tpu.memory_space<smem>>
    %c18_177 = arith.constant 18 : index
    %1132 = memref.load %arg4[%c18_177] : memref<48xf32, #tpu.memory_space<smem>>
    %c20_178 = arith.constant 20 : index
    %1133 = memref.load %arg4[%c20_178] : memref<48xf32, #tpu.memory_space<smem>>
    %c21_179 = arith.constant 21 : index
    %1134 = memref.load %arg4[%c21_179] : memref<48xf32, #tpu.memory_space<smem>>
    %c22_180 = arith.constant 22 : index
    %1135 = memref.load %arg4[%c22_180] : memref<48xf32, #tpu.memory_space<smem>>
    %c24 = arith.constant 24 : index
    %1136 = memref.load %arg4[%c24] : memref<48xf32, #tpu.memory_space<smem>>
    %c25 = arith.constant 25 : index
    %1137 = memref.load %arg4[%c25] : memref<48xf32, #tpu.memory_space<smem>>
    %c26 = arith.constant 26 : index
    %1138 = memref.load %arg4[%c26] : memref<48xf32, #tpu.memory_space<smem>>
    %c19_181 = arith.constant 19 : index
    %1139 = memref.load %arg4[%c19_181] : memref<48xf32, #tpu.memory_space<smem>>
    %c23_182 = arith.constant 23 : index
    %1140 = memref.load %arg4[%c23_182] : memref<48xf32, #tpu.memory_space<smem>>
    %c27 = arith.constant 27 : index
    %1141 = memref.load %arg4[%c27] : memref<48xf32, #tpu.memory_space<smem>>
    %1142 = vector.broadcast %1130 : f32 to vector<8x128xf32>
    %1143 = arith.mulf %1071, %1142 : vector<8x128xf32>
    %1144 = vector.broadcast %1133 : f32 to vector<8x128xf32>
    %1145 = arith.mulf %1076, %1144 : vector<8x128xf32>
    %1146 = arith.addf %1143, %1145 : vector<8x128xf32>
    %1147 = vector.broadcast %1136 : f32 to vector<8x128xf32>
    %1148 = arith.mulf %1081, %1147 : vector<8x128xf32>
    %1149 = arith.addf %1146, %1148 : vector<8x128xf32>
    %1150 = vector.broadcast %1131 : f32 to vector<8x128xf32>
    %1151 = arith.mulf %1071, %1150 : vector<8x128xf32>
    %1152 = vector.broadcast %1134 : f32 to vector<8x128xf32>
    %1153 = arith.mulf %1076, %1152 : vector<8x128xf32>
    %1154 = arith.addf %1151, %1153 : vector<8x128xf32>
    %1155 = vector.broadcast %1137 : f32 to vector<8x128xf32>
    %1156 = arith.mulf %1081, %1155 : vector<8x128xf32>
    %1157 = arith.addf %1154, %1156 : vector<8x128xf32>
    %1158 = vector.broadcast %1132 : f32 to vector<8x128xf32>
    %1159 = arith.mulf %1071, %1158 : vector<8x128xf32>
    %1160 = vector.broadcast %1135 : f32 to vector<8x128xf32>
    %1161 = arith.mulf %1076, %1160 : vector<8x128xf32>
    %1162 = arith.addf %1159, %1161 : vector<8x128xf32>
    %1163 = vector.broadcast %1138 : f32 to vector<8x128xf32>
    %1164 = arith.mulf %1081, %1163 : vector<8x128xf32>
    %1165 = arith.addf %1162, %1164 : vector<8x128xf32>
    %1166 = vector.broadcast %1130 : f32 to vector<8x128xf32>
    %1167 = arith.mulf %1086, %1166 : vector<8x128xf32>
    %1168 = vector.broadcast %1133 : f32 to vector<8x128xf32>
    %1169 = arith.mulf %1091, %1168 : vector<8x128xf32>
    %1170 = arith.addf %1167, %1169 : vector<8x128xf32>
    %1171 = vector.broadcast %1136 : f32 to vector<8x128xf32>
    %1172 = arith.mulf %1096, %1171 : vector<8x128xf32>
    %1173 = arith.addf %1170, %1172 : vector<8x128xf32>
    %1174 = vector.broadcast %1131 : f32 to vector<8x128xf32>
    %1175 = arith.mulf %1086, %1174 : vector<8x128xf32>
    %1176 = vector.broadcast %1134 : f32 to vector<8x128xf32>
    %1177 = arith.mulf %1091, %1176 : vector<8x128xf32>
    %1178 = arith.addf %1175, %1177 : vector<8x128xf32>
    %1179 = vector.broadcast %1137 : f32 to vector<8x128xf32>
    %1180 = arith.mulf %1096, %1179 : vector<8x128xf32>
    %1181 = arith.addf %1178, %1180 : vector<8x128xf32>
    %1182 = vector.broadcast %1132 : f32 to vector<8x128xf32>
    %1183 = arith.mulf %1086, %1182 : vector<8x128xf32>
    %1184 = vector.broadcast %1135 : f32 to vector<8x128xf32>
    %1185 = arith.mulf %1091, %1184 : vector<8x128xf32>
    %1186 = arith.addf %1183, %1185 : vector<8x128xf32>
    %1187 = vector.broadcast %1138 : f32 to vector<8x128xf32>
    %1188 = arith.mulf %1096, %1187 : vector<8x128xf32>
    %1189 = arith.addf %1186, %1188 : vector<8x128xf32>
    %1190 = vector.broadcast %1130 : f32 to vector<8x128xf32>
    %1191 = arith.mulf %1101, %1190 : vector<8x128xf32>
    %1192 = vector.broadcast %1133 : f32 to vector<8x128xf32>
    %1193 = arith.mulf %1106, %1192 : vector<8x128xf32>
    %1194 = arith.addf %1191, %1193 : vector<8x128xf32>
    %1195 = vector.broadcast %1136 : f32 to vector<8x128xf32>
    %1196 = arith.mulf %1111, %1195 : vector<8x128xf32>
    %1197 = arith.addf %1194, %1196 : vector<8x128xf32>
    %1198 = vector.broadcast %1131 : f32 to vector<8x128xf32>
    %1199 = arith.mulf %1101, %1198 : vector<8x128xf32>
    %1200 = vector.broadcast %1134 : f32 to vector<8x128xf32>
    %1201 = arith.mulf %1106, %1200 : vector<8x128xf32>
    %1202 = arith.addf %1199, %1201 : vector<8x128xf32>
    %1203 = vector.broadcast %1137 : f32 to vector<8x128xf32>
    %1204 = arith.mulf %1111, %1203 : vector<8x128xf32>
    %1205 = arith.addf %1202, %1204 : vector<8x128xf32>
    %1206 = vector.broadcast %1132 : f32 to vector<8x128xf32>
    %1207 = arith.mulf %1101, %1206 : vector<8x128xf32>
    %1208 = vector.broadcast %1135 : f32 to vector<8x128xf32>
    %1209 = arith.mulf %1106, %1208 : vector<8x128xf32>
    %1210 = arith.addf %1207, %1209 : vector<8x128xf32>
    %1211 = vector.broadcast %1138 : f32 to vector<8x128xf32>
    %1212 = arith.mulf %1111, %1211 : vector<8x128xf32>
    %1213 = arith.addf %1210, %1212 : vector<8x128xf32>
    %1214 = vector.broadcast %1139 : f32 to vector<8x128xf32>
    %1215 = arith.mulf %1071, %1214 : vector<8x128xf32>
    %1216 = vector.broadcast %1140 : f32 to vector<8x128xf32>
    %1217 = arith.mulf %1076, %1216 : vector<8x128xf32>
    %1218 = arith.addf %1215, %1217 : vector<8x128xf32>
    %1219 = vector.broadcast %1141 : f32 to vector<8x128xf32>
    %1220 = arith.mulf %1081, %1219 : vector<8x128xf32>
    %1221 = arith.addf %1218, %1220 : vector<8x128xf32>
    %1222 = arith.addf %1221, %1117 : vector<8x128xf32>
    %1223 = vector.broadcast %1139 : f32 to vector<8x128xf32>
    %1224 = arith.mulf %1086, %1223 : vector<8x128xf32>
    %1225 = vector.broadcast %1140 : f32 to vector<8x128xf32>
    %1226 = arith.mulf %1091, %1225 : vector<8x128xf32>
    %1227 = arith.addf %1224, %1226 : vector<8x128xf32>
    %1228 = vector.broadcast %1141 : f32 to vector<8x128xf32>
    %1229 = arith.mulf %1096, %1228 : vector<8x128xf32>
    %1230 = arith.addf %1227, %1229 : vector<8x128xf32>
    %1231 = arith.addf %1230, %1123 : vector<8x128xf32>
    %1232 = vector.broadcast %1139 : f32 to vector<8x128xf32>
    %1233 = arith.mulf %1101, %1232 : vector<8x128xf32>
    %1234 = vector.broadcast %1140 : f32 to vector<8x128xf32>
    %1235 = arith.mulf %1106, %1234 : vector<8x128xf32>
    %1236 = arith.addf %1233, %1235 : vector<8x128xf32>
    %1237 = vector.broadcast %1141 : f32 to vector<8x128xf32>
    %1238 = arith.mulf %1111, %1237 : vector<8x128xf32>
    %1239 = arith.addf %1236, %1238 : vector<8x128xf32>
    %1240 = arith.addf %1239, %1129 : vector<8x128xf32>
    %c0_183 = arith.constant 0 : index
    %c0_184 = arith.constant 0 : index
    %c0_185 = arith.constant 0 : index
    %1241 = vector.load %arg5[%c0_183, %c0_184, %c0_185] : memref<32x8x128xf32, #tpu.memory_space<vmem>>, vector<1x8x128xf32>
    %1242 = vector.shape_cast %1241 : vector<1x8x128xf32> to vector<8x128xf32>
    %1243 = vector.shape_cast %1149 : vector<8x128xf32> to vector<1x8x128xf32>
    tpu.vector_store %arg5[%c0_183, %c0_184, %c0_185], %1243 {strides = array<i32>} : memref<32x8x128xf32, #tpu.memory_space<vmem>>, vector<1x8x128xf32>,
    %c1_186 = arith.constant 1 : index
    %c0_187 = arith.constant 0 : index
    %c0_188 = arith.constant 0 : index
    %1244 = vector.load %arg5[%c1_186, %c0_187, %c0_188] : memref<32x8x128xf32, #tpu.memory_space<vmem>>, vector<1x8x128xf32>
    %1245 = vector.shape_cast %1244 : vector<1x8x128xf32> to vector<8x128xf32>
    %1246 = vector.shape_cast %1157 : vector<8x128xf32> to vector<1x8x128xf32>
    tpu.vector_store %arg5[%c1_186, %c0_187, %c0_188], %1246 {strides = array<i32>} : memref<32x8x128xf32, #tpu.memory_space<vmem>>, vector<1x8x128xf32>,
    %c2_189 = arith.constant 2 : index
    %c0_190 = arith.constant 0 : index
    %c0_191 = arith.constant 0 : index
    %1247 = vector.load %arg5[%c2_189, %c0_190, %c0_191] : memref<32x8x128xf32, #tpu.memory_space<vmem>>, vector<1x8x128xf32>
    %1248 = vector.shape_cast %1247 : vector<1x8x128xf32> to vector<8x128xf32>
    %1249 = vector.shape_cast %1165 : vector<8x128xf32> to vector<1x8x128xf32>
    tpu.vector_store %arg5[%c2_189, %c0_190, %c0_191], %1249 {strides = array<i32>} : memref<32x8x128xf32, #tpu.memory_space<vmem>>, vector<1x8x128xf32>,
    %c3_192 = arith.constant 3 : index
    %c0_193 = arith.constant 0 : index
    %c0_194 = arith.constant 0 : index
    %1250 = vector.load %arg5[%c3_192, %c0_193, %c0_194] : memref<32x8x128xf32, #tpu.memory_space<vmem>>, vector<1x8x128xf32>
    %1251 = vector.shape_cast %1250 : vector<1x8x128xf32> to vector<8x128xf32>
    %1252 = vector.shape_cast %1222 : vector<8x128xf32> to vector<1x8x128xf32>
    tpu.vector_store %arg5[%c3_192, %c0_193, %c0_194], %1252 {strides = array<i32>} : memref<32x8x128xf32, #tpu.memory_space<vmem>>, vector<1x8x128xf32>,
    %c4_195 = arith.constant 4 : index
    %c0_196 = arith.constant 0 : index
    %c0_197 = arith.constant 0 : index
    %1253 = vector.load %arg5[%c4_195, %c0_196, %c0_197] : memref<32x8x128xf32, #tpu.memory_space<vmem>>, vector<1x8x128xf32>
    %1254 = vector.shape_cast %1253 : vector<1x8x128xf32> to vector<8x128xf32>
    %1255 = vector.shape_cast %1173 : vector<8x128xf32> to vector<1x8x128xf32>
    tpu.vector_store %arg5[%c4_195, %c0_196, %c0_197], %1255 {strides = array<i32>} : memref<32x8x128xf32, #tpu.memory_space<vmem>>, vector<1x8x128xf32>,
    %c5_198 = arith.constant 5 : index
    %c0_199 = arith.constant 0 : index
    %c0_200 = arith.constant 0 : index
    %1256 = vector.load %arg5[%c5_198, %c0_199, %c0_200] : memref<32x8x128xf32, #tpu.memory_space<vmem>>, vector<1x8x128xf32>
    %1257 = vector.shape_cast %1256 : vector<1x8x128xf32> to vector<8x128xf32>
    %1258 = vector.shape_cast %1181 : vector<8x128xf32> to vector<1x8x128xf32>
    tpu.vector_store %arg5[%c5_198, %c0_199, %c0_200], %1258 {strides = array<i32>} : memref<32x8x128xf32, #tpu.memory_space<vmem>>, vector<1x8x128xf32>,
    %c6_201 = arith.constant 6 : index
    %c0_202 = arith.constant 0 : index
    %c0_203 = arith.constant 0 : index
    %1259 = vector.load %arg5[%c6_201, %c0_202, %c0_203] : memref<32x8x128xf32, #tpu.memory_space<vmem>>, vector<1x8x128xf32>
    %1260 = vector.shape_cast %1259 : vector<1x8x128xf32> to vector<8x128xf32>
    %1261 = vector.shape_cast %1189 : vector<8x128xf32> to vector<1x8x128xf32>
    tpu.vector_store %arg5[%c6_201, %c0_202, %c0_203], %1261 {strides = array<i32>} : memref<32x8x128xf32, #tpu.memory_space<vmem>>, vector<1x8x128xf32>,
    %c7_204 = arith.constant 7 : index
    %c0_205 = arith.constant 0 : index
    %c0_206 = arith.constant 0 : index
    %1262 = vector.load %arg5[%c7_204, %c0_205, %c0_206] : memref<32x8x128xf32, #tpu.memory_space<vmem>>, vector<1x8x128xf32>
    %1263 = vector.shape_cast %1262 : vector<1x8x128xf32> to vector<8x128xf32>
    %1264 = vector.shape_cast %1231 : vector<8x128xf32> to vector<1x8x128xf32>
    tpu.vector_store %arg5[%c7_204, %c0_205, %c0_206], %1264 {strides = array<i32>} : memref<32x8x128xf32, #tpu.memory_space<vmem>>, vector<1x8x128xf32>,
    %c8_207 = arith.constant 8 : index
    %c0_208 = arith.constant 0 : index
    %c0_209 = arith.constant 0 : index
    %1265 = vector.load %arg5[%c8_207, %c0_208, %c0_209] : memref<32x8x128xf32, #tpu.memory_space<vmem>>, vector<1x8x128xf32>
    %1266 = vector.shape_cast %1265 : vector<1x8x128xf32> to vector<8x128xf32>
    %1267 = vector.shape_cast %1197 : vector<8x128xf32> to vector<1x8x128xf32>
    tpu.vector_store %arg5[%c8_207, %c0_208, %c0_209], %1267 {strides = array<i32>} : memref<32x8x128xf32, #tpu.memory_space<vmem>>, vector<1x8x128xf32>,
    %c9_210 = arith.constant 9 : index
    %c0_211 = arith.constant 0 : index
    %c0_212 = arith.constant 0 : index
    %1268 = vector.load %arg5[%c9_210, %c0_211, %c0_212] : memref<32x8x128xf32, #tpu.memory_space<vmem>>, vector<1x8x128xf32>
    %1269 = vector.shape_cast %1268 : vector<1x8x128xf32> to vector<8x128xf32>
    %1270 = vector.shape_cast %1205 : vector<8x128xf32> to vector<1x8x128xf32>
    tpu.vector_store %arg5[%c9_210, %c0_211, %c0_212], %1270 {strides = array<i32>} : memref<32x8x128xf32, #tpu.memory_space<vmem>>, vector<1x8x128xf32>,
    %c10_213 = arith.constant 10 : index
    %c0_214 = arith.constant 0 : index
    %c0_215 = arith.constant 0 : index
    %1271 = vector.load %arg5[%c10_213, %c0_214, %c0_215] : memref<32x8x128xf32, #tpu.memory_space<vmem>>, vector<1x8x128xf32>
    %1272 = vector.shape_cast %1271 : vector<1x8x128xf32> to vector<8x128xf32>
    %1273 = vector.shape_cast %1213 : vector<8x128xf32> to vector<1x8x128xf32>
    tpu.vector_store %arg5[%c10_213, %c0_214, %c0_215], %1273 {strides = array<i32>} : memref<32x8x128xf32, #tpu.memory_space<vmem>>, vector<1x8x128xf32>,
    %c11_216 = arith.constant 11 : index
    %c0_217 = arith.constant 0 : index
    %c0_218 = arith.constant 0 : index
    %1274 = vector.load %arg5[%c11_216, %c0_217, %c0_218] : memref<32x8x128xf32, #tpu.memory_space<vmem>>, vector<1x8x128xf32>
    %1275 = vector.shape_cast %1274 : vector<1x8x128xf32> to vector<8x128xf32>
    %1276 = vector.shape_cast %1240 : vector<8x128xf32> to vector<1x8x128xf32>
    tpu.vector_store %arg5[%c11_216, %c0_217, %c0_218], %1276 {strides = array<i32>} : memref<32x8x128xf32, #tpu.memory_space<vmem>>, vector<1x8x128xf32>,
    %c12_219 = arith.constant 12 : index
    %c0_220 = arith.constant 0 : index
    %c0_221 = arith.constant 0 : index
    %1277 = vector.load %arg5[%c12_219, %c0_220, %c0_221] : memref<32x8x128xf32, #tpu.memory_space<vmem>>, vector<1x8x128xf32>
    %1278 = vector.shape_cast %1277 : vector<1x8x128xf32> to vector<8x128xf32>
    %1279 = vector.shape_cast %1 : vector<8x128xf32> to vector<1x8x128xf32>
    tpu.vector_store %arg5[%c12_219, %c0_220, %c0_221], %1279 {strides = array<i32>} : memref<32x8x128xf32, #tpu.memory_space<vmem>>, vector<1x8x128xf32>,
    %c13_222 = arith.constant 13 : index
    %c0_223 = arith.constant 0 : index
    %c0_224 = arith.constant 0 : index
    %1280 = vector.load %arg5[%c13_222, %c0_223, %c0_224] : memref<32x8x128xf32, #tpu.memory_space<vmem>>, vector<1x8x128xf32>
    %1281 = vector.shape_cast %1280 : vector<1x8x128xf32> to vector<8x128xf32>
    %1282 = vector.shape_cast %1 : vector<8x128xf32> to vector<1x8x128xf32>
    tpu.vector_store %arg5[%c13_222, %c0_223, %c0_224], %1282 {strides = array<i32>} : memref<32x8x128xf32, #tpu.memory_space<vmem>>, vector<1x8x128xf32>,
    %c14_225 = arith.constant 14 : index
    %c0_226 = arith.constant 0 : index
    %c0_227 = arith.constant 0 : index
    %1283 = vector.load %arg5[%c14_225, %c0_226, %c0_227] : memref<32x8x128xf32, #tpu.memory_space<vmem>>, vector<1x8x128xf32>
    %1284 = vector.shape_cast %1283 : vector<1x8x128xf32> to vector<8x128xf32>
    %1285 = vector.shape_cast %1 : vector<8x128xf32> to vector<1x8x128xf32>
    tpu.vector_store %arg5[%c14_225, %c0_226, %c0_227], %1285 {strides = array<i32>} : memref<32x8x128xf32, #tpu.memory_space<vmem>>, vector<1x8x128xf32>,
    %c15_228 = arith.constant 15 : index
    %c0_229 = arith.constant 0 : index
    %c0_230 = arith.constant 0 : index
    %1286 = vector.load %arg5[%c15_228, %c0_229, %c0_230] : memref<32x8x128xf32, #tpu.memory_space<vmem>>, vector<1x8x128xf32>
    %1287 = vector.shape_cast %1286 : vector<1x8x128xf32> to vector<8x128xf32>
    %1288 = vector.shape_cast %0 : vector<8x128xf32> to vector<1x8x128xf32>
    tpu.vector_store %arg5[%c15_228, %c0_229, %c0_230], %1288 {strides = array<i32>} : memref<32x8x128xf32, #tpu.memory_space<vmem>>, vector<1x8x128xf32>,
    %c4_231 = arith.constant 4 : index
    %c0_232 = arith.constant 0 : index
    %c0_233 = arith.constant 0 : index
    %1289 = vector.load %arg1[%c4_231, %c0_232, %c0_233] : memref<6x8x128xf32, #tpu.memory_space<vmem>>, vector<1x8x128xf32>
    %1290 = vector.shape_cast %1289 : vector<1x8x128xf32> to vector<8x128xf32>
    %c5_234 = arith.constant 5 : index
    %c0_235 = arith.constant 0 : index
    %c0_236 = arith.constant 0 : index
    %1291 = vector.load %arg1[%c5_234, %c0_235, %c0_236] : memref<6x8x128xf32, #tpu.memory_space<vmem>>, vector<1x8x128xf32>
    %1292 = vector.shape_cast %1291 : vector<1x8x128xf32> to vector<8x128xf32>
    %c24_237 = arith.constant 24 : index
    %1293 = memref.load %arg2[%c24_237] : memref<36xf32, #tpu.memory_space<smem>>
    %c25_238 = arith.constant 25 : index
    %1294 = memref.load %arg2[%c25_238] : memref<36xf32, #tpu.memory_space<smem>>
    %c26_239 = arith.constant 26 : index
    %1295 = memref.load %arg2[%c26_239] : memref<36xf32, #tpu.memory_space<smem>>
    %c27_240 = arith.constant 27 : index
    %1296 = memref.load %arg2[%c27_240] : memref<36xf32, #tpu.memory_space<smem>>
    %c28 = arith.constant 28 : index
    %1297 = memref.load %arg2[%c28] : memref<36xf32, #tpu.memory_space<smem>>
    %c29 = arith.constant 29 : index
    %1298 = memref.load %arg2[%c29] : memref<36xf32, #tpu.memory_space<smem>>
    %c30 = arith.constant 30 : index
    %1299 = memref.load %arg2[%c30] : memref<36xf32, #tpu.memory_space<smem>>
    %c31 = arith.constant 31 : index
    %1300 = memref.load %arg2[%c31] : memref<36xf32, #tpu.memory_space<smem>>
    %c32 = arith.constant 32 : index
    %1301 = memref.load %arg2[%c32] : memref<36xf32, #tpu.memory_space<smem>>
    %c33 = arith.constant 33 : index
    %1302 = memref.load %arg2[%c33] : memref<36xf32, #tpu.memory_space<smem>>
    %c34 = arith.constant 34 : index
    %1303 = memref.load %arg2[%c34] : memref<36xf32, #tpu.memory_space<smem>>
    %c35 = arith.constant 35 : index
    %1304 = memref.load %arg2[%c35] : memref<36xf32, #tpu.memory_space<smem>>
    %c24_241 = arith.constant 24 : index
    %1305 = memref.load %arg3[%c24_241] : memref<36xf32, #tpu.memory_space<smem>>
    %c25_242 = arith.constant 25 : index
    %1306 = memref.load %arg3[%c25_242] : memref<36xf32, #tpu.memory_space<smem>>
    %c26_243 = arith.constant 26 : index
    %1307 = memref.load %arg3[%c26_243] : memref<36xf32, #tpu.memory_space<smem>>
    %c27_244 = arith.constant 27 : index
    %1308 = memref.load %arg3[%c27_244] : memref<36xf32, #tpu.memory_space<smem>>
    %c28_245 = arith.constant 28 : index
    %1309 = memref.load %arg3[%c28_245] : memref<36xf32, #tpu.memory_space<smem>>
    %c29_246 = arith.constant 29 : index
    %1310 = memref.load %arg3[%c29_246] : memref<36xf32, #tpu.memory_space<smem>>
    %c30_247 = arith.constant 30 : index
    %1311 = memref.load %arg3[%c30_247] : memref<36xf32, #tpu.memory_space<smem>>
    %c31_248 = arith.constant 31 : index
    %1312 = memref.load %arg3[%c31_248] : memref<36xf32, #tpu.memory_space<smem>>
    %c32_249 = arith.constant 32 : index
    %1313 = memref.load %arg3[%c32_249] : memref<36xf32, #tpu.memory_space<smem>>
    %c33_250 = arith.constant 33 : index
    %1314 = memref.load %arg3[%c33_250] : memref<36xf32, #tpu.memory_space<smem>>
    %c34_251 = arith.constant 34 : index
    %1315 = memref.load %arg3[%c34_251] : memref<36xf32, #tpu.memory_space<smem>>
    %c35_252 = arith.constant 35 : index
    %1316 = memref.load %arg3[%c35_252] : memref<36xf32, #tpu.memory_space<smem>>
    %1317 = vector.broadcast %1293 : f32 to vector<8x128xf32>
    %1318 = arith.mulf %1071, %1317 : vector<8x128xf32>
    %1319 = vector.broadcast %1294 : f32 to vector<8x128xf32>
    %1320 = arith.mulf %1086, %1319 : vector<8x128xf32>
    %1321 = arith.addf %1318, %1320 : vector<8x128xf32>
    %1322 = vector.broadcast %1295 : f32 to vector<8x128xf32>
    %1323 = arith.mulf %1101, %1322 : vector<8x128xf32>
    %1324 = arith.addf %1321, %1323 : vector<8x128xf32>
    %1325 = vector.broadcast %1293 : f32 to vector<8x128xf32>
    %1326 = arith.mulf %1076, %1325 : vector<8x128xf32>
    %1327 = vector.broadcast %1294 : f32 to vector<8x128xf32>
    %1328 = arith.mulf %1091, %1327 : vector<8x128xf32>
    %1329 = arith.addf %1326, %1328 : vector<8x128xf32>
    %1330 = vector.broadcast %1295 : f32 to vector<8x128xf32>
    %1331 = arith.mulf %1106, %1330 : vector<8x128xf32>
    %1332 = arith.addf %1329, %1331 : vector<8x128xf32>
    %1333 = vector.broadcast %1293 : f32 to vector<8x128xf32>
    %1334 = arith.mulf %1081, %1333 : vector<8x128xf32>
    %1335 = vector.broadcast %1294 : f32 to vector<8x128xf32>
    %1336 = arith.mulf %1096, %1335 : vector<8x128xf32>
    %1337 = arith.addf %1334, %1336 : vector<8x128xf32>
    %1338 = vector.broadcast %1295 : f32 to vector<8x128xf32>
    %1339 = arith.mulf %1111, %1338 : vector<8x128xf32>
    %1340 = arith.addf %1337, %1339 : vector<8x128xf32>
    %1341 = vector.broadcast %1295 : f32 to vector<8x128xf32>
    %1342 = arith.mulf %1123, %1341 : vector<8x128xf32>
    %1343 = vector.broadcast %1294 : f32 to vector<8x128xf32>
    %1344 = arith.mulf %1129, %1343 : vector<8x128xf32>
    %1345 = arith.subf %1342, %1344 : vector<8x128xf32>
    %1346 = vector.broadcast %1293 : f32 to vector<8x128xf32>
    %1347 = arith.mulf %1129, %1346 : vector<8x128xf32>
    %1348 = vector.broadcast %1295 : f32 to vector<8x128xf32>
    %1349 = arith.mulf %1117, %1348 : vector<8x128xf32>
    %1350 = arith.subf %1347, %1349 : vector<8x128xf32>
    %1351 = vector.broadcast %1294 : f32 to vector<8x128xf32>
    %1352 = arith.mulf %1117, %1351 : vector<8x128xf32>
    %1353 = vector.broadcast %1293 : f32 to vector<8x128xf32>
    %1354 = arith.mulf %1123, %1353 : vector<8x128xf32>
    %1355 = arith.subf %1352, %1354 : vector<8x128xf32>
    %1356 = vector.broadcast %1296 : f32 to vector<8x128xf32>
    %1357 = arith.subf %1356, %1345 : vector<8x128xf32>
    %1358 = vector.broadcast %1297 : f32 to vector<8x128xf32>
    %1359 = arith.subf %1358, %1350 : vector<8x128xf32>
    %1360 = vector.broadcast %1298 : f32 to vector<8x128xf32>
    %1361 = arith.subf %1360, %1355 : vector<8x128xf32>
    %1362 = arith.mulf %1071, %1357 : vector<8x128xf32>
    %1363 = arith.mulf %1086, %1359 : vector<8x128xf32>
    %1364 = arith.addf %1362, %1363 : vector<8x128xf32>
    %1365 = arith.mulf %1101, %1361 : vector<8x128xf32>
    %1366 = arith.addf %1364, %1365 : vector<8x128xf32>
    %1367 = arith.mulf %1076, %1357 : vector<8x128xf32>
    %1368 = arith.mulf %1091, %1359 : vector<8x128xf32>
    %1369 = arith.addf %1367, %1368 : vector<8x128xf32>
    %1370 = arith.mulf %1106, %1361 : vector<8x128xf32>
    %1371 = arith.addf %1369, %1370 : vector<8x128xf32>
    %1372 = arith.mulf %1081, %1357 : vector<8x128xf32>
    %1373 = arith.mulf %1096, %1359 : vector<8x128xf32>
    %1374 = arith.addf %1372, %1373 : vector<8x128xf32>
    %1375 = arith.mulf %1111, %1361 : vector<8x128xf32>
    %1376 = arith.addf %1374, %1375 : vector<8x128xf32>
    %c12_253 = arith.constant 12 : index
    %c0_254 = arith.constant 0 : index
    %c0_255 = arith.constant 0 : index
    %1377 = vector.load %arg6[%c12_253, %c0_254, %c0_255] : memref<18x8x128xf32, #tpu.memory_space<vmem>>, vector<1x8x128xf32>
    %1378 = vector.shape_cast %1377 : vector<1x8x128xf32> to vector<8x128xf32>
    %1379 = vector.shape_cast %1324 : vector<8x128xf32> to vector<1x8x128xf32>
    tpu.vector_store %arg6[%c12_253, %c0_254, %c0_255], %1379 {strides = array<i32>} : memref<18x8x128xf32, #tpu.memory_space<vmem>>, vector<1x8x128xf32>,
    %1380 = arith.mulf %1324, %1366 : vector<8x128xf32>
    %cst_256 = arith.constant 1.000000e+00 : f32
    %1381 = vector.broadcast %cst_256 : f32 to vector<8x128xf32>
    %1382 = arith.subf %1381, %1380 : vector<8x128xf32>
    %1383 = arith.mulf %1382, %1366 : vector<8x128xf32>
    %c15_257 = arith.constant 15 : index
    %c0_258 = arith.constant 0 : index
    %c0_259 = arith.constant 0 : index
    %1384 = vector.load %arg6[%c15_257, %c0_258, %c0_259] : memref<18x8x128xf32, #tpu.memory_space<vmem>>, vector<1x8x128xf32>
    %1385 = vector.shape_cast %1384 : vector<1x8x128xf32> to vector<8x128xf32>
    %1386 = vector.shape_cast %1383 : vector<8x128xf32> to vector<1x8x128xf32>
    tpu.vector_store %arg6[%c15_257, %c0_258, %c0_259], %1386 {strides = array<i32>} : memref<18x8x128xf32, #tpu.memory_space<vmem>>, vector<1x8x128xf32>,
    %c13_260 = arith.constant 13 : index
    %c0_261 = arith.constant 0 : index
    %c0_262 = arith.constant 0 : index
    %1387 = vector.load %arg6[%c13_260, %c0_261, %c0_262] : memref<18x8x128xf32, #tpu.memory_space<vmem>>, vector<1x8x128xf32>
    %1388 = vector.shape_cast %1387 : vector<1x8x128xf32> to vector<8x128xf32>
    %1389 = vector.shape_cast %1332 : vector<8x128xf32> to vector<1x8x128xf32>
    tpu.vector_store %arg6[%c13_260, %c0_261, %c0_262], %1389 {strides = array<i32>} : memref<18x8x128xf32, #tpu.memory_space<vmem>>, vector<1x8x128xf32>,
    %1390 = arith.mulf %1332, %1371 : vector<8x128xf32>
    %cst_263 = arith.constant 1.000000e+00 : f32
    %1391 = vector.broadcast %cst_263 : f32 to vector<8x128xf32>
    %1392 = arith.subf %1391, %1390 : vector<8x128xf32>
    %1393 = arith.mulf %1392, %1371 : vector<8x128xf32>
    %c16_264 = arith.constant 16 : index
    %c0_265 = arith.constant 0 : index
    %c0_266 = arith.constant 0 : index
    %1394 = vector.load %arg6[%c16_264, %c0_265, %c0_266] : memref<18x8x128xf32, #tpu.memory_space<vmem>>, vector<1x8x128xf32>
    %1395 = vector.shape_cast %1394 : vector<1x8x128xf32> to vector<8x128xf32>
    %1396 = vector.shape_cast %1393 : vector<8x128xf32> to vector<1x8x128xf32>
    tpu.vector_store %arg6[%c16_264, %c0_265, %c0_266], %1396 {strides = array<i32>} : memref<18x8x128xf32, #tpu.memory_space<vmem>>, vector<1x8x128xf32>,
    %c14_267 = arith.constant 14 : index
    %c0_268 = arith.constant 0 : index
    %c0_269 = arith.constant 0 : index
    %1397 = vector.load %arg6[%c14_267, %c0_268, %c0_269] : memref<18x8x128xf32, #tpu.memory_space<vmem>>, vector<1x8x128xf32>
    %1398 = vector.shape_cast %1397 : vector<1x8x128xf32> to vector<8x128xf32>
    %1399 = vector.shape_cast %1340 : vector<8x128xf32> to vector<1x8x128xf32>
    tpu.vector_store %arg6[%c14_267, %c0_268, %c0_269], %1399 {strides = array<i32>} : memref<18x8x128xf32, #tpu.memory_space<vmem>>, vector<1x8x128xf32>,
    %1400 = arith.mulf %1340, %1376 : vector<8x128xf32>
    %cst_270 = arith.constant 1.000000e+00 : f32
    %1401 = vector.broadcast %cst_270 : f32 to vector<8x128xf32>
    %1402 = arith.subf %1401, %1400 : vector<8x128xf32>
    %1403 = arith.mulf %1402, %1376 : vector<8x128xf32>
    %c17_271 = arith.constant 17 : index
    %c0_272 = arith.constant 0 : index
    %c0_273 = arith.constant 0 : index
    %1404 = vector.load %arg6[%c17_271, %c0_272, %c0_273] : memref<18x8x128xf32, #tpu.memory_space<vmem>>, vector<1x8x128xf32>
    %1405 = vector.shape_cast %1404 : vector<1x8x128xf32> to vector<8x128xf32>
    %1406 = vector.shape_cast %1403 : vector<8x128xf32> to vector<1x8x128xf32>
    tpu.vector_store %arg6[%c17_271, %c0_272, %c0_273], %1406 {strides = array<i32>} : memref<18x8x128xf32, #tpu.memory_space<vmem>>, vector<1x8x128xf32>,
    %1407 = vector.broadcast %1299 : f32 to vector<8x128xf32>
    %1408 = arith.mulf %1407, %1290 : vector<8x128xf32>
    %1409 = math.sin %1408 : vector<8x128xf32>
    %1410 = math.cos %1408 : vector<8x128xf32>
    %1411 = arith.mulf %1290, %1290 : vector<8x128xf32>
    %1412 = vector.broadcast %1300 : f32 to vector<8x128xf32>
    %1413 = arith.mulf %1409, %1412 : vector<8x128xf32>
    %1414 = vector.broadcast %1304 : f32 to vector<8x128xf32>
    %1415 = arith.mulf %1414, %1290 : vector<8x128xf32>
    %1416 = arith.addf %1413, %1415 : vector<8x128xf32>
    %cst_274 = arith.constant 1.000000e+00 : f32
    %1417 = vector.broadcast %cst_274 : f32 to vector<8x128xf32>
    %1418 = arith.subf %1417, %1410 : vector<8x128xf32>
    %1419 = vector.broadcast %1301 : f32 to vector<8x128xf32>
    %1420 = arith.mulf %1418, %1419 : vector<8x128xf32>
    %cst_275 = arith.constant 5.000000e-01 : f32
    %1421 = vector.broadcast %cst_275 : f32 to vector<8x128xf32>
    %1422 = arith.mulf %1421, %1411 : vector<8x128xf32>
    %1423 = vector.broadcast %1304 : f32 to vector<8x128xf32>
    %1424 = arith.mulf %1423, %1422 : vector<8x128xf32>
    %1425 = arith.addf %1420, %1424 : vector<8x128xf32>
    %1426 = arith.subf %1408, %1409 : vector<8x128xf32>
    %1427 = vector.broadcast %1302 : f32 to vector<8x128xf32>
    %1428 = arith.mulf %1426, %1427 : vector<8x128xf32>
    %1429 = arith.mulf %1411, %1290 : vector<8x128xf32>
    %cst_276 = arith.constant 0.166666672 : f32
    %1430 = vector.broadcast %cst_276 : f32 to vector<8x128xf32>
    %1431 = arith.mulf %1429, %1430 : vector<8x128xf32>
    %1432 = vector.broadcast %1304 : f32 to vector<8x128xf32>
    %1433 = arith.mulf %1432, %1431 : vector<8x128xf32>
    %1434 = arith.addf %1428, %1433 : vector<8x128xf32>
    %cst_277 = arith.constant 0.000000e+00 : f32
    %1435 = arith.subf %cst_277, %1295 : f32
    %cst_278 = arith.constant 0.000000e+00 : f32
    %1436 = arith.subf %cst_278, %1293 : f32
    %cst_279 = arith.constant 0.000000e+00 : f32
    %1437 = arith.subf %cst_279, %1294 : f32
    %1438 = arith.mulf %1293, %1293 : f32
    %1439 = arith.subf %1438, %1303 : f32
    %1440 = arith.mulf %1293, %1294 : f32
    %cst_280 = arith.constant 0.000000e+00 : f32
    %1441 = arith.subf %1440, %cst_280 : f32
    %1442 = arith.mulf %1293, %1295 : f32
    %cst_281 = arith.constant 0.000000e+00 : f32
    %1443 = arith.subf %1442, %cst_281 : f32
    %1444 = arith.mulf %1294, %1293 : f32
    %cst_282 = arith.constant 0.000000e+00 : f32
    %1445 = arith.subf %1444, %cst_282 : f32
    %1446 = arith.mulf %1294, %1294 : f32
    %1447 = arith.subf %1446, %1303 : f32
    %1448 = arith.mulf %1294, %1295 : f32
    %cst_283 = arith.constant 0.000000e+00 : f32
    %1449 = arith.subf %1448, %cst_283 : f32
    %1450 = arith.mulf %1295, %1293 : f32
    %cst_284 = arith.constant 0.000000e+00 : f32
    %1451 = arith.subf %1450, %cst_284 : f32
    %1452 = arith.mulf %1295, %1294 : f32
    %cst_285 = arith.constant 0.000000e+00 : f32
    %1453 = arith.subf %1452, %cst_285 : f32
    %1454 = arith.mulf %1295, %1295 : f32
    %1455 = arith.subf %1454, %1303 : f32
    %1456 = arith.mulf %1294, %1298 : f32
    %1457 = arith.mulf %1295, %1297 : f32
    %1458 = arith.subf %1456, %1457 : f32
    %1459 = arith.mulf %1295, %1296 : f32
    %1460 = arith.mulf %1293, %1298 : f32
    %1461 = arith.subf %1459, %1460 : f32
    %1462 = arith.mulf %1293, %1297 : f32
    %1463 = arith.mulf %1294, %1296 : f32
    %1464 = arith.subf %1462, %1463 : f32
    %1465 = arith.mulf %1294, %1464 : f32
    %1466 = arith.mulf %1295, %1461 : f32
    %1467 = arith.subf %1465, %1466 : f32
    %1468 = arith.mulf %1295, %1458 : f32
    %1469 = arith.mulf %1293, %1464 : f32
    %1470 = arith.subf %1468, %1469 : f32
    %1471 = arith.mulf %1293, %1461 : f32
    %1472 = arith.mulf %1294, %1458 : f32
    %1473 = arith.subf %1471, %1472 : f32
    %1474 = vector.broadcast %1439 : f32 to vector<8x128xf32>
    %1475 = arith.mulf %1425, %1474 : vector<8x128xf32>
    %cst_286 = arith.constant 1.000000e+00 : f32
    %1476 = vector.broadcast %cst_286 : f32 to vector<8x128xf32>
    %1477 = arith.addf %1476, %1475 : vector<8x128xf32>
    %1478 = vector.broadcast %1435 : f32 to vector<8x128xf32>
    %1479 = arith.mulf %1416, %1478 : vector<8x128xf32>
    %1480 = vector.broadcast %1441 : f32 to vector<8x128xf32>
    %1481 = arith.mulf %1425, %1480 : vector<8x128xf32>
    %1482 = arith.addf %1479, %1481 : vector<8x128xf32>
    %1483 = vector.broadcast %1294 : f32 to vector<8x128xf32>
    %1484 = arith.mulf %1416, %1483 : vector<8x128xf32>
    %1485 = vector.broadcast %1443 : f32 to vector<8x128xf32>
    %1486 = arith.mulf %1425, %1485 : vector<8x128xf32>
    %1487 = arith.addf %1484, %1486 : vector<8x128xf32>
    %1488 = vector.broadcast %1295 : f32 to vector<8x128xf32>
    %1489 = arith.mulf %1416, %1488 : vector<8x128xf32>
    %1490 = vector.broadcast %1445 : f32 to vector<8x128xf32>
    %1491 = arith.mulf %1425, %1490 : vector<8x128xf32>
    %1492 = arith.addf %1489, %1491 : vector<8x128xf32>
    %1493 = vector.broadcast %1447 : f32 to vector<8x128xf32>
    %1494 = arith.mulf %1425, %1493 : vector<8x128xf32>
    %cst_287 = arith.constant 1.000000e+00 : f32
    %1495 = vector.broadcast %cst_287 : f32 to vector<8x128xf32>
    %1496 = arith.addf %1495, %1494 : vector<8x128xf32>
    %1497 = vector.broadcast %1436 : f32 to vector<8x128xf32>
    %1498 = arith.mulf %1416, %1497 : vector<8x128xf32>
    %1499 = vector.broadcast %1449 : f32 to vector<8x128xf32>
    %1500 = arith.mulf %1425, %1499 : vector<8x128xf32>
    %1501 = arith.addf %1498, %1500 : vector<8x128xf32>
    %1502 = vector.broadcast %1437 : f32 to vector<8x128xf32>
    %1503 = arith.mulf %1416, %1502 : vector<8x128xf32>
    %1504 = vector.broadcast %1451 : f32 to vector<8x128xf32>
    %1505 = arith.mulf %1425, %1504 : vector<8x128xf32>
    %1506 = arith.addf %1503, %1505 : vector<8x128xf32>
    %1507 = vector.broadcast %1293 : f32 to vector<8x128xf32>
    %1508 = arith.mulf %1416, %1507 : vector<8x128xf32>
    %1509 = vector.broadcast %1453 : f32 to vector<8x128xf32>
    %1510 = arith.mulf %1425, %1509 : vector<8x128xf32>
    %1511 = arith.addf %1508, %1510 : vector<8x128xf32>
    %1512 = vector.broadcast %1455 : f32 to vector<8x128xf32>
    %1513 = arith.mulf %1425, %1512 : vector<8x128xf32>
    %cst_288 = arith.constant 1.000000e+00 : f32
    %1514 = vector.broadcast %cst_288 : f32 to vector<8x128xf32>
    %1515 = arith.addf %1514, %1513 : vector<8x128xf32>
    %1516 = vector.broadcast %1296 : f32 to vector<8x128xf32>
    %1517 = arith.mulf %1290, %1516 : vector<8x128xf32>
    %1518 = vector.broadcast %1458 : f32 to vector<8x128xf32>
    %1519 = arith.mulf %1425, %1518 : vector<8x128xf32>
    %1520 = arith.addf %1517, %1519 : vector<8x128xf32>
    %1521 = vector.broadcast %1467 : f32 to vector<8x128xf32>
    %1522 = arith.mulf %1434, %1521 : vector<8x128xf32>
    %1523 = arith.addf %1520, %1522 : vector<8x128xf32>
    %1524 = vector.broadcast %1297 : f32 to vector<8x128xf32>
    %1525 = arith.mulf %1290, %1524 : vector<8x128xf32>
    %1526 = vector.broadcast %1461 : f32 to vector<8x128xf32>
    %1527 = arith.mulf %1425, %1526 : vector<8x128xf32>
    %1528 = arith.addf %1525, %1527 : vector<8x128xf32>
    %1529 = vector.broadcast %1470 : f32 to vector<8x128xf32>
    %1530 = arith.mulf %1434, %1529 : vector<8x128xf32>
    %1531 = arith.addf %1528, %1530 : vector<8x128xf32>
    %1532 = vector.broadcast %1298 : f32 to vector<8x128xf32>
    %1533 = arith.mulf %1290, %1532 : vector<8x128xf32>
    %1534 = vector.broadcast %1464 : f32 to vector<8x128xf32>
    %1535 = arith.mulf %1425, %1534 : vector<8x128xf32>
    %1536 = arith.addf %1533, %1535 : vector<8x128xf32>
    %1537 = vector.broadcast %1473 : f32 to vector<8x128xf32>
    %1538 = arith.mulf %1434, %1537 : vector<8x128xf32>
    %1539 = arith.addf %1536, %1538 : vector<8x128xf32>
    %1540 = arith.mulf %1071, %1477 : vector<8x128xf32>
    %1541 = arith.mulf %1076, %1492 : vector<8x128xf32>
    %1542 = arith.addf %1540, %1541 : vector<8x128xf32>
    %1543 = arith.mulf %1081, %1506 : vector<8x128xf32>
    %1544 = arith.addf %1542, %1543 : vector<8x128xf32>
    %1545 = arith.mulf %1071, %1482 : vector<8x128xf32>
    %1546 = arith.mulf %1076, %1496 : vector<8x128xf32>
    %1547 = arith.addf %1545, %1546 : vector<8x128xf32>
    %1548 = arith.mulf %1081, %1511 : vector<8x128xf32>
    %1549 = arith.addf %1547, %1548 : vector<8x128xf32>
    %1550 = arith.mulf %1071, %1487 : vector<8x128xf32>
    %1551 = arith.mulf %1076, %1501 : vector<8x128xf32>
    %1552 = arith.addf %1550, %1551 : vector<8x128xf32>
    %1553 = arith.mulf %1081, %1515 : vector<8x128xf32>
    %1554 = arith.addf %1552, %1553 : vector<8x128xf32>
    %1555 = arith.mulf %1086, %1477 : vector<8x128xf32>
    %1556 = arith.mulf %1091, %1492 : vector<8x128xf32>
    %1557 = arith.addf %1555, %1556 : vector<8x128xf32>
    %1558 = arith.mulf %1096, %1506 : vector<8x128xf32>
    %1559 = arith.addf %1557, %1558 : vector<8x128xf32>
    %1560 = arith.mulf %1086, %1482 : vector<8x128xf32>
    %1561 = arith.mulf %1091, %1496 : vector<8x128xf32>
    %1562 = arith.addf %1560, %1561 : vector<8x128xf32>
    %1563 = arith.mulf %1096, %1511 : vector<8x128xf32>
    %1564 = arith.addf %1562, %1563 : vector<8x128xf32>
    %1565 = arith.mulf %1086, %1487 : vector<8x128xf32>
    %1566 = arith.mulf %1091, %1501 : vector<8x128xf32>
    %1567 = arith.addf %1565, %1566 : vector<8x128xf32>
    %1568 = arith.mulf %1096, %1515 : vector<8x128xf32>
    %1569 = arith.addf %1567, %1568 : vector<8x128xf32>
    %1570 = arith.mulf %1101, %1477 : vector<8x128xf32>
    %1571 = arith.mulf %1106, %1492 : vector<8x128xf32>
    %1572 = arith.addf %1570, %1571 : vector<8x128xf32>
    %1573 = arith.mulf %1111, %1506 : vector<8x128xf32>
    %1574 = arith.addf %1572, %1573 : vector<8x128xf32>
    %1575 = arith.mulf %1101, %1482 : vector<8x128xf32>
    %1576 = arith.mulf %1106, %1496 : vector<8x128xf32>
    %1577 = arith.addf %1575, %1576 : vector<8x128xf32>
    %1578 = arith.mulf %1111, %1511 : vector<8x128xf32>
    %1579 = arith.addf %1577, %1578 : vector<8x128xf32>
    %1580 = arith.mulf %1101, %1487 : vector<8x128xf32>
    %1581 = arith.mulf %1106, %1501 : vector<8x128xf32>
    %1582 = arith.addf %1580, %1581 : vector<8x128xf32>
    %1583 = arith.mulf %1111, %1515 : vector<8x128xf32>
    %1584 = arith.addf %1582, %1583 : vector<8x128xf32>
    %1585 = arith.mulf %1071, %1523 : vector<8x128xf32>
    %1586 = arith.mulf %1076, %1531 : vector<8x128xf32>
    %1587 = arith.addf %1585, %1586 : vector<8x128xf32>
    %1588 = arith.mulf %1081, %1539 : vector<8x128xf32>
    %1589 = arith.addf %1587, %1588 : vector<8x128xf32>
    %1590 = arith.addf %1589, %1117 : vector<8x128xf32>
    %1591 = arith.mulf %1086, %1523 : vector<8x128xf32>
    %1592 = arith.mulf %1091, %1531 : vector<8x128xf32>
    %1593 = arith.addf %1591, %1592 : vector<8x128xf32>
    %1594 = arith.mulf %1096, %1539 : vector<8x128xf32>
    %1595 = arith.addf %1593, %1594 : vector<8x128xf32>
    %1596 = arith.addf %1595, %1123 : vector<8x128xf32>
    %1597 = arith.mulf %1101, %1523 : vector<8x128xf32>
    %1598 = arith.mulf %1106, %1531 : vector<8x128xf32>
    %1599 = arith.addf %1597, %1598 : vector<8x128xf32>
    %1600 = arith.mulf %1111, %1539 : vector<8x128xf32>
    %1601 = arith.addf %1599, %1600 : vector<8x128xf32>
    %1602 = arith.addf %1601, %1129 : vector<8x128xf32>
    %1603 = vector.broadcast %1307 : f32 to vector<8x128xf32>
    %1604 = arith.mulf %1596, %1603 : vector<8x128xf32>
    %1605 = vector.broadcast %1306 : f32 to vector<8x128xf32>
    %1606 = arith.mulf %1602, %1605 : vector<8x128xf32>
    %1607 = arith.subf %1604, %1606 : vector<8x128xf32>
    %1608 = vector.broadcast %1305 : f32 to vector<8x128xf32>
    %1609 = arith.mulf %1602, %1608 : vector<8x128xf32>
    %1610 = vector.broadcast %1307 : f32 to vector<8x128xf32>
    %1611 = arith.mulf %1590, %1610 : vector<8x128xf32>
    %1612 = arith.subf %1609, %1611 : vector<8x128xf32>
    %1613 = vector.broadcast %1306 : f32 to vector<8x128xf32>
    %1614 = arith.mulf %1590, %1613 : vector<8x128xf32>
    %1615 = vector.broadcast %1305 : f32 to vector<8x128xf32>
    %1616 = arith.mulf %1596, %1615 : vector<8x128xf32>
    %1617 = arith.subf %1614, %1616 : vector<8x128xf32>
    %1618 = vector.broadcast %1308 : f32 to vector<8x128xf32>
    %1619 = arith.subf %1618, %1607 : vector<8x128xf32>
    %1620 = vector.broadcast %1309 : f32 to vector<8x128xf32>
    %1621 = arith.subf %1620, %1612 : vector<8x128xf32>
    %1622 = vector.broadcast %1310 : f32 to vector<8x128xf32>
    %1623 = arith.subf %1622, %1617 : vector<8x128xf32>
    %1624 = arith.mulf %1544, %1619 : vector<8x128xf32>
    %1625 = arith.mulf %1559, %1621 : vector<8x128xf32>
    %1626 = arith.addf %1624, %1625 : vector<8x128xf32>
    %1627 = arith.mulf %1574, %1623 : vector<8x128xf32>
    %1628 = arith.addf %1626, %1627 : vector<8x128xf32>
    %1629 = arith.mulf %1549, %1619 : vector<8x128xf32>
    %1630 = arith.mulf %1564, %1621 : vector<8x128xf32>
    %1631 = arith.addf %1629, %1630 : vector<8x128xf32>
    %1632 = arith.mulf %1579, %1623 : vector<8x128xf32>
    %1633 = arith.addf %1631, %1632 : vector<8x128xf32>
    %1634 = arith.mulf %1554, %1619 : vector<8x128xf32>
    %1635 = arith.mulf %1569, %1621 : vector<8x128xf32>
    %1636 = arith.addf %1634, %1635 : vector<8x128xf32>
    %1637 = arith.mulf %1584, %1623 : vector<8x128xf32>
    %1638 = arith.addf %1636, %1637 : vector<8x128xf32>
    %c12_289 = arith.constant 12 : index
    %c0_290 = arith.constant 0 : index
    %c0_291 = arith.constant 0 : index
    %1639 = vector.load %arg7[%c12_289, %c0_290, %c0_291] : memref<18x8x128xf32, #tpu.memory_space<vmem>>, vector<1x8x128xf32>
    %1640 = vector.shape_cast %1639 : vector<1x8x128xf32> to vector<8x128xf32>
    %1641 = vector.shape_cast %1 : vector<8x128xf32> to vector<1x8x128xf32>
    tpu.vector_store %arg7[%c12_289, %c0_290, %c0_291], %1641 {strides = array<i32>} : memref<18x8x128xf32, #tpu.memory_space<vmem>>, vector<1x8x128xf32>,
    %c15_292 = arith.constant 15 : index
    %c0_293 = arith.constant 0 : index
    %c0_294 = arith.constant 0 : index
    %1642 = vector.load %arg7[%c15_292, %c0_293, %c0_294] : memref<18x8x128xf32, #tpu.memory_space<vmem>>, vector<1x8x128xf32>
    %1643 = vector.shape_cast %1642 : vector<1x8x128xf32> to vector<8x128xf32>
    %1644 = vector.shape_cast %1628 : vector<8x128xf32> to vector<1x8x128xf32>
    tpu.vector_store %arg7[%c15_292, %c0_293, %c0_294], %1644 {strides = array<i32>} : memref<18x8x128xf32, #tpu.memory_space<vmem>>, vector<1x8x128xf32>,
    %c13_295 = arith.constant 13 : index
    %c0_296 = arith.constant 0 : index
    %c0_297 = arith.constant 0 : index
    %1645 = vector.load %arg7[%c13_295, %c0_296, %c0_297] : memref<18x8x128xf32, #tpu.memory_space<vmem>>, vector<1x8x128xf32>
    %1646 = vector.shape_cast %1645 : vector<1x8x128xf32> to vector<8x128xf32>
    %1647 = vector.shape_cast %1 : vector<8x128xf32> to vector<1x8x128xf32>
    tpu.vector_store %arg7[%c13_295, %c0_296, %c0_297], %1647 {strides = array<i32>} : memref<18x8x128xf32, #tpu.memory_space<vmem>>, vector<1x8x128xf32>,
    %c16_298 = arith.constant 16 : index
    %c0_299 = arith.constant 0 : index
    %c0_300 = arith.constant 0 : index
    %1648 = vector.load %arg7[%c16_298, %c0_299, %c0_300] : memref<18x8x128xf32, #tpu.memory_space<vmem>>, vector<1x8x128xf32>
    %1649 = vector.shape_cast %1648 : vector<1x8x128xf32> to vector<8x128xf32>
    %1650 = vector.shape_cast %1633 : vector<8x128xf32> to vector<1x8x128xf32>
    tpu.vector_store %arg7[%c16_298, %c0_299, %c0_300], %1650 {strides = array<i32>} : memref<18x8x128xf32, #tpu.memory_space<vmem>>, vector<1x8x128xf32>,
    %c14_301 = arith.constant 14 : index
    %c0_302 = arith.constant 0 : index
    %c0_303 = arith.constant 0 : index
    %1651 = vector.load %arg7[%c14_301, %c0_302, %c0_303] : memref<18x8x128xf32, #tpu.memory_space<vmem>>, vector<1x8x128xf32>
    %1652 = vector.shape_cast %1651 : vector<1x8x128xf32> to vector<8x128xf32>
    %1653 = vector.shape_cast %1 : vector<8x128xf32> to vector<1x8x128xf32>
    tpu.vector_store %arg7[%c14_301, %c0_302, %c0_303], %1653 {strides = array<i32>} : memref<18x8x128xf32, #tpu.memory_space<vmem>>, vector<1x8x128xf32>,
    %c17_304 = arith.constant 17 : index
    %c0_305 = arith.constant 0 : index
    %c0_306 = arith.constant 0 : index
    %1654 = vector.load %arg7[%c17_304, %c0_305, %c0_306] : memref<18x8x128xf32, #tpu.memory_space<vmem>>, vector<1x8x128xf32>
    %1655 = vector.shape_cast %1654 : vector<1x8x128xf32> to vector<8x128xf32>
    %1656 = vector.shape_cast %1638 : vector<8x128xf32> to vector<1x8x128xf32>
    tpu.vector_store %arg7[%c17_304, %c0_305, %c0_306], %1656 {strides = array<i32>} : memref<18x8x128xf32, #tpu.memory_space<vmem>>, vector<1x8x128xf32>,
    %1657 = vector.broadcast %1311 : f32 to vector<8x128xf32>
    %1658 = arith.mulf %1657, %1292 : vector<8x128xf32>
    %1659 = math.sin %1658 : vector<8x128xf32>
    %1660 = math.cos %1658 : vector<8x128xf32>
    %1661 = arith.mulf %1292, %1292 : vector<8x128xf32>
    %1662 = vector.broadcast %1312 : f32 to vector<8x128xf32>
    %1663 = arith.mulf %1659, %1662 : vector<8x128xf32>
    %1664 = vector.broadcast %1316 : f32 to vector<8x128xf32>
    %1665 = arith.mulf %1664, %1292 : vector<8x128xf32>
    %1666 = arith.addf %1663, %1665 : vector<8x128xf32>
    %cst_307 = arith.constant 1.000000e+00 : f32
    %1667 = vector.broadcast %cst_307 : f32 to vector<8x128xf32>
    %1668 = arith.subf %1667, %1660 : vector<8x128xf32>
    %1669 = vector.broadcast %1313 : f32 to vector<8x128xf32>
    %1670 = arith.mulf %1668, %1669 : vector<8x128xf32>
    %cst_308 = arith.constant 5.000000e-01 : f32
    %1671 = vector.broadcast %cst_308 : f32 to vector<8x128xf32>
    %1672 = arith.mulf %1671, %1661 : vector<8x128xf32>
    %1673 = vector.broadcast %1316 : f32 to vector<8x128xf32>
    %1674 = arith.mulf %1673, %1672 : vector<8x128xf32>
    %1675 = arith.addf %1670, %1674 : vector<8x128xf32>
    %1676 = arith.subf %1658, %1659 : vector<8x128xf32>
    %1677 = vector.broadcast %1314 : f32 to vector<8x128xf32>
    %1678 = arith.mulf %1676, %1677 : vector<8x128xf32>
    %1679 = arith.mulf %1661, %1292 : vector<8x128xf32>
    %cst_309 = arith.constant 0.166666672 : f32
    %1680 = vector.broadcast %cst_309 : f32 to vector<8x128xf32>
    %1681 = arith.mulf %1679, %1680 : vector<8x128xf32>
    %1682 = vector.broadcast %1316 : f32 to vector<8x128xf32>
    %1683 = arith.mulf %1682, %1681 : vector<8x128xf32>
    %1684 = arith.addf %1678, %1683 : vector<8x128xf32>
    %cst_310 = arith.constant 0.000000e+00 : f32
    %1685 = arith.subf %cst_310, %1307 : f32
    %cst_311 = arith.constant 0.000000e+00 : f32
    %1686 = arith.subf %cst_311, %1305 : f32
    %cst_312 = arith.constant 0.000000e+00 : f32
    %1687 = arith.subf %cst_312, %1306 : f32
    %1688 = arith.mulf %1305, %1305 : f32
    %1689 = arith.subf %1688, %1315 : f32
    %1690 = arith.mulf %1305, %1306 : f32
    %cst_313 = arith.constant 0.000000e+00 : f32
    %1691 = arith.subf %1690, %cst_313 : f32
    %1692 = arith.mulf %1305, %1307 : f32
    %cst_314 = arith.constant 0.000000e+00 : f32
    %1693 = arith.subf %1692, %cst_314 : f32
    %1694 = arith.mulf %1306, %1305 : f32
    %cst_315 = arith.constant 0.000000e+00 : f32
    %1695 = arith.subf %1694, %cst_315 : f32
    %1696 = arith.mulf %1306, %1306 : f32
    %1697 = arith.subf %1696, %1315 : f32
    %1698 = arith.mulf %1306, %1307 : f32
    %cst_316 = arith.constant 0.000000e+00 : f32
    %1699 = arith.subf %1698, %cst_316 : f32
    %1700 = arith.mulf %1307, %1305 : f32
    %cst_317 = arith.constant 0.000000e+00 : f32
    %1701 = arith.subf %1700, %cst_317 : f32
    %1702 = arith.mulf %1307, %1306 : f32
    %cst_318 = arith.constant 0.000000e+00 : f32
    %1703 = arith.subf %1702, %cst_318 : f32
    %1704 = arith.mulf %1307, %1307 : f32
    %1705 = arith.subf %1704, %1315 : f32
    %1706 = arith.mulf %1306, %1310 : f32
    %1707 = arith.mulf %1307, %1309 : f32
    %1708 = arith.subf %1706, %1707 : f32
    %1709 = arith.mulf %1307, %1308 : f32
    %1710 = arith.mulf %1305, %1310 : f32
    %1711 = arith.subf %1709, %1710 : f32
    %1712 = arith.mulf %1305, %1309 : f32
    %1713 = arith.mulf %1306, %1308 : f32
    %1714 = arith.subf %1712, %1713 : f32
    %1715 = arith.mulf %1306, %1714 : f32
    %1716 = arith.mulf %1307, %1711 : f32
    %1717 = arith.subf %1715, %1716 : f32
    %1718 = arith.mulf %1307, %1708 : f32
    %1719 = arith.mulf %1305, %1714 : f32
    %1720 = arith.subf %1718, %1719 : f32
    %1721 = arith.mulf %1305, %1711 : f32
    %1722 = arith.mulf %1306, %1708 : f32
    %1723 = arith.subf %1721, %1722 : f32
    %1724 = vector.broadcast %1689 : f32 to vector<8x128xf32>
    %1725 = arith.mulf %1675, %1724 : vector<8x128xf32>
    %cst_319 = arith.constant 1.000000e+00 : f32
    %1726 = vector.broadcast %cst_319 : f32 to vector<8x128xf32>
    %1727 = arith.addf %1726, %1725 : vector<8x128xf32>
    %1728 = vector.broadcast %1685 : f32 to vector<8x128xf32>
    %1729 = arith.mulf %1666, %1728 : vector<8x128xf32>
    %1730 = vector.broadcast %1691 : f32 to vector<8x128xf32>
    %1731 = arith.mulf %1675, %1730 : vector<8x128xf32>
    %1732 = arith.addf %1729, %1731 : vector<8x128xf32>
    %1733 = vector.broadcast %1306 : f32 to vector<8x128xf32>
    %1734 = arith.mulf %1666, %1733 : vector<8x128xf32>
    %1735 = vector.broadcast %1693 : f32 to vector<8x128xf32>
    %1736 = arith.mulf %1675, %1735 : vector<8x128xf32>
    %1737 = arith.addf %1734, %1736 : vector<8x128xf32>
    %1738 = vector.broadcast %1307 : f32 to vector<8x128xf32>
    %1739 = arith.mulf %1666, %1738 : vector<8x128xf32>
    %1740 = vector.broadcast %1695 : f32 to vector<8x128xf32>
    %1741 = arith.mulf %1675, %1740 : vector<8x128xf32>
    %1742 = arith.addf %1739, %1741 : vector<8x128xf32>
    %1743 = vector.broadcast %1697 : f32 to vector<8x128xf32>
    %1744 = arith.mulf %1675, %1743 : vector<8x128xf32>
    %cst_320 = arith.constant 1.000000e+00 : f32
    %1745 = vector.broadcast %cst_320 : f32 to vector<8x128xf32>
    %1746 = arith.addf %1745, %1744 : vector<8x128xf32>
    %1747 = vector.broadcast %1686 : f32 to vector<8x128xf32>
    %1748 = arith.mulf %1666, %1747 : vector<8x128xf32>
    %1749 = vector.broadcast %1699 : f32 to vector<8x128xf32>
    %1750 = arith.mulf %1675, %1749 : vector<8x128xf32>
    %1751 = arith.addf %1748, %1750 : vector<8x128xf32>
    %1752 = vector.broadcast %1687 : f32 to vector<8x128xf32>
    %1753 = arith.mulf %1666, %1752 : vector<8x128xf32>
    %1754 = vector.broadcast %1701 : f32 to vector<8x128xf32>
    %1755 = arith.mulf %1675, %1754 : vector<8x128xf32>
    %1756 = arith.addf %1753, %1755 : vector<8x128xf32>
    %1757 = vector.broadcast %1305 : f32 to vector<8x128xf32>
    %1758 = arith.mulf %1666, %1757 : vector<8x128xf32>
    %1759 = vector.broadcast %1703 : f32 to vector<8x128xf32>
    %1760 = arith.mulf %1675, %1759 : vector<8x128xf32>
    %1761 = arith.addf %1758, %1760 : vector<8x128xf32>
    %1762 = vector.broadcast %1705 : f32 to vector<8x128xf32>
    %1763 = arith.mulf %1675, %1762 : vector<8x128xf32>
    %cst_321 = arith.constant 1.000000e+00 : f32
    %1764 = vector.broadcast %cst_321 : f32 to vector<8x128xf32>
    %1765 = arith.addf %1764, %1763 : vector<8x128xf32>
    %1766 = vector.broadcast %1308 : f32 to vector<8x128xf32>
    %1767 = arith.mulf %1292, %1766 : vector<8x128xf32>
    %1768 = vector.broadcast %1708 : f32 to vector<8x128xf32>
    %1769 = arith.mulf %1675, %1768 : vector<8x128xf32>
    %1770 = arith.addf %1767, %1769 : vector<8x128xf32>
    %1771 = vector.broadcast %1717 : f32 to vector<8x128xf32>
    %1772 = arith.mulf %1684, %1771 : vector<8x128xf32>
    %1773 = arith.addf %1770, %1772 : vector<8x128xf32>
    %1774 = vector.broadcast %1309 : f32 to vector<8x128xf32>
    %1775 = arith.mulf %1292, %1774 : vector<8x128xf32>
    %1776 = vector.broadcast %1711 : f32 to vector<8x128xf32>
    %1777 = arith.mulf %1675, %1776 : vector<8x128xf32>
    %1778 = arith.addf %1775, %1777 : vector<8x128xf32>
    %1779 = vector.broadcast %1720 : f32 to vector<8x128xf32>
    %1780 = arith.mulf %1684, %1779 : vector<8x128xf32>
    %1781 = arith.addf %1778, %1780 : vector<8x128xf32>
    %1782 = vector.broadcast %1310 : f32 to vector<8x128xf32>
    %1783 = arith.mulf %1292, %1782 : vector<8x128xf32>
    %1784 = vector.broadcast %1714 : f32 to vector<8x128xf32>
    %1785 = arith.mulf %1675, %1784 : vector<8x128xf32>
    %1786 = arith.addf %1783, %1785 : vector<8x128xf32>
    %1787 = vector.broadcast %1723 : f32 to vector<8x128xf32>
    %1788 = arith.mulf %1684, %1787 : vector<8x128xf32>
    %1789 = arith.addf %1786, %1788 : vector<8x128xf32>
    %1790 = arith.mulf %1544, %1727 : vector<8x128xf32>
    %1791 = arith.mulf %1549, %1742 : vector<8x128xf32>
    %1792 = arith.addf %1790, %1791 : vector<8x128xf32>
    %1793 = arith.mulf %1554, %1756 : vector<8x128xf32>
    %1794 = arith.addf %1792, %1793 : vector<8x128xf32>
    %1795 = arith.mulf %1544, %1732 : vector<8x128xf32>
    %1796 = arith.mulf %1549, %1746 : vector<8x128xf32>
    %1797 = arith.addf %1795, %1796 : vector<8x128xf32>
    %1798 = arith.mulf %1554, %1761 : vector<8x128xf32>
    %1799 = arith.addf %1797, %1798 : vector<8x128xf32>
    %1800 = arith.mulf %1544, %1737 : vector<8x128xf32>
    %1801 = arith.mulf %1549, %1751 : vector<8x128xf32>
    %1802 = arith.addf %1800, %1801 : vector<8x128xf32>
    %1803 = arith.mulf %1554, %1765 : vector<8x128xf32>
    %1804 = arith.addf %1802, %1803 : vector<8x128xf32>
    %1805 = arith.mulf %1559, %1727 : vector<8x128xf32>
    %1806 = arith.mulf %1564, %1742 : vector<8x128xf32>
    %1807 = arith.addf %1805, %1806 : vector<8x128xf32>
    %1808 = arith.mulf %1569, %1756 : vector<8x128xf32>
    %1809 = arith.addf %1807, %1808 : vector<8x128xf32>
    %1810 = arith.mulf %1559, %1732 : vector<8x128xf32>
    %1811 = arith.mulf %1564, %1746 : vector<8x128xf32>
    %1812 = arith.addf %1810, %1811 : vector<8x128xf32>
    %1813 = arith.mulf %1569, %1761 : vector<8x128xf32>
    %1814 = arith.addf %1812, %1813 : vector<8x128xf32>
    %1815 = arith.mulf %1559, %1737 : vector<8x128xf32>
    %1816 = arith.mulf %1564, %1751 : vector<8x128xf32>
    %1817 = arith.addf %1815, %1816 : vector<8x128xf32>
    %1818 = arith.mulf %1569, %1765 : vector<8x128xf32>
    %1819 = arith.addf %1817, %1818 : vector<8x128xf32>
    %1820 = arith.mulf %1574, %1727 : vector<8x128xf32>
    %1821 = arith.mulf %1579, %1742 : vector<8x128xf32>
    %1822 = arith.addf %1820, %1821 : vector<8x128xf32>
    %1823 = arith.mulf %1584, %1756 : vector<8x128xf32>
    %1824 = arith.addf %1822, %1823 : vector<8x128xf32>
    %1825 = arith.mulf %1574, %1732 : vector<8x128xf32>
    %1826 = arith.mulf %1579, %1746 : vector<8x128xf32>
    %1827 = arith.addf %1825, %1826 : vector<8x128xf32>
    %1828 = arith.mulf %1584, %1761 : vector<8x128xf32>
    %1829 = arith.addf %1827, %1828 : vector<8x128xf32>
    %1830 = arith.mulf %1574, %1737 : vector<8x128xf32>
    %1831 = arith.mulf %1579, %1751 : vector<8x128xf32>
    %1832 = arith.addf %1830, %1831 : vector<8x128xf32>
    %1833 = arith.mulf %1584, %1765 : vector<8x128xf32>
    %1834 = arith.addf %1832, %1833 : vector<8x128xf32>
    %1835 = arith.mulf %1544, %1773 : vector<8x128xf32>
    %1836 = arith.mulf %1549, %1781 : vector<8x128xf32>
    %1837 = arith.addf %1835, %1836 : vector<8x128xf32>
    %1838 = arith.mulf %1554, %1789 : vector<8x128xf32>
    %1839 = arith.addf %1837, %1838 : vector<8x128xf32>
    %1840 = arith.addf %1839, %1590 : vector<8x128xf32>
    %1841 = arith.mulf %1559, %1773 : vector<8x128xf32>
    %1842 = arith.mulf %1564, %1781 : vector<8x128xf32>
    %1843 = arith.addf %1841, %1842 : vector<8x128xf32>
    %1844 = arith.mulf %1569, %1789 : vector<8x128xf32>
    %1845 = arith.addf %1843, %1844 : vector<8x128xf32>
    %1846 = arith.addf %1845, %1596 : vector<8x128xf32>
    %1847 = arith.mulf %1574, %1773 : vector<8x128xf32>
    %1848 = arith.mulf %1579, %1781 : vector<8x128xf32>
    %1849 = arith.addf %1847, %1848 : vector<8x128xf32>
    %1850 = arith.mulf %1584, %1789 : vector<8x128xf32>
    %1851 = arith.addf %1849, %1850 : vector<8x128xf32>
    %1852 = arith.addf %1851, %1602 : vector<8x128xf32>
    %c32_322 = arith.constant 32 : index
    %1853 = memref.load %arg4[%c32_322] : memref<48xf32, #tpu.memory_space<smem>>
    %c33_323 = arith.constant 33 : index
    %1854 = memref.load %arg4[%c33_323] : memref<48xf32, #tpu.memory_space<smem>>
    %c34_324 = arith.constant 34 : index
    %1855 = memref.load %arg4[%c34_324] : memref<48xf32, #tpu.memory_space<smem>>
    %c36 = arith.constant 36 : index
    %1856 = memref.load %arg4[%c36] : memref<48xf32, #tpu.memory_space<smem>>
    %c37 = arith.constant 37 : index
    %1857 = memref.load %arg4[%c37] : memref<48xf32, #tpu.memory_space<smem>>
    %c38 = arith.constant 38 : index
    %1858 = memref.load %arg4[%c38] : memref<48xf32, #tpu.memory_space<smem>>
    %c40 = arith.constant 40 : index
    %1859 = memref.load %arg4[%c40] : memref<48xf32, #tpu.memory_space<smem>>
    %c41 = arith.constant 41 : index
    %1860 = memref.load %arg4[%c41] : memref<48xf32, #tpu.memory_space<smem>>
    %c42 = arith.constant 42 : index
    %1861 = memref.load %arg4[%c42] : memref<48xf32, #tpu.memory_space<smem>>
    %c35_325 = arith.constant 35 : index
    %1862 = memref.load %arg4[%c35_325] : memref<48xf32, #tpu.memory_space<smem>>
    %c39 = arith.constant 39 : index
    %1863 = memref.load %arg4[%c39] : memref<48xf32, #tpu.memory_space<smem>>
    %c43 = arith.constant 43 : index
    %1864 = memref.load %arg4[%c43] : memref<48xf32, #tpu.memory_space<smem>>
    %1865 = vector.broadcast %1853 : f32 to vector<8x128xf32>
    %1866 = arith.mulf %1794, %1865 : vector<8x128xf32>
    %1867 = vector.broadcast %1856 : f32 to vector<8x128xf32>
    %1868 = arith.mulf %1799, %1867 : vector<8x128xf32>
    %1869 = arith.addf %1866, %1868 : vector<8x128xf32>
    %1870 = vector.broadcast %1859 : f32 to vector<8x128xf32>
    %1871 = arith.mulf %1804, %1870 : vector<8x128xf32>
    %1872 = arith.addf %1869, %1871 : vector<8x128xf32>
    %1873 = vector.broadcast %1854 : f32 to vector<8x128xf32>
    %1874 = arith.mulf %1794, %1873 : vector<8x128xf32>
    %1875 = vector.broadcast %1857 : f32 to vector<8x128xf32>
    %1876 = arith.mulf %1799, %1875 : vector<8x128xf32>
    %1877 = arith.addf %1874, %1876 : vector<8x128xf32>
    %1878 = vector.broadcast %1860 : f32 to vector<8x128xf32>
    %1879 = arith.mulf %1804, %1878 : vector<8x128xf32>
    %1880 = arith.addf %1877, %1879 : vector<8x128xf32>
    %1881 = vector.broadcast %1855 : f32 to vector<8x128xf32>
    %1882 = arith.mulf %1794, %1881 : vector<8x128xf32>
    %1883 = vector.broadcast %1858 : f32 to vector<8x128xf32>
    %1884 = arith.mulf %1799, %1883 : vector<8x128xf32>
    %1885 = arith.addf %1882, %1884 : vector<8x128xf32>
    %1886 = vector.broadcast %1861 : f32 to vector<8x128xf32>
    %1887 = arith.mulf %1804, %1886 : vector<8x128xf32>
    %1888 = arith.addf %1885, %1887 : vector<8x128xf32>
    %1889 = vector.broadcast %1853 : f32 to vector<8x128xf32>
    %1890 = arith.mulf %1809, %1889 : vector<8x128xf32>
    %1891 = vector.broadcast %1856 : f32 to vector<8x128xf32>
    %1892 = arith.mulf %1814, %1891 : vector<8x128xf32>
    %1893 = arith.addf %1890, %1892 : vector<8x128xf32>
    %1894 = vector.broadcast %1859 : f32 to vector<8x128xf32>
    %1895 = arith.mulf %1819, %1894 : vector<8x128xf32>
    %1896 = arith.addf %1893, %1895 : vector<8x128xf32>
    %1897 = vector.broadcast %1854 : f32 to vector<8x128xf32>
    %1898 = arith.mulf %1809, %1897 : vector<8x128xf32>
    %1899 = vector.broadcast %1857 : f32 to vector<8x128xf32>
    %1900 = arith.mulf %1814, %1899 : vector<8x128xf32>
    %1901 = arith.addf %1898, %1900 : vector<8x128xf32>
    %1902 = vector.broadcast %1860 : f32 to vector<8x128xf32>
    %1903 = arith.mulf %1819, %1902 : vector<8x128xf32>
    %1904 = arith.addf %1901, %1903 : vector<8x128xf32>
    %1905 = vector.broadcast %1855 : f32 to vector<8x128xf32>
    %1906 = arith.mulf %1809, %1905 : vector<8x128xf32>
    %1907 = vector.broadcast %1858 : f32 to vector<8x128xf32>
    %1908 = arith.mulf %1814, %1907 : vector<8x128xf32>
    %1909 = arith.addf %1906, %1908 : vector<8x128xf32>
    %1910 = vector.broadcast %1861 : f32 to vector<8x128xf32>
    %1911 = arith.mulf %1819, %1910 : vector<8x128xf32>
    %1912 = arith.addf %1909, %1911 : vector<8x128xf32>
    %1913 = vector.broadcast %1853 : f32 to vector<8x128xf32>
    %1914 = arith.mulf %1824, %1913 : vector<8x128xf32>
    %1915 = vector.broadcast %1856 : f32 to vector<8x128xf32>
    %1916 = arith.mulf %1829, %1915 : vector<8x128xf32>
    %1917 = arith.addf %1914, %1916 : vector<8x128xf32>
    %1918 = vector.broadcast %1859 : f32 to vector<8x128xf32>
    %1919 = arith.mulf %1834, %1918 : vector<8x128xf32>
    %1920 = arith.addf %1917, %1919 : vector<8x128xf32>
    %1921 = vector.broadcast %1854 : f32 to vector<8x128xf32>
    %1922 = arith.mulf %1824, %1921 : vector<8x128xf32>
    %1923 = vector.broadcast %1857 : f32 to vector<8x128xf32>
    %1924 = arith.mulf %1829, %1923 : vector<8x128xf32>
    %1925 = arith.addf %1922, %1924 : vector<8x128xf32>
    %1926 = vector.broadcast %1860 : f32 to vector<8x128xf32>
    %1927 = arith.mulf %1834, %1926 : vector<8x128xf32>
    %1928 = arith.addf %1925, %1927 : vector<8x128xf32>
    %1929 = vector.broadcast %1855 : f32 to vector<8x128xf32>
    %1930 = arith.mulf %1824, %1929 : vector<8x128xf32>
    %1931 = vector.broadcast %1858 : f32 to vector<8x128xf32>
    %1932 = arith.mulf %1829, %1931 : vector<8x128xf32>
    %1933 = arith.addf %1930, %1932 : vector<8x128xf32>
    %1934 = vector.broadcast %1861 : f32 to vector<8x128xf32>
    %1935 = arith.mulf %1834, %1934 : vector<8x128xf32>
    %1936 = arith.addf %1933, %1935 : vector<8x128xf32>
    %1937 = vector.broadcast %1862 : f32 to vector<8x128xf32>
    %1938 = arith.mulf %1794, %1937 : vector<8x128xf32>
    %1939 = vector.broadcast %1863 : f32 to vector<8x128xf32>
    %1940 = arith.mulf %1799, %1939 : vector<8x128xf32>
    %1941 = arith.addf %1938, %1940 : vector<8x128xf32>
    %1942 = vector.broadcast %1864 : f32 to vector<8x128xf32>
    %1943 = arith.mulf %1804, %1942 : vector<8x128xf32>
    %1944 = arith.addf %1941, %1943 : vector<8x128xf32>
    %1945 = arith.addf %1944, %1840 : vector<8x128xf32>
    %1946 = vector.broadcast %1862 : f32 to vector<8x128xf32>
    %1947 = arith.mulf %1809, %1946 : vector<8x128xf32>
    %1948 = vector.broadcast %1863 : f32 to vector<8x128xf32>
    %1949 = arith.mulf %1814, %1948 : vector<8x128xf32>
    %1950 = arith.addf %1947, %1949 : vector<8x128xf32>
    %1951 = vector.broadcast %1864 : f32 to vector<8x128xf32>
    %1952 = arith.mulf %1819, %1951 : vector<8x128xf32>
    %1953 = arith.addf %1950, %1952 : vector<8x128xf32>
    %1954 = arith.addf %1953, %1846 : vector<8x128xf32>
    %1955 = vector.broadcast %1862 : f32 to vector<8x128xf32>
    %1956 = arith.mulf %1824, %1955 : vector<8x128xf32>
    %1957 = vector.broadcast %1863 : f32 to vector<8x128xf32>
    %1958 = arith.mulf %1829, %1957 : vector<8x128xf32>
    %1959 = arith.addf %1956, %1958 : vector<8x128xf32>
    %1960 = vector.broadcast %1864 : f32 to vector<8x128xf32>
    %1961 = arith.mulf %1834, %1960 : vector<8x128xf32>
    %1962 = arith.addf %1959, %1961 : vector<8x128xf32>
    %1963 = arith.addf %1962, %1852 : vector<8x128xf32>
    %c16_326 = arith.constant 16 : index
    %c0_327 = arith.constant 0 : index
    %c0_328 = arith.constant 0 : index
    %1964 = vector.load %arg5[%c16_326, %c0_327, %c0_328] : memref<32x8x128xf32, #tpu.memory_space<vmem>>, vector<1x8x128xf32>
    %1965 = vector.shape_cast %1964 : vector<1x8x128xf32> to vector<8x128xf32>
    %1966 = vector.shape_cast %1872 : vector<8x128xf32> to vector<1x8x128xf32>
    tpu.vector_store %arg5[%c16_326, %c0_327, %c0_328], %1966 {strides = array<i32>} : memref<32x8x128xf32, #tpu.memory_space<vmem>>, vector<1x8x128xf32>,
    %c17_329 = arith.constant 17 : index
    %c0_330 = arith.constant 0 : index
    %c0_331 = arith.constant 0 : index
    %1967 = vector.load %arg5[%c17_329, %c0_330, %c0_331] : memref<32x8x128xf32, #tpu.memory_space<vmem>>, vector<1x8x128xf32>
    %1968 = vector.shape_cast %1967 : vector<1x8x128xf32> to vector<8x128xf32>
    %1969 = vector.shape_cast %1880 : vector<8x128xf32> to vector<1x8x128xf32>
    tpu.vector_store %arg5[%c17_329, %c0_330, %c0_331], %1969 {strides = array<i32>} : memref<32x8x128xf32, #tpu.memory_space<vmem>>, vector<1x8x128xf32>,
    %c18_332 = arith.constant 18 : index
    %c0_333 = arith.constant 0 : index
    %c0_334 = arith.constant 0 : index
    %1970 = vector.load %arg5[%c18_332, %c0_333, %c0_334] : memref<32x8x128xf32, #tpu.memory_space<vmem>>, vector<1x8x128xf32>
    %1971 = vector.shape_cast %1970 : vector<1x8x128xf32> to vector<8x128xf32>
    %1972 = vector.shape_cast %1888 : vector<8x128xf32> to vector<1x8x128xf32>
    tpu.vector_store %arg5[%c18_332, %c0_333, %c0_334], %1972 {strides = array<i32>} : memref<32x8x128xf32, #tpu.memory_space<vmem>>, vector<1x8x128xf32>,
    %c19_335 = arith.constant 19 : index
    %c0_336 = arith.constant 0 : index
    %c0_337 = arith.constant 0 : index
    %1973 = vector.load %arg5[%c19_335, %c0_336, %c0_337] : memref<32x8x128xf32, #tpu.memory_space<vmem>>, vector<1x8x128xf32>
    %1974 = vector.shape_cast %1973 : vector<1x8x128xf32> to vector<8x128xf32>
    %1975 = vector.shape_cast %1945 : vector<8x128xf32> to vector<1x8x128xf32>
    tpu.vector_store %arg5[%c19_335, %c0_336, %c0_337], %1975 {strides = array<i32>} : memref<32x8x128xf32, #tpu.memory_space<vmem>>, vector<1x8x128xf32>,
    %c20_338 = arith.constant 20 : index
    %c0_339 = arith.constant 0 : index
    %c0_340 = arith.constant 0 : index
    %1976 = vector.load %arg5[%c20_338, %c0_339, %c0_340] : memref<32x8x128xf32, #tpu.memory_space<vmem>>, vector<1x8x128xf32>
    %1977 = vector.shape_cast %1976 : vector<1x8x128xf32> to vector<8x128xf32>
    %1978 = vector.shape_cast %1896 : vector<8x128xf32> to vector<1x8x128xf32>
    tpu.vector_store %arg5[%c20_338, %c0_339, %c0_340], %1978 {strides = array<i32>} : memref<32x8x128xf32, #tpu.memory_space<vmem>>, vector<1x8x128xf32>,
    %c21_341 = arith.constant 21 : index
    %c0_342 = arith.constant 0 : index
    %c0_343 = arith.constant 0 : index
    %1979 = vector.load %arg5[%c21_341, %c0_342, %c0_343] : memref<32x8x128xf32, #tpu.memory_space<vmem>>, vector<1x8x128xf32>
    %1980 = vector.shape_cast %1979 : vector<1x8x128xf32> to vector<8x128xf32>
    %1981 = vector.shape_cast %1904 : vector<8x128xf32> to vector<1x8x128xf32>
    tpu.vector_store %arg5[%c21_341, %c0_342, %c0_343], %1981 {strides = array<i32>} : memref<32x8x128xf32, #tpu.memory_space<vmem>>, vector<1x8x128xf32>,
    %c22_344 = arith.constant 22 : index
    %c0_345 = arith.constant 0 : index
    %c0_346 = arith.constant 0 : index
    %1982 = vector.load %arg5[%c22_344, %c0_345, %c0_346] : memref<32x8x128xf32, #tpu.memory_space<vmem>>, vector<1x8x128xf32>
    %1983 = vector.shape_cast %1982 : vector<1x8x128xf32> to vector<8x128xf32>
    %1984 = vector.shape_cast %1912 : vector<8x128xf32> to vector<1x8x128xf32>
    tpu.vector_store %arg5[%c22_344, %c0_345, %c0_346], %1984 {strides = array<i32>} : memref<32x8x128xf32, #tpu.memory_space<vmem>>, vector<1x8x128xf32>,
    %c23_347 = arith.constant 23 : index
    %c0_348 = arith.constant 0 : index
    %c0_349 = arith.constant 0 : index
    %1985 = vector.load %arg5[%c23_347, %c0_348, %c0_349] : memref<32x8x128xf32, #tpu.memory_space<vmem>>, vector<1x8x128xf32>
    %1986 = vector.shape_cast %1985 : vector<1x8x128xf32> to vector<8x128xf32>
    %1987 = vector.shape_cast %1954 : vector<8x128xf32> to vector<1x8x128xf32>
    tpu.vector_store %arg5[%c23_347, %c0_348, %c0_349], %1987 {strides = array<i32>} : memref<32x8x128xf32, #tpu.memory_space<vmem>>, vector<1x8x128xf32>,
    %c24_350 = arith.constant 24 : index
    %c0_351 = arith.constant 0 : index
    %c0_352 = arith.constant 0 : index
    %1988 = vector.load %arg5[%c24_350, %c0_351, %c0_352] : memref<32x8x128xf32, #tpu.memory_space<vmem>>, vector<1x8x128xf32>
    %1989 = vector.shape_cast %1988 : vector<1x8x128xf32> to vector<8x128xf32>
    %1990 = vector.shape_cast %1920 : vector<8x128xf32> to vector<1x8x128xf32>
    tpu.vector_store %arg5[%c24_350, %c0_351, %c0_352], %1990 {strides = array<i32>} : memref<32x8x128xf32, #tpu.memory_space<vmem>>, vector<1x8x128xf32>,
    %c25_353 = arith.constant 25 : index
    %c0_354 = arith.constant 0 : index
    %c0_355 = arith.constant 0 : index
    %1991 = vector.load %arg5[%c25_353, %c0_354, %c0_355] : memref<32x8x128xf32, #tpu.memory_space<vmem>>, vector<1x8x128xf32>
    %1992 = vector.shape_cast %1991 : vector<1x8x128xf32> to vector<8x128xf32>
    %1993 = vector.shape_cast %1928 : vector<8x128xf32> to vector<1x8x128xf32>
    tpu.vector_store %arg5[%c25_353, %c0_354, %c0_355], %1993 {strides = array<i32>} : memref<32x8x128xf32, #tpu.memory_space<vmem>>, vector<1x8x128xf32>,
    %c26_356 = arith.constant 26 : index
    %c0_357 = arith.constant 0 : index
    %c0_358 = arith.constant 0 : index
    %1994 = vector.load %arg5[%c26_356, %c0_357, %c0_358] : memref<32x8x128xf32, #tpu.memory_space<vmem>>, vector<1x8x128xf32>
    %1995 = vector.shape_cast %1994 : vector<1x8x128xf32> to vector<8x128xf32>
    %1996 = vector.shape_cast %1936 : vector<8x128xf32> to vector<1x8x128xf32>
    tpu.vector_store %arg5[%c26_356, %c0_357, %c0_358], %1996 {strides = array<i32>} : memref<32x8x128xf32, #tpu.memory_space<vmem>>, vector<1x8x128xf32>,
    %c27_359 = arith.constant 27 : index
    %c0_360 = arith.constant 0 : index
    %c0_361 = arith.constant 0 : index
    %1997 = vector.load %arg5[%c27_359, %c0_360, %c0_361] : memref<32x8x128xf32, #tpu.memory_space<vmem>>, vector<1x8x128xf32>
    %1998 = vector.shape_cast %1997 : vector<1x8x128xf32> to vector<8x128xf32>
    %1999 = vector.shape_cast %1963 : vector<8x128xf32> to vector<1x8x128xf32>
    tpu.vector_store %arg5[%c27_359, %c0_360, %c0_361], %1999 {strides = array<i32>} : memref<32x8x128xf32, #tpu.memory_space<vmem>>, vector<1x8x128xf32>,
    %c28_362 = arith.constant 28 : index
    %c0_363 = arith.constant 0 : index
    %c0_364 = arith.constant 0 : index
    %2000 = vector.load %arg5[%c28_362, %c0_363, %c0_364] : memref<32x8x128xf32, #tpu.memory_space<vmem>>, vector<1x8x128xf32>
    %2001 = vector.shape_cast %2000 : vector<1x8x128xf32> to vector<8x128xf32>
    %2002 = vector.shape_cast %1 : vector<8x128xf32> to vector<1x8x128xf32>
    tpu.vector_store %arg5[%c28_362, %c0_363, %c0_364], %2002 {strides = array<i32>} : memref<32x8x128xf32, #tpu.memory_space<vmem>>, vector<1x8x128xf32>,
    %c29_365 = arith.constant 29 : index
    %c0_366 = arith.constant 0 : index
    %c0_367 = arith.constant 0 : index
    %2003 = vector.load %arg5[%c29_365, %c0_366, %c0_367] : memref<32x8x128xf32, #tpu.memory_space<vmem>>, vector<1x8x128xf32>
    %2004 = vector.shape_cast %2003 : vector<1x8x128xf32> to vector<8x128xf32>
    %2005 = vector.shape_cast %1 : vector<8x128xf32> to vector<1x8x128xf32>
    tpu.vector_store %arg5[%c29_365, %c0_366, %c0_367], %2005 {strides = array<i32>} : memref<32x8x128xf32, #tpu.memory_space<vmem>>, vector<1x8x128xf32>,
    %c30_368 = arith.constant 30 : index
    %c0_369 = arith.constant 0 : index
    %c0_370 = arith.constant 0 : index
    %2006 = vector.load %arg5[%c30_368, %c0_369, %c0_370] : memref<32x8x128xf32, #tpu.memory_space<vmem>>, vector<1x8x128xf32>
    %2007 = vector.shape_cast %2006 : vector<1x8x128xf32> to vector<8x128xf32>
    %2008 = vector.shape_cast %1 : vector<8x128xf32> to vector<1x8x128xf32>
    tpu.vector_store %arg5[%c30_368, %c0_369, %c0_370], %2008 {strides = array<i32>} : memref<32x8x128xf32, #tpu.memory_space<vmem>>, vector<1x8x128xf32>,
    %c31_371 = arith.constant 31 : index
    %c0_372 = arith.constant 0 : index
    %c0_373 = arith.constant 0 : index
    %2009 = vector.load %arg5[%c31_371, %c0_372, %c0_373] : memref<32x8x128xf32, #tpu.memory_space<vmem>>, vector<1x8x128xf32>
    %2010 = vector.shape_cast %2009 : vector<1x8x128xf32> to vector<8x128xf32>
    %2011 = vector.shape_cast %0 : vector<8x128xf32> to vector<1x8x128xf32>
    tpu.vector_store %arg5[%c31_371, %c0_372, %c0_373], %2011 {strides = array<i32>} : memref<32x8x128xf32, #tpu.memory_space<vmem>>, vector<1x8x128xf32>,
    return
  }
  func.func @transform_0(%arg0: i32) -> (i32, i32, i32) {
    %c0_i32 = arith.constant 0 : i32
    %c0_i32_0 = arith.constant 0 : i32
    %c0_i32_1 = arith.constant 0 : i32
    return %c0_i32, %arg0, %c0_i32_0 : i32, i32, i32
  }
  func.func @transform_1(%arg0: i32) -> i32 {
    %c0_i32 = arith.constant 0 : i32
    %c0_i32_0 = arith.constant 0 : i32
    return %c0_i32 : i32
  }
  func.func @transform_2(%arg0: i32) -> i32 {
    %c0_i32 = arith.constant 0 : i32
    %c0_i32_0 = arith.constant 0 : i32
    return %c0_i32 : i32
  }
  func.func @transform_3(%arg0: i32) -> i32 {
    %c0_i32 = arith.constant 0 : i32
    %c0_i32_0 = arith.constant 0 : i32
    return %c0_i32 : i32
  }
  func.func @transform_4(%arg0: i32) -> (i32, i32, i32) {
    %c0_i32 = arith.constant 0 : i32
    %c0_i32_0 = arith.constant 0 : i32
    %c0_i32_1 = arith.constant 0 : i32
    return %c0_i32, %arg0, %c0_i32_0 : i32, i32, i32
  }
  func.func @transform_5(%arg0: i32) -> (i32, i32, i32) {
    %c0_i32 = arith.constant 0 : i32
    %c0_i32_0 = arith.constant 0 : i32
    %c0_i32_1 = arith.constant 0 : i32
    return %c0_i32, %arg0, %c0_i32_0 : i32, i32, i32
  }
  func.func @transform_6(%arg0: i32) -> (i32, i32, i32) {
    %c0_i32 = arith.constant 0 : i32
    %c0_i32_0 = arith.constant 0 : i32
    %c0_i32_1 = arith.constant 0 : i32
    return %c0_i32, %arg0, %c0_i32_0 : i32, i32, i32
  }
}

</mosaic_0001>

<llo_original>
// kernel: tpu_custom_call.1
$region0: #{tpu_custom_call.1}
  #allocation0 [shape = 'u32[]', space=smem, size = 0x4, offset = 0x4, fixed_abs, tag = 'smem constant byte address 0x4 - core index']
  #allocation1 [shape = 'u32[144,128]{1,0:T(1,128)}', space=vmem, size = 0x12000, scoped, tag = 'internal scratch']
  %s0 = inlined_call_operand.hbm [shape: f32[6,8,128], index: 0, kind: input, shape index: {}]
  %s1 = inlined_call_operand.vmem [shape: f32[36], index: 1, kind: input, shape index: {}]
  %s2 = inlined_call_operand.vmem [shape: f32[36], index: 2, kind: input, shape index: {}]
  %s3 = inlined_call_operand.vmem [shape: f32[48], index: 3, kind: input, shape index: {}]
  %s4 = inlined_call_operand.hbm [shape: f32[32,8,128], index: 4, kind: output, shape index: {0}]
  %s5 = inlined_call_operand.hbm [shape: f32[18,8,128], index: 5, kind: output, shape index: {1}]
  %s6 = inlined_call_operand.hbm [shape: f32[18,8,128], index: 6, kind: output, shape index: {2}]
  %7 = xla_tuple %s4, %s5, %s6
  %s8 = sld [smem:[#allocation0]]
  $region58: #{tpu_custom_call.1} parent=0
    _
  %s10 = ssub.s32 1, %s8
  %s11 = scalar_select 0, %s10, %s8
  $region1: #{tpu_custom_call.1} parent=0
    #allocation2 [shape = 'u8[24576]{0}', space=vmem, size = 0x6000, scoped, tag = 'input window, operand 0, single buffered']
    #allocation3 [shape = 's32[1]{0}', space=sflag, size = 0x4, scoped, tag = 'scoped memory for tpu_custom_call.1']
    #allocation4 [shape = 's32[1]{0}', space=sflag, size = 0x4, scoped, tag = 'scoped memory for tpu_custom_call.1']
    #allocation5 [shape = 's32[1]{0}', space=sflag, size = 0x4, scoped, tag = 'scoped memory for tpu_custom_call.1']
    #allocation6 [shape = 'u8[512]{0}', space=smem, size = 0x200, scoped, tag = 'input window, operand 1, single buffered']
    #allocation7 [shape = 'u8[512]{0}', space=smem, size = 0x200, scoped, tag = 'input window, operand 2, single buffered']
    #allocation8 [shape = 's32[1]{0}', space=sflag, size = 0x4, scoped, tag = 'scoped memory for tpu_custom_call.1']
    #allocation9 [shape = 'u8[512]{0}', space=smem, size = 0x200, scoped, tag = 'input window, operand 3, single buffered']
    #allocation10 [shape = 'u8[131072]{0}', space=vmem, size = 0x20000, scoped, tag = 'output window, operand 0, single buffered']
    #allocation11 [shape = 'u8[73728]{0}', space=vmem, size = 0x12000, scoped, tag = 'output window, operand 1, single buffered']
    #allocation12 [shape = 's32[1]{0}', space=sflag, size = 0x4, scoped, tag = 'scoped memory for tpu_custom_call.1']
    #allocation13 [shape = 'u8[73728]{0}', space=vmem, size = 0x12000, scoped, tag = 'output window, operand 2, single buffered']
    %12 = vsyncpa [#allocation3], 0
    %13 = vsyncpa [#allocation5], 0
    %14 = vsyncpa [#allocation8], 0
    %15 = vsyncpa [#allocation4], 0
    %16 = vsyncpa [#allocation12], 0
    // Predicated region
    $region2: #{tpu_custom_call.1} parent=1 // pred_check
      _
    $region3: #{tpu_custom_call.1} parent=1 // pred_check_branch
      %18 = sbr.rel (0) target = $region5
    $region4: #{tpu_custom_call.1} parent=1 // pred_region
      %s20 = ssub.s32 768, 768
      %21 = vsyncadd [#allocation3], %s20
      %s22 = sshll.u32 [#allocation2], 4
      %s23 = int_to_ptr.vmem [resolvable:$true] %s22
      %28 = dma.hbm_to_vmem [thread:$0]  %s0, 768, %s23, [#allocation3], 128, 128, 8
    $region5: #{tpu_custom_call.1} parent=1 // pred_fallthru
      _
    // Predicated region
    $region6: #{tpu_custom_call.1} parent=1 // pred_check
      _
    $region7: #{tpu_custom_call.1} parent=1 // pred_check_branch
      %30 = sbr.rel (0) target = $region9
    $region8: #{tpu_custom_call.1} parent=1 // pred_region
      %s32 = ssub.s32 16, 16
      %33 = vsyncadd [#allocation5], %s32
      %s35 = sshll.u32 %s1, 4
      %s36 = int_to_ptr.vmem [resolvable:$true] %s35
      %38 = dma.vmem_to_smem %s36, 16, [#allocation6], [#allocation5]
    $region9: #{tpu_custom_call.1} parent=1 // pred_fallthru
      _
    // Predicated region
    $region10: #{tpu_custom_call.1} parent=1 // pred_check
      _
    $region11: #{tpu_custom_call.1} parent=1 // pred_check_branch
      %40 = sbr.rel (0) target = $region13
    $region12: #{tpu_custom_call.1} parent=1 // pred_region
      %s42 = ssub.s32 16, 16
      %43 = vsyncadd [#allocation8], %s42
      %s45 = sshll.u32 %s2, 4
      %s46 = int_to_ptr.vmem [resolvable:$true] %s45
      %48 = dma.vmem_to_smem %s46, 16, [#allocation7], [#allocation8]
    $region13: #{tpu_custom_call.1} parent=1 // pred_fallthru
      _
    // Predicated region
    $region14: #{tpu_custom_call.1} parent=1 // pred_check
      _
    $region15: #{tpu_custom_call.1} parent=1 // pred_check_branch
      %50 = sbr.rel (0) target = $region17
    $region16: #{tpu_custom_call.1} parent=1 // pred_region
      %s52 = ssub.s32 16, 16
      %53 = vsyncadd [#allocation8], %s52
      %s55 = sshll.u32 %s3, 4
      %s56 = int_to_ptr.vmem [resolvable:$true] %s55
      %58 = dma.vmem_to_smem %s56, 16, [#allocation9], [#allocation8]
    $region17: #{tpu_custom_call.1} parent=1 // pred_fallthru
      _
    // Predicated region
    $region18: #{tpu_custom_call.1} parent=1 // pred_check
      _
    $region19: #{tpu_custom_call.1} parent=1 // pred_check_branch
      %60 = sbr.rel (0) target = $region21
    $region20: #{tpu_custom_call.1} parent=1 // pred_region
      %61 = dma.done [#allocation3], 768
    $region21: #{tpu_custom_call.1} parent=1 // pred_fallthru
      _
    // Predicated region
    $region22: #{tpu_custom_call.1} parent=1 // pred_check
      _
    $region23: #{tpu_custom_call.1} parent=1 // pred_check_branch
      %63 = sbr.rel (0) target = $region25
    $region24: #{tpu_custom_call.1} parent=1 // pred_region
      %64 = dma.done [#allocation5], 16
    $region25: #{tpu_custom_call.1} parent=1 // pred_fallthru
      _
    // Predicated region
    $region26: #{tpu_custom_call.1} parent=1 // pred_check
      _
    $region27: #{tpu_custom_call.1} parent=1 // pred_check_branch
      %66 = sbr.rel (0) target = $region29
    $region28: #{tpu_custom_call.1} parent=1 // pred_region
      %67 = dma.done [#allocation8], 16
    $region29: #{tpu_custom_call.1} parent=1 // pred_fallthru
      _
    // Predicated region
    $region30: #{tpu_custom_call.1} parent=1 // pred_check
      _
    $region31: #{tpu_custom_call.1} parent=1 // pred_check_branch
      %69 = sbr.rel (0) target = $region33
    $region32: #{tpu_custom_call.1} parent=1 // pred_region
      %70 = dma.done [#allocation8], 16
    $region33: #{tpu_custom_call.1} parent=1 // pred_fallthru
      _
    %71 = sfence
    %v72 = vld [vmem:[#allocation2] sm:$0xff]
    %s73 = scalar_lea.vmem [#allocation2], 8
    %v74 = vld [vmem:[%s73] sm:$0xff]
    %s75 = sld [smem:[#allocation6]]
    %s76 = sld [smem:[#allocation6 + $0x1]]
    %s77 = sld [smem:[#allocation6 + $0x2]]
    %s78 = sld [smem:[#allocation6 + $0x3]]
    %s79 = sld [smem:[#allocation6 + $0x4]]
    %s80 = sld [smem:[#allocation6 + $0x5]]
    %s81 = sld [smem:[#allocation6 + $0x6]]
    %s82 = sld [smem:[#allocation6 + $0x7]]
    %s83 = sld [smem:[#allocation6 + $0x8]]
    %s84 = sld [smem:[#allocation6 + $0x9]]
    %s85 = sld [smem:[#allocation6 + $0xa]]
    %s86 = sld [smem:[#allocation6 + $0xb]]
    %s87 = sld [smem:[#allocation7]]
    %s88 = sld [smem:[#allocation7 + $0x1]]
    %s89 = sld [smem:[#allocation7 + $0x2]]
    %s90 = sld [smem:[#allocation7 + $0x3]]
    %s91 = sld [smem:[#allocation7 + $0x4]]
    %s92 = sld [smem:[#allocation7 + $0x5]]
    %s93 = sld [smem:[#allocation7 + $0x6]]
    %s94 = sld [smem:[#allocation7 + $0x7]]
    %s95 = sld [smem:[#allocation7 + $0x8]]
    %s96 = sld [smem:[#allocation7 + $0x9]]
    %s97 = sld [smem:[#allocation7 + $0xa]]
    %s98 = sld [smem:[#allocation7 + $0xb]]
    %v99 = vstv %s75
    %v100 = vstv %s76
    %v101 = vmul.f32 %v100, 0.0
    %v102 = vadd.f32 %v99, %v101
    %v103 = vstv %s77
    %v104 = vmul.f32 %v103, 0.0
    %v105 = vadd.f32 %v102, %v104
    %v106 = vmul.f32 %v99, 0.0
    %v107 = vadd.f32 %v106, %v100
    %v108 = vadd.f32 %v107, %v104
    %v109 = vadd.f32 %v106, %v101
    %v110 = vadd.f32 %v109, %v103
    %v111 = vsub.f32 %v104, %v101
    %v112 = vsub.f32 %v106, %v104
    %v113 = vsub.f32 %v101, %v106
    %v114 = vstv %s78
    %v115 = vsub.f32 %v114, %v111
    %v116 = vstv %s79
    %v117 = vsub.f32 %v116, %v112
    %v118 = vstv %s80
    %v119 = vsub.f32 %v118, %v113
    %v120 = vmul.f32 %v117, 0.0
    %v121 = vadd.f32 %v115, %v120
    %v122 = vmul.f32 %v119, 0.0
    %v123 = vadd.f32 %v121, %v122
    %v124 = vmul.f32 %v115, 0.0
    %v125 = vadd.f32 %v124, %v117
    %v126 = vadd.f32 %v125, %v122
    %v127 = vadd.f32 %v124, %v120
    %v128 = vadd.f32 %v127, %v119
    %129 = vst [vmem:[#allocation11] sm:$0xff] %v105
    %v130 = vmul.f32 %v105, %v123
    %v131 = vsub.f32 1.0, %v130
    %v132 = vmul.f32 %v131, %v123
    %s133 = scalar_lea.vmem [#allocation11], 24
    %134 = vst [vmem:[%s133] sm:$0xff] %v132
    %s135 = scalar_lea.vmem [#allocation11], 8
    %136 = vst [vmem:[%s135] sm:$0xff] %v108
    %v137 = vmul.f32 %v108, %v126
    %v138 = vsub.f32 1.0, %v137
    %v139 = vmul.f32 %v138, %v126
    %s140 = scalar_lea.vmem [#allocation11], 32
    %141 = vst [vmem:[%s140] sm:$0xff] %v139
    %s142 = scalar_lea.vmem [#allocation11], 16
    %143 = vst [vmem:[%s142] sm:$0xff] %v110
    %v144 = vmul.f32 %v110, %v128
    %v145 = vsub.f32 1.0, %v144
    %v146 = vmul.f32 %v145, %v128
    %s147 = scalar_lea.vmem [#allocation11], 40
    %148 = vst [vmem:[%s147] sm:$0xff] %v146
    %v149 = vstv %s81
    %v150 = vmul.f32 %v149, %v72
    %v151 = vand.u32 2147483647, %v150
    %vm152 = vcmp.le.f32.partialorder %v151, 0.7853982
    %vm153 = vcmp.lt.s32.totalorder %v150, 0
    %v154 = vand.u32 %v150, 2139095040
    %v155 = vshrl.u32 %v154, 23
    %v156 = vsub.s32 %v155, 127
    %v157 = vand.u32 2147483647, %v150
    %v158 = vand.u32 %v157, 8388607
    %v159 = vor.u32 %v158, 8388608
    %v160 = vsub.s32 0, %v159
    %v161 = vadd.s32 %v156, 1
    %vm162 = vcmp.gt.s32.totalorder %v161, 0
    %v163 = vsel %vm162, %v161, 0
    %v164 = vshrl.u32 %v163, 5
    %v165 = vand.u32 %v163, 31
    %v166 = vsub.s32 32, %v165
    %v167 = vshrl.u32 683565275, %v166
    %v168 = vshll.u32 683565275, %v165
    %v169 = vshrl.u32 2475754826, %v166
    %v170 = vor.u32 %v168, %v169
    %v171 = vshll.u32 2475754826, %v165
    %v172 = vshrl.u32 2131351028, %v166
    %v173 = vor.u32 %v171, %v172
    %v174 = vshll.u32 2131351028, %v165
    %v175 = vshrl.u32 2102212464, %v166
    %v176 = vor.u32 %v174, %v175
    %v177 = vshll.u32 2102212464, %v165
    %v178 = vshrl.u32 920167782, %v166
    %v179 = vor.u32 %v177, %v178
    %v180 = vshll.u32 920167782, %v165
    %v181 = vshrl.u32 1326507024, %v166
    %v182 = vor.u32 %v180, %v181
    %vm183 = vcmp.lt.s32.totalorder %v164, 1
    %vm184 = vcmp.lt.s32.totalorder %v164, 2
    %vm185 = vcmp.lt.s32.totalorder %v164, 3
    %vm186 = vcmp.lt.s32.totalorder %v164, 4
    %v187 = vsel %vm183, %v167, %v170
    %v188 = vsel %vm186, %v176, 2102212464
    %v189 = vsel %vm185, %v173, %v188
    %v190 = vsel %vm184, %v187, %v189
    %v191 = vsel %vm183, %v170, %v173
    %v192 = vsel %vm186, %v179, 920167782
    %v193 = vsel %vm185, %v176, %v192
    %v194 = vsel %vm184, %v191, %v193
    %v195 = vsel %vm183, %v173, %v176
    %v196 = vsel %vm186, %v182, 1326507024
    %v197 = vsel %vm185, %v179, %v196
    %v198 = vsel %vm184, %v195, %v197
    %v199 = vshll.u32 %v159, 8
    %v200 = vmul.u32.u64.compose %v199, %v198
    %v201 = vextract.low.u32 %v200
    %v202 = vextract.high.u32 %v200
    %v203 = vmul.u32.u64.compose %v199, %v194
    %v204 = vextract.low.u32 %v203
    %v205 = vextract.high.u32 %v203
    %v206 = vmul.u32 %v199, %v190
    %v207 = vadd.s32 %v202, %v204
    %vm208 = vc.u32 %v202, %v204
    %v209 = vadd.s32 %v205, 1
    %v210 = vsel %vm208, %v209, %v205
    %v211 = vadd.s32 %v206, %v210
    %v212 = vadd.s32 %v211, 536870912
    %v213 = vshrl.u32 %v212, 30
    %v214 = vshll.u32 %v213, 30
    %v215 = vsub.s32 %v211, %v214
    %vm216 = vcmp.lt.s32.totalorder %v215, 0
    %v217 = vsub.s32 0, %v215
    %v218 = vsel %vm216, %v217, %v215
    %v219 = vclz %v218
    %v220 = vsub.s32 %v219, 2
    %vm221 = vcmp.gt.s32.totalorder 0, %v220
    %v222 = vsel %vm221, 0, %v220
    %v223 = vsub.s32 32, %v222
    %v224 = vshll.u32 %v215, %v222
    %v225 = vshrl.u32 %v207, %v223
    %v226 = vor.u32 %v224, %v225
    %v227 = vsub.s32 4294967266, %v222
    %v228 = vadd.s32 %v227, 127
    %v229 = vshll.u32 %v228, 23
    %v230 = vor.u32 4788187, %v229
    %v231 = vand.u32 2147483647, %v230
    %v233 = vcvt.s32.f32 %v226
    %v234 = vmul.f32 %v233, %v231
    %v235 = vxor.u32 %v234, 2147483648
    %v236 = vsel %vm153, %v235, %v234
    %v237 = vsub.s32 4, %v213
    %v238 = vsel %vm153, %v237, %v213
    %v239 = vsel %vm152, %v150, %v236
    %v240 = vsel %vm152, 0, %v238
    %v241 = vcosq.f32.pop %v239
    %v242 = vsinq.f32.pop %v239
    %vm243 = vweird.f32 %v150
    %v244 = vadd.s32 %v240, 3
    %v245 = vand.u32 %v244, 3
    %vm246 = vcmp.lt.s32.totalorder %v245, 2
    %vm247 = vcmp.eq.s32.totalorder %v245, 0
    %v248 = vxor.u32 %v242, 2147483648
    %v249 = vsel %vm247, %v241, %v248
    %vm250 = vcmp.eq.s32.totalorder %v245, 2
    %v251 = vxor.u32 %v241, 2147483648
    %v252 = vsel %vm250, %v251, %v242
    %v253 = vsel %vm246, %v249, %v252
    %v254 = vsel %vm243, nan, %v253
    %v255 = vand.u32 2147483647, %v150
    %vm256 = vcmp.le.f32.partialorder %v255, 0.7853982
    %vm257 = vcmp.lt.s32.totalorder %v150, 0
    %v258 = vand.u32 %v150, 2139095040
    %v259 = vshrl.u32 %v258, 23
    %v260 = vsub.s32 %v259, 127
    %v261 = vand.u32 2147483647, %v150
    %v262 = vand.u32 %v261, 8388607
    %v263 = vor.u32 %v262, 8388608
    %v264 = vsub.s32 0, %v263
    %v265 = vadd.s32 %v260, 1
    %vm266 = vcmp.gt.s32.totalorder %v265, 0
    %v267 = vsel %vm266, %v265, 0
    %v268 = vshrl.u32 %v267, 5
    %v269 = vand.u32 %v267, 31
    %v270 = vsub.s32 32, %v269
    %v271 = vshrl.u32 683565275, %v270
    %v272 = vshll.u32 683565275, %v269
    %v273 = vshrl.u32 2475754826, %v270
    %v274 = vor.u32 %v272, %v273
    %v275 = vshll.u32 2475754826, %v269
    %v276 = vshrl.u32 2131351028, %v270
    %v277 = vor.u32 %v275, %v276
    %v278 = vshll.u32 2131351028, %v269
    %v279 = vshrl.u32 2102212464, %v270
    %v280 = vor.u32 %v278, %v279
    %v281 = vshll.u32 2102212464, %v269
    %v282 = vshrl.u32 920167782, %v270
    %v283 = vor.u32 %v281, %v282
    %v284 = vshll.u32 920167782, %v269
    %v285 = vshrl.u32 1326507024, %v270
    %v286 = vor.u32 %v284, %v285
    %vm287 = vcmp.lt.s32.totalorder %v268, 1
    %vm288 = vcmp.lt.s32.totalorder %v268, 2
    %vm289 = vcmp.lt.s32.totalorder %v268, 3
    %vm290 = vcmp.lt.s32.totalorder %v268, 4
    %v291 = vsel %vm287, %v271, %v274
    %v292 = vsel %vm290, %v280, 2102212464
    %v293 = vsel %vm289, %v277, %v292
    %v294 = vsel %vm288, %v291, %v293
    %v295 = vsel %vm287, %v274, %v277
    %v296 = vsel %vm290, %v283, 920167782
    %v297 = vsel %vm289, %v280, %v296
    %v298 = vsel %vm288, %v295, %v297
    %v299 = vsel %vm287, %v277, %v280
    %v300 = vsel %vm290, %v286, 1326507024
    %v301 = vsel %vm289, %v283, %v300
    %v302 = vsel %vm288, %v299, %v301
    %v303 = vshll.u32 %v263, 8
    %v304 = vmul.u32.u64.compose %v303, %v302
    %v305 = vextract.low.u32 %v304
    %v306 = vextract.high.u32 %v304
    %v307 = vmul.u32.u64.compose %v303, %v298
    %v308 = vextract.low.u32 %v307
    %v309 = vextract.high.u32 %v307
    %v310 = vmul.u32 %v303, %v294
    %v311 = vadd.s32 %v306, %v308
    %vm312 = vc.u32 %v306, %v308
    %v313 = vadd.s32 %v309, 1
    %v314 = vsel %vm312, %v313, %v309
    %v315 = vadd.s32 %v310, %v314
    %v316 = vadd.s32 %v315, 536870912
    %v317 = vshrl.u32 %v316, 30
    %v318 = vshll.u32 %v317, 30
    %v319 = vsub.s32 %v315, %v318
    %vm320 = vcmp.lt.s32.totalorder %v319, 0
    %v321 = vsub.s32 0, %v319
    %v322 = vsel %vm320, %v321, %v319
    %v323 = vclz %v322
    %v324 = vsub.s32 %v323, 2
    %vm325 = vcmp.gt.s32.totalorder 0, %v324
    %v326 = vsel %vm325, 0, %v324
    %v327 = vsub.s32 32, %v326
    %v328 = vshll.u32 %v319, %v326
    %v329 = vshrl.u32 %v311, %v327
    %v330 = vor.u32 %v328, %v329
    %v331 = vsub.s32 4294967266, %v326
    %v332 = vadd.s32 %v331, 127
    %v333 = vshll.u32 %v332, 23
    %v334 = vor.u32 4788187, %v333
    %v335 = vand.u32 2147483647, %v334
    %v337 = vcvt.s32.f32 %v330
    %v338 = vmul.f32 %v337, %v335
    %v339 = vxor.u32 %v338, 2147483648
    %v340 = vsel %vm257, %v339, %v338
    %v341 = vsub.s32 4, %v317
    %v342 = vsel %vm257, %v341, %v317
    %v343 = vsel %vm256, %v150, %v340
    %v344 = vsel %vm256, 0, %v342
    %v345 = vcosq.f32.pop %v343
    %v346 = vsinq.f32.pop %v343
    %vm347 = vweird.f32 %v150
    %v348 = vand.u32 %v344, 3
    %vm349 = vcmp.lt.s32.totalorder %v348, 2
    %vm350 = vcmp.eq.s32.totalorder %v348, 0
    %v351 = vxor.u32 %v346, 2147483648
    %v352 = vsel %vm350, %v345, %v351
    %vm353 = vcmp.eq.s32.totalorder %v348, 2
    %v354 = vxor.u32 %v345, 2147483648
    %v355 = vsel %vm353, %v354, %v346
    %v356 = vsel %vm349, %v352, %v355
    %v357 = vsel %vm347, nan, %v356
    %v358 = vmul.f32 %v72, %v72
    %v359 = vstv %s82
    %v360 = vmul.f32 %v254, %v359
    %v361 = vstv %s86
    %v362 = vmul.f32 %v361, %v72
    %v363 = vadd.f32 %v360, %v362
    %v364 = vsub.f32 1.0, %v357
    %v365 = vstv %s83
    %v366 = vmul.f32 %v364, %v365
    %v367 = vmul.f32 %v358, 0.5
    %v368 = vmul.f32 %v361, %v367
    %v369 = vadd.f32 %v366, %v368
    %v370 = vsub.f32 %v150, %v254
    %v371 = vstv %s84
    %v372 = vmul.f32 %v370, %v371
    %v373 = vmul.f32 %v358, %v72
    %v374 = vmul.f32 %v373, 0.16666667
    %v375 = vmul.f32 %v361, %v374
    %v376 = vadd.f32 %v372, %v375
    %s377 = ssub.f32 0.0, %s77
    %s378 = ssub.f32 0.0, %s75
    %s379 = ssub.f32 0.0, %s76
    %s380 = smul.f32 %s75, %s75
    %s381 = ssub.f32 %s380, %s85
    %s382 = smul.f32 %s75, %s76
    %s383 = smul.f32 %s75, %s77
    %s384 = smul.f32 %s76, %s76
    %s385 = ssub.f32 %s384, %s85
    %s386 = smul.f32 %s76, %s77
    %s387 = smul.f32 %s77, %s77
    %s388 = ssub.f32 %s387, %s85
    %s389 = smul.f32 %s76, %s80
    %s390 = smul.f32 %s77, %s79
    %s391 = ssub.f32 %s389, %s390
    %s392 = smul.f32 %s77, %s78
    %s393 = smul.f32 %s75, %s80
    %s394 = ssub.f32 %s392, %s393
    %s395 = smul.f32 %s75, %s79
    %s396 = smul.f32 %s76, %s78
    %s397 = ssub.f32 %s395, %s396
    %s398 = smul.f32 %s76, %s397
    %s399 = smul.f32 %s77, %s394
    %s400 = ssub.f32 %s398, %s399
    %s401 = smul.f32 %s77, %s391
    %s402 = smul.f32 %s75, %s397
    %s403 = ssub.f32 %s401, %s402
    %s404 = smul.f32 %s75, %s394
    %s405 = smul.f32 %s76, %s391
    %s406 = ssub.f32 %s404, %s405
    %v407 = vstv %s381
    %v408 = vmul.f32 %v369, %v407
    %v409 = vadd.f32 %v408, 1.0
    %v410 = vstv %s377
    %v411 = vmul.f32 %v363, %v410
    %v412 = vstv %s382
    %v413 = vmul.f32 %v369, %v412
    %v414 = vadd.f32 %v411, %v413
    %v415 = vmul.f32 %v363, %v100
    %v416 = vstv %s383
    %v417 = vmul.f32 %v369, %v416
    %v418 = vadd.f32 %v415, %v417
    %v419 = vmul.f32 %v363, %v103
    %v420 = vadd.f32 %v419, %v413
    %v421 = vstv %s385
    %v422 = vmul.f32 %v369, %v421
    %v423 = vadd.f32 %v422, 1.0
    %v424 = vstv %s378
    %v425 = vmul.f32 %v363, %v424
    %v426 = vstv %s386
    %v427 = vmul.f32 %v369, %v426
    %v428 = vadd.f32 %v425, %v427
    %v429 = vstv %s379
    %v430 = vmul.f32 %v363, %v429
    %v431 = vadd.f32 %v430, %v417
    %v432 = vmul.f32 %v363, %v99
    %v433 = vadd.f32 %v432, %v427
    %v434 = vstv %s388
    %v435 = vmul.f32 %v369, %v434
    %v436 = vadd.f32 %v435, 1.0
    %v437 = vmul.f32 %v72, %v114
    %v438 = vstv %s391
    %v439 = vmul.f32 %v369, %v438
    %v440 = vadd.f32 %v437, %v439
    %v441 = vstv %s400
    %v442 = vmul.f32 %v376, %v441
    %v443 = vadd.f32 %v440, %v442
    %v444 = vmul.f32 %v72, %v116
    %v445 = vstv %s394
    %v446 = vmul.f32 %v369, %v445
    %v447 = vadd.f32 %v444, %v446
    %v448 = vstv %s403
    %v449 = vmul.f32 %v376, %v448
    %v450 = vadd.f32 %v447, %v449
    %v451 = vmul.f32 %v72, %v118
    %v452 = vstv %s397
    %v453 = vmul.f32 %v369, %v452
    %v454 = vadd.f32 %v451, %v453
    %v455 = vstv %s406
    %v456 = vmul.f32 %v376, %v455
    %v457 = vadd.f32 %v454, %v456
    %v458 = vmul.f32 %v420, 0.0
    %v459 = vadd.f32 %v409, %v458
    %v460 = vmul.f32 %v431, 0.0
    %v461 = vadd.f32 %v459, %v460
    %v462 = vmul.f32 %v423, 0.0
    %v463 = vadd.f32 %v414, %v462
    %v464 = vmul.f32 %v433, 0.0
    %v465 = vadd.f32 %v463, %v464
    %v466 = vmul.f32 %v428, 0.0
    %v467 = vadd.f32 %v418, %v466
    %v468 = vmul.f32 %v436, 0.0
    %v469 = vadd.f32 %v467, %v468
    %v470 = vmul.f32 %v409, 0.0
    %v471 = vadd.f32 %v470, %v420
    %v472 = vadd.f32 %v471, %v460
    %v473 = vmul.f32 %v414, 0.0
    %v474 = vadd.f32 %v473, %v423
    %v475 = vadd.f32 %v474, %v464
    %v476 = vmul.f32 %v418, 0.0
    %v477 = vadd.f32 %v476, %v428
    %v478 = vadd.f32 %v477, %v468
    %v479 = vadd.f32 %v470, %v458
    %v480 = vadd.f32 %v479, %v431
    %v481 = vadd.f32 %v473, %v462
    %v482 = vadd.f32 %v481, %v433
    %v483 = vadd.f32 %v476, %v466
    %v484 = vadd.f32 %v483, %v436
    %v485 = vmul.f32 %v450, 0.0
    %v486 = vadd.f32 %v443, %v485
    %v487 = vmul.f32 %v457, 0.0
    %v488 = vadd.f32 %v486, %v487
    %v489 = vadd.f32 %v488, 0.0
    %v490 = vmul.f32 %v443, 0.0
    %v491 = vadd.f32 %v490, %v450
    %v492 = vadd.f32 %v491, %v487
    %v493 = vadd.f32 %v492, 0.0
    %v494 = vadd.f32 %v490, %v485
    %v495 = vadd.f32 %v494, %v457
    %v496 = vadd.f32 %v495, 0.0
    %v497 = vstv %s89
    %v498 = vmul.f32 %v493, %v497
    %v499 = vstv %s88
    %v500 = vmul.f32 %v496, %v499
    %v501 = vsub.f32 %v498, %v500
    %v502 = vstv %s87
    %v503 = vmul.f32 %v496, %v502
    %v504 = vmul.f32 %v489, %v497
    %v505 = vsub.f32 %v503, %v504
    %v506 = vmul.f32 %v489, %v499
    %v507 = vmul.f32 %v493, %v502
    %v508 = vsub.f32 %v506, %v507
    %v509 = vstv %s90
    %v510 = vsub.f32 %v509, %v501
    %v511 = vstv %s91
    %v512 = vsub.f32 %v511, %v505
    %v513 = vstv %s92
    %v514 = vsub.f32 %v513, %v508
    %v515 = vmul.f32 %v461, %v510
    %v516 = vmul.f32 %v472, %v512
    %v517 = vadd.f32 %v515, %v516
    %v518 = vmul.f32 %v480, %v514
    %v519 = vadd.f32 %v517, %v518
    %v520 = vmul.f32 %v465, %v510
    %v521 = vmul.f32 %v475, %v512
    %v522 = vadd.f32 %v520, %v521
    %v523 = vmul.f32 %v482, %v514
    %v524 = vadd.f32 %v522, %v523
    %v525 = vmul.f32 %v469, %v510
    %v526 = vmul.f32 %v478, %v512
    %v527 = vadd.f32 %v525, %v526
    %v528 = vmul.f32 %v484, %v514
    %v529 = vadd.f32 %v527, %v528
    %530 = vst [vmem:[#allocation13] sm:$0xff] 0.0
    %s531 = scalar_lea.vmem [#allocation13], 24
    %532 = vst [vmem:[%s531] sm:$0xff] %v519
    %s533 = scalar_lea.vmem [#allocation13], 8
    %534 = vst [vmem:[%s533] sm:$0xff] 0.0
    %s535 = scalar_lea.vmem [#allocation13], 32
    %536 = vst [vmem:[%s535] sm:$0xff] %v524
    %s537 = scalar_lea.vmem [#allocation13], 16
    %538 = vst [vmem:[%s537] sm:$0xff] 0.0
    %s539 = scalar_lea.vmem [#allocation13], 40
    %540 = vst [vmem:[%s539] sm:$0xff] %v529
    %v541 = vstv %s93
    %v542 = vmul.f32 %v541, %v74
    %v543 = vand.u32 2147483647, %v542
    %vm544 = vcmp.le.f32.partialorder %v543, 0.7853982
    %vm545 = vcmp.lt.s32.totalorder %v542, 0
    %v546 = vand.u32 %v542, 2139095040
    %v547 = vshrl.u32 %v546, 23
    %v548 = vsub.s32 %v547, 127
    %v549 = vand.u32 2147483647, %v542
    %v550 = vand.u32 %v549, 8388607
    %v551 = vor.u32 %v550, 8388608
    %v552 = vsub.s32 0, %v551
    %v553 = vadd.s32 %v548, 1
    %vm554 = vcmp.gt.s32.totalorder %v553, 0
    %v555 = vsel %vm554, %v553, 0
    %v556 = vshrl.u32 %v555, 5
    %v557 = vand.u32 %v555, 31
    %v558 = vsub.s32 32, %v557
    %v559 = vshrl.u32 683565275, %v558
    %v560 = vshll.u32 683565275, %v557
    %v561 = vshrl.u32 2475754826, %v558
    %v562 = vor.u32 %v560, %v561
    %v563 = vshll.u32 2475754826, %v557
    %v564 = vshrl.u32 2131351028, %v558
    %v565 = vor.u32 %v563, %v564
    %v566 = vshll.u32 2131351028, %v557
    %v567 = vshrl.u32 2102212464, %v558
    %v568 = vor.u32 %v566, %v567
    %v569 = vshll.u32 2102212464, %v557
    %v570 = vshrl.u32 920167782, %v558
    %v571 = vor.u32 %v569, %v570
    %v572 = vshll.u32 920167782, %v557
    %v573 = vshrl.u32 1326507024, %v558
    %v574 = vor.u32 %v572, %v573
    %vm575 = vcmp.lt.s32.totalorder %v556, 1
    %vm576 = vcmp.lt.s32.totalorder %v556, 2
    %vm577 = vcmp.lt.s32.totalorder %v556, 3
    %vm578 = vcmp.lt.s32.totalorder %v556, 4
    %v579 = vsel %vm575, %v559, %v562
    %v580 = vsel %vm578, %v568, 2102212464
    %v581 = vsel %vm577, %v565, %v580
    %v582 = vsel %vm576, %v579, %v581
    %v583 = vsel %vm575, %v562, %v565
    %v584 = vsel %vm578, %v571, 920167782
    %v585 = vsel %vm577, %v568, %v584
    %v586 = vsel %vm576, %v583, %v585
    %v587 = vsel %vm575, %v565, %v568
    %v588 = vsel %vm578, %v574, 1326507024
    %v589 = vsel %vm577, %v571, %v588
    %v590 = vsel %vm576, %v587, %v589
    %v591 = vshll.u32 %v551, 8
    %v592 = vmul.u32.u64.compose %v591, %v590
    %v593 = vextract.low.u32 %v592
    %v594 = vextract.high.u32 %v592
    %v595 = vmul.u32.u64.compose %v591, %v586
    %v596 = vextract.low.u32 %v595
    %v597 = vextract.high.u32 %v595
    %v598 = vmul.u32 %v591, %v582
    %v599 = vadd.s32 %v594, %v596
    %vm600 = vc.u32 %v594, %v596
    %v601 = vadd.s32 %v597, 1
    %v602 = vsel %vm600, %v601, %v597
    %v603 = vadd.s32 %v598, %v602
    %v604 = vadd.s32 %v603, 536870912
    %v605 = vshrl.u32 %v604, 30
    %v606 = vshll.u32 %v605, 30
    %v607 = vsub.s32 %v603, %v606
    %vm608 = vcmp.lt.s32.totalorder %v607, 0
    %v609 = vsub.s32 0, %v607
    %v610 = vsel %vm608, %v609, %v607
    %v611 = vclz %v610
    %v612 = vsub.s32 %v611, 2
    %vm613 = vcmp.gt.s32.totalorder 0, %v612
    %v614 = vsel %vm613, 0, %v612
    %v615 = vsub.s32 32, %v614
    %v616 = vshll.u32 %v607, %v614
    %v617 = vshrl.u32 %v599, %v615
    %v618 = vor.u32 %v616, %v617
    %v619 = vsub.s32 4294967266, %v614
    %v620 = vadd.s32 %v619, 127
    %v621 = vshll.u32 %v620, 23
    %v622 = vor.u32 4788187, %v621
    %v623 = vand.u32 2147483647, %v622
    %v625 = vcvt.s32.f32 %v618
    %v626 = vmul.f32 %v625, %v623
    %v627 = vxor.u32 %v626, 2147483648
    %v628 = vsel %vm545, %v627, %v626
    %v629 = vsub.s32 4, %v605
    %v630 = vsel %vm545, %v629, %v605
    %v631 = vsel %vm544, %v542, %v628
    %v632 = vsel %vm544, 0, %v630
    %v633 = vcosq.f32.pop %v631
    %v634 = vsinq.f32.pop %v631
    %vm635 = vweird.f32 %v542
    %v636 = vadd.s32 %v632, 3
    %v637 = vand.u32 %v636, 3
    %vm638 = vcmp.lt.s32.totalorder %v637, 2
    %vm639 = vcmp.eq.s32.totalorder %v637, 0
    %v640 = vxor.u32 %v634, 2147483648
    %v641 = vsel %vm639, %v633, %v640
    %vm642 = vcmp.eq.s32.totalorder %v637, 2
    %v643 = vxor.u32 %v633, 2147483648
    %v644 = vsel %vm642, %v643, %v634
    %v645 = vsel %vm638, %v641, %v644
    %v646 = vsel %vm635, nan, %v645
    %v647 = vand.u32 2147483647, %v542
    %vm648 = vcmp.le.f32.partialorder %v647, 0.7853982
    %vm649 = vcmp.lt.s32.totalorder %v542, 0
    %v650 = vand.u32 %v542, 2139095040
    %v651 = vshrl.u32 %v650, 23
    %v652 = vsub.s32 %v651, 127
    %v653 = vand.u32 2147483647, %v542
    %v654 = vand.u32 %v653, 8388607
    %v655 = vor.u32 %v654, 8388608
    %v656 = vsub.s32 0, %v655
    %v657 = vadd.s32 %v652, 1
    %vm658 = vcmp.gt.s32.totalorder %v657, 0
    %v659 = vsel %vm658, %v657, 0
    %v660 = vshrl.u32 %v659, 5
    %v661 = vand.u32 %v659, 31
    %v662 = vsub.s32 32, %v661
    %v663 = vshrl.u32 683565275, %v662
    %v664 = vshll.u32 683565275, %v661
    %v665 = vshrl.u32 2475754826, %v662
    %v666 = vor.u32 %v664, %v665
    %v667 = vshll.u32 2475754826, %v661
    %v668 = vshrl.u32 2131351028, %v662
    %v669 = vor.u32 %v667, %v668
    %v670 = vshll.u32 2131351028, %v661
    %v671 = vshrl.u32 2102212464, %v662
    %v672 = vor.u32 %v670, %v671
    %v673 = vshll.u32 2102212464, %v661
    %v674 = vshrl.u32 920167782, %v662
    %v675 = vor.u32 %v673, %v674
    %v676 = vshll.u32 920167782, %v661
    %v677 = vshrl.u32 1326507024, %v662
    %v678 = vor.u32 %v676, %v677
    %vm679 = vcmp.lt.s32.totalorder %v660, 1
    %vm680 = vcmp.lt.s32.totalorder %v660, 2
    %vm681 = vcmp.lt.s32.totalorder %v660, 3
    %vm682 = vcmp.lt.s32.totalorder %v660, 4
    %v683 = vsel %vm679, %v663, %v666
    %v684 = vsel %vm682, %v672, 2102212464
    %v685 = vsel %vm681, %v669, %v684
    %v686 = vsel %vm680, %v683, %v685
    %v687 = vsel %vm679, %v666, %v669
    %v688 = vsel %vm682, %v675, 920167782
    %v689 = vsel %vm681, %v672, %v688
    %v690 = vsel %vm680, %v687, %v689
    %v691 = vsel %vm679, %v669, %v672
    %v692 = vsel %vm682, %v678, 1326507024
    %v693 = vsel %vm681, %v675, %v692
    %v694 = vsel %vm680, %v691, %v693
    %v695 = vshll.u32 %v655, 8
    %v696 = vmul.u32.u64.compose %v695, %v694
    %v697 = vextract.low.u32 %v696
    %v698 = vextract.high.u32 %v696
    %v699 = vmul.u32.u64.compose %v695, %v690
    %v700 = vextract.low.u32 %v699
    %v701 = vextract.high.u32 %v699
    %v702 = vmul.u32 %v695, %v686
    %v703 = vadd.s32 %v698, %v700
    %vm704 = vc.u32 %v698, %v700
    %v705 = vadd.s32 %v701, 1
    %v706 = vsel %vm704, %v705, %v701
    %v707 = vadd.s32 %v702, %v706
    %v708 = vadd.s32 %v707, 536870912
    %v709 = vshrl.u32 %v708, 30
    %v710 = vshll.u32 %v709, 30
    %v711 = vsub.s32 %v707, %v710
    %vm712 = vcmp.lt.s32.totalorder %v711, 0
    %v713 = vsub.s32 0, %v711
    %v714 = vsel %vm712, %v713, %v711
    %v715 = vclz %v714
    %v716 = vsub.s32 %v715, 2
    %vm717 = vcmp.gt.s32.totalorder 0, %v716
    %v718 = vsel %vm717, 0, %v716
    %v719 = vsub.s32 32, %v718
    %v720 = vshll.u32 %v711, %v718
    %v721 = vshrl.u32 %v703, %v719
    %v722 = vor.u32 %v720, %v721
    %v723 = vsub.s32 4294967266, %v718
    %v724 = vadd.s32 %v723, 127
    %v725 = vshll.u32 %v724, 23
    %v726 = vor.u32 4788187, %v725
    %v727 = vand.u32 2147483647, %v726
    %v729 = vcvt.s32.f32 %v722
    %v730 = vmul.f32 %v729, %v727
    %v731 = vxor.u32 %v730, 2147483648
    %v732 = vsel %vm649, %v731, %v730
    %v733 = vsub.s32 4, %v709
    %v734 = vsel %vm649, %v733, %v709
    %v735 = vsel %vm648, %v542, %v732
    %v736 = vsel %vm648, 0, %v734
    %v737 = vcosq.f32.pop %v735
    %v738 = vsinq.f32.pop %v735
    %vm739 = vweird.f32 %v542
    %v740 = vand.u32 %v736, 3
    %vm741 = vcmp.lt.s32.totalorder %v740, 2
    %vm742 = vcmp.eq.s32.totalorder %v740, 0
    %v743 = vxor.u32 %v738, 2147483648
    %v744 = vsel %vm742, %v737, %v743
    %vm745 = vcmp.eq.s32.totalorder %v740, 2
    %v746 = vxor.u32 %v737, 2147483648
    %v747 = vsel %vm745, %v746, %v738
    %v748 = vsel %vm741, %v744, %v747
    %v749 = vsel %vm739, nan, %v748
    %v750 = vmul.f32 %v74, %v74
    %v751 = vstv %s94
    %v752 = vmul.f32 %v646, %v751
    %v753 = vstv %s98
    %v754 = vmul.f32 %v753, %v74
    %v755 = vadd.f32 %v752, %v754
    %v756 = vsub.f32 1.0, %v749
    %v757 = vstv %s95
    %v758 = vmul.f32 %v756, %v757
    %v759 = vmul.f32 %v750, 0.5
    %v760 = vmul.f32 %v753, %v759
    %v761 = vadd.f32 %v758, %v760
    %v762 = vsub.f32 %v542, %v646
    %v763 = vstv %s96
    %v764 = vmul.f32 %v762, %v763
    %v765 = vmul.f32 %v750, %v74
    %v766 = vmul.f32 %v765, 0.16666667
    %v767 = vmul.f32 %v753, %v766
    %v768 = vadd.f32 %v764, %v767
    %s769 = ssub.f32 0.0, %s89
    %s770 = ssub.f32 0.0, %s87
    %s771 = ssub.f32 0.0, %s88
    %s772 = smul.f32 %s87, %s87
    %s773 = ssub.f32 %s772, %s97
    %s774 = smul.f32 %s87, %s88
    %s775 = smul.f32 %s87, %s89
    %s776 = smul.f32 %s88, %s88
    %s777 = ssub.f32 %s776, %s97
    %s778 = smul.f32 %s88, %s89
    %s779 = smul.f32 %s89, %s89
    %s780 = ssub.f32 %s779, %s97
    %s781 = smul.f32 %s88, %s92
    %s782 = smul.f32 %s89, %s91
    %s783 = ssub.f32 %s781, %s782
    %s784 = smul.f32 %s89, %s90
    %s785 = smul.f32 %s87, %s92
    %s786 = ssub.f32 %s784, %s785
    %s787 = smul.f32 %s87, %s91
    %s788 = smul.f32 %s88, %s90
    %s789 = ssub.f32 %s787, %s788
    %s790 = smul.f32 %s88, %s789
    %s791 = smul.f32 %s89, %s786
    %s792 = ssub.f32 %s790, %s791
    %s793 = smul.f32 %s89, %s783
    %s794 = smul.f32 %s87, %s789
    %s795 = ssub.f32 %s793, %s794
    %s796 = smul.f32 %s87, %s786
    %s797 = smul.f32 %s88, %s783
    %s798 = ssub.f32 %s796, %s797
    %v799 = vstv %s773
    %v800 = vmul.f32 %v761, %v799
    %v801 = vadd.f32 %v800, 1.0
    %v802 = vstv %s769
    %v803 = vmul.f32 %v755, %v802
    %v804 = vstv %s774
    %v805 = vmul.f32 %v761, %v804
    %v806 = vadd.f32 %v803, %v805
    %v807 = vmul.f32 %v755, %v499
    %v808 = vstv %s775
    %v809 = vmul.f32 %v761, %v808
    %v810 = vadd.f32 %v807, %v809
    %v811 = vmul.f32 %v755, %v497
    %v812 = vadd.f32 %v811, %v805
    %v813 = vstv %s777
    %v814 = vmul.f32 %v761, %v813
    %v815 = vadd.f32 %v814, 1.0
    %v816 = vstv %s770
    %v817 = vmul.f32 %v755, %v816
    %v818 = vstv %s778
    %v819 = vmul.f32 %v761, %v818
    %v820 = vadd.f32 %v817, %v819
    %v821 = vstv %s771
    %v822 = vmul.f32 %v755, %v821
    %v823 = vadd.f32 %v822, %v809
    %v824 = vmul.f32 %v755, %v502
    %v825 = vadd.f32 %v824, %v819
    %v826 = vstv %s780
    %v827 = vmul.f32 %v761, %v826
    %v828 = vadd.f32 %v827, 1.0
    %v829 = vmul.f32 %v74, %v509
    %v830 = vstv %s783
    %v831 = vmul.f32 %v761, %v830
    %v832 = vadd.f32 %v829, %v831
    %v833 = vstv %s792
    %v834 = vmul.f32 %v768, %v833
    %v835 = vadd.f32 %v832, %v834
    %v836 = vmul.f32 %v74, %v511
    %v837 = vstv %s786
    %v838 = vmul.f32 %v761, %v837
    %v839 = vadd.f32 %v836, %v838
    %v840 = vstv %s795
    %v841 = vmul.f32 %v768, %v840
    %v842 = vadd.f32 %v839, %v841
    %v843 = vmul.f32 %v74, %v513
    %v844 = vstv %s789
    %v845 = vmul.f32 %v761, %v844
    %v846 = vadd.f32 %v843, %v845
    %v847 = vstv %s798
    %v848 = vmul.f32 %v768, %v847
    %v849 = vadd.f32 %v846, %v848
    %v850 = vmul.f32 %v461, %v801
    %v851 = vmul.f32 %v465, %v812
    %v852 = vadd.f32 %v850, %v851
    %v853 = vmul.f32 %v469, %v823
    %v854 = vadd.f32 %v852, %v853
    %v855 = vmul.f32 %v461, %v806
    %v856 = vmul.f32 %v465, %v815
    %v857 = vadd.f32 %v855, %v856
    %v858 = vmul.f32 %v469, %v825
    %v859 = vadd.f32 %v857, %v858
    %v860 = vmul.f32 %v461, %v810
    %v861 = vmul.f32 %v465, %v820
    %v862 = vadd.f32 %v860, %v861
    %v863 = vmul.f32 %v469, %v828
    %v864 = vadd.f32 %v862, %v863
    %v865 = vmul.f32 %v472, %v801
    %v866 = vmul.f32 %v475, %v812
    %v867 = vadd.f32 %v865, %v866
    %v868 = vmul.f32 %v478, %v823
    %v869 = vadd.f32 %v867, %v868
    %v870 = vmul.f32 %v472, %v806
    %v871 = vmul.f32 %v475, %v815
    %v872 = vadd.f32 %v870, %v871
    %v873 = vmul.f32 %v478, %v825
    %v874 = vadd.f32 %v872, %v873
    %v875 = vmul.f32 %v472, %v810
    %v876 = vmul.f32 %v475, %v820
    %v877 = vadd.f32 %v875, %v876
    %v878 = vmul.f32 %v478, %v828
    %v879 = vadd.f32 %v877, %v878
    %v880 = vmul.f32 %v480, %v801
    %v881 = vmul.f32 %v482, %v812
    %v882 = vadd.f32 %v880, %v881
    %v883 = vmul.f32 %v484, %v823
    %v884 = vadd.f32 %v882, %v883
    %v885 = vmul.f32 %v480, %v806
    %v886 = vmul.f32 %v482, %v815
    %v887 = vadd.f32 %v885, %v886
    %v888 = vmul.f32 %v484, %v825
    %v889 = vadd.f32 %v887, %v888
    %v890 = vmul.f32 %v480, %v810
    %v891 = vmul.f32 %v482, %v820
    %v892 = vadd.f32 %v890, %v891
    %v893 = vmul.f32 %v484, %v828
    %v894 = vadd.f32 %v892, %v893
    %v895 = vmul.f32 %v461, %v835
    %v896 = vmul.f32 %v465, %v842
    %v897 = vadd.f32 %v895, %v896
    %v898 = vmul.f32 %v469, %v849
    %v899 = vadd.f32 %v897, %v898
    %v900 = vadd.f32 %v899, %v489
    %v901 = vmul.f32 %v472, %v835
    %v902 = vmul.f32 %v475, %v842
    %v903 = vadd.f32 %v901, %v902
    %v904 = vmul.f32 %v478, %v849
    %v905 = vadd.f32 %v903, %v904
    %v906 = vadd.f32 %v905, %v493
    %v907 = vmul.f32 %v480, %v835
    %v908 = vmul.f32 %v482, %v842
    %v909 = vadd.f32 %v907, %v908
    %v910 = vmul.f32 %v484, %v849
    %v911 = vadd.f32 %v909, %v910
    %v912 = vadd.f32 %v911, %v496
    %s913 = scalar_lea.vmem [#allocation2], 16
    %v914 = vld [vmem:[%s913] sm:$0xff]
    %s915 = scalar_lea.vmem [#allocation2], 24
    %v916 = vld [vmem:[%s915] sm:$0xff]
    %s917 = sld [smem:[#allocation6 + $0xc]]
    %s918 = sld [smem:[#allocation6 + $0xd]]
    %s919 = sld [smem:[#allocation6 + $0xe]]
    %s920 = sld [smem:[#allocation6 + $0xf]]
    %s921 = sld [smem:[#allocation6 + $0x10]]
    %s922 = sld [smem:[#allocation6 + $0x11]]
    %s923 = sld [smem:[#allocation6 + $0x12]]
    %s924 = sld [smem:[#allocation6 + $0x13]]
    %s925 = sld [smem:[#allocation6 + $0x14]]
    %s926 = sld [smem:[#allocation6 + $0x15]]
    %s927 = sld [smem:[#allocation6 + $0x16]]
    %s928 = sld [smem:[#allocation6 + $0x17]]
    %s929 = sld [smem:[#allocation7 + $0xc]]
    %s930 = sld [smem:[#allocation7 + $0xd]]
    %s931 = sld [smem:[#allocation7 + $0xe]]
    %s932 = sld [smem:[#allocation7 + $0xf]]
    %s933 = sld [smem:[#allocation7 + $0x10]]
    %s934 = sld [smem:[#allocation7 + $0x11]]
    %s935 = sld [smem:[#allocation7 + $0x12]]
    %s936 = sld [smem:[#allocation7 + $0x13]]
    %s937 = sld [smem:[#allocation7 + $0x14]]
    %s938 = sld [smem:[#allocation7 + $0x15]]
    %s939 = sld [smem:[#allocation7 + $0x16]]
    %s940 = sld [smem:[#allocation7 + $0x17]]
    %v941 = vstv %s917
    %v942 = vmul.f32 %v854, %v941
    %v943 = vstv %s918
    %v944 = vmul.f32 %v869, %v943
    %v945 = vadd.f32 %v942, %v944
    %v946 = vstv %s919
    %v947 = vmul.f32 %v884, %v946
    %v948 = vadd.f32 %v945, %v947
    %v949 = vmul.f32 %v859, %v941
    %v950 = vmul.f32 %v874, %v943
    %v951 = vadd.f32 %v949, %v950
    %v952 = vmul.f32 %v889, %v946
    %v953 = vadd.f32 %v951, %v952
    %v954 = vmul.f32 %v864, %v941
    %v955 = vmul.f32 %v879, %v943
    %v956 = vadd.f32 %v954, %v955
    %v957 = vmul.f32 %v894, %v946
    %v958 = vadd.f32 %v956, %v957
    %v959 = vmul.f32 %v906, %v946
    %v960 = vmul.f32 %v912, %v943
    %v961 = vsub.f32 %v959, %v960
    %v962 = vmul.f32 %v912, %v941
    %v963 = vmul.f32 %v900, %v946
    %v964 = vsub.f32 %v962, %v963
    %v965 = vmul.f32 %v900, %v943
    %v966 = vmul.f32 %v906, %v941
    %v967 = vsub.f32 %v965, %v966
    %v968 = vstv %s920
    %v969 = vsub.f32 %v968, %v961
    %v970 = vstv %s921
    %v971 = vsub.f32 %v970, %v964
    %v972 = vstv %s922
    %v973 = vsub.f32 %v972, %v967
    %v974 = vmul.f32 %v854, %v969
    %v975 = vmul.f32 %v869, %v971
    %v976 = vadd.f32 %v974, %v975
    %v977 = vmul.f32 %v884, %v973
    %v978 = vadd.f32 %v976, %v977
    %v979 = vmul.f32 %v859, %v969
    %v980 = vmul.f32 %v874, %v971
    %v981 = vadd.f32 %v979, %v980
    %v982 = vmul.f32 %v889, %v973
    %v983 = vadd.f32 %v981, %v982
    %v984 = vmul.f32 %v864, %v969
    %v985 = vmul.f32 %v879, %v971
    %v986 = vadd.f32 %v984, %v985
    %v987 = vmul.f32 %v894, %v973
    %v988 = vadd.f32 %v986, %v987
    %s989 = scalar_lea.vmem [#allocation11], 48
    %990 = vst [vmem:[%s989] sm:$0xff] %v948
    %v991 = vmul.f32 %v948, %v978
    %v992 = vsub.f32 1.0, %v991
    %v993 = vmul.f32 %v992, %v978
    %s994 = scalar_lea.vmem [#allocation11], 72
    %995 = vst [vmem:[%s994] sm:$0xff] %v993
    %s996 = scalar_lea.vmem [#allocation11], 56
    %997 = vst [vmem:[%s996] sm:$0xff] %v953
    %v998 = vmul.f32 %v953, %v983
    %v999 = vsub.f32 1.0, %v998
    %v1000 = vmul.f32 %v999, %v983
    %s1001 = scalar_lea.vmem [#allocation11], 80
    %1002 = vst [vmem:[%s1001] sm:$0xff] %v1000
    %s1003 = scalar_lea.vmem [#allocation11], 64
    %1004 = vst [vmem:[%s1003] sm:$0xff] %v958
    %v1005 = vmul.f32 %v958, %v988
    %v1006 = vsub.f32 1.0, %v1005
    %v1007 = vmul.f32 %v1006, %v988
    %s1008 = scalar_lea.vmem [#allocation11], 88
    %1009 = vst [vmem:[%s1008] sm:$0xff] %v1007
    %v1010 = vstv %s923
    %v1011 = vmul.f32 %v1010, %v914
    %v1012 = vand.u32 2147483647, %v1011
    %vm1013 = vcmp.le.f32.partialorder %v1012, 0.7853982
    %vm1014 = vcmp.lt.s32.totalorder %v1011, 0
    %v1015 = vand.u32 %v1011, 2139095040
    %v1016 = vshrl.u32 %v1015, 23
    %v1017 = vsub.s32 %v1016, 127
    %v1018 = vand.u32 2147483647, %v1011
    %v1019 = vand.u32 %v1018, 8388607
    %v1020 = vor.u32 %v1019, 8388608
    %v1021 = vsub.s32 0, %v1020
    %v1022 = vadd.s32 %v1017, 1
    %vm1023 = vcmp.gt.s32.totalorder %v1022, 0
    %v1024 = vsel %vm1023, %v1022, 0
    %v1025 = vshrl.u32 %v1024, 5
    %v1026 = vand.u32 %v1024, 31
    %v1027 = vsub.s32 32, %v1026
    %v1028 = vshrl.u32 683565275, %v1027
    %v1029 = vshll.u32 683565275, %v1026
    %v1030 = vshrl.u32 2475754826, %v1027
    %v1031 = vor.u32 %v1029, %v1030
    %v1032 = vshll.u32 2475754826, %v1026
    %v1033 = vshrl.u32 2131351028, %v1027
    %v1034 = vor.u32 %v1032, %v1033
    %v1035 = vshll.u32 2131351028, %v1026
    %v1036 = vshrl.u32 2102212464, %v1027
    %v1037 = vor.u32 %v1035, %v1036
    %v1038 = vshll.u32 2102212464, %v1026
    %v1039 = vshrl.u32 920167782, %v1027
    %v1040 = vor.u32 %v1038, %v1039
    %v1041 = vshll.u32 920167782, %v1026
    %v1042 = vshrl.u32 1326507024, %v1027
    %v1043 = vor.u32 %v1041, %v1042
    %vm1044 = vcmp.lt.s32.totalorder %v1025, 1
    %vm1045 = vcmp.lt.s32.totalorder %v1025, 2
    %vm1046 = vcmp.lt.s32.totalorder %v1025, 3
    %vm1047 = vcmp.lt.s32.totalorder %v1025, 4
    %v1048 = vsel %vm1044, %v1028, %v1031
    %v1049 = vsel %vm1047, %v1037, 2102212464
    %v1050 = vsel %vm1046, %v1034, %v1049
    %v1051 = vsel %vm1045, %v1048, %v1050
    %v1052 = vsel %vm1044, %v1031, %v1034
    %v1053 = vsel %vm1047, %v1040, 920167782
    %v1054 = vsel %vm1046, %v1037, %v1053
    %v1055 = vsel %vm1045, %v1052, %v1054
    %v1056 = vsel %vm1044, %v1034, %v1037
    %v1057 = vsel %vm1047, %v1043, 1326507024
    %v1058 = vsel %vm1046, %v1040, %v1057
    %v1059 = vsel %vm1045, %v1056, %v1058
    %v1060 = vshll.u32 %v1020, 8
    %v1061 = vmul.u32.u64.compose %v1060, %v1059
    %v1062 = vextract.low.u32 %v1061
    %v1063 = vextract.high.u32 %v1061
    %v1064 = vmul.u32.u64.compose %v1060, %v1055
    %v1065 = vextract.low.u32 %v1064
    %v1066 = vextract.high.u32 %v1064
    %v1067 = vmul.u32 %v1060, %v1051
    %v1068 = vadd.s32 %v1063, %v1065
    %vm1069 = vc.u32 %v1063, %v1065
    %v1070 = vadd.s32 %v1066, 1
    %v1071 = vsel %vm1069, %v1070, %v1066
    %v1072 = vadd.s32 %v1067, %v1071
    %v1073 = vadd.s32 %v1072, 536870912
    %v1074 = vshrl.u32 %v1073, 30
    %v1075 = vshll.u32 %v1074, 30
    %v1076 = vsub.s32 %v1072, %v1075
    %vm1077 = vcmp.lt.s32.totalorder %v1076, 0
    %v1078 = vsub.s32 0, %v1076
    %v1079 = vsel %vm1077, %v1078, %v1076
    %v1080 = vclz %v1079
    %v1081 = vsub.s32 %v1080, 2
    %vm1082 = vcmp.gt.s32.totalorder 0, %v1081
    %v1083 = vsel %vm1082, 0, %v1081
    %v1084 = vsub.s32 32, %v1083
    %v1085 = vshll.u32 %v1076, %v1083
    %v1086 = vshrl.u32 %v1068, %v1084
    %v1087 = vor.u32 %v1085, %v1086
    %v1088 = vsub.s32 4294967266, %v1083
    %v1089 = vadd.s32 %v1088, 127
    %v1090 = vshll.u32 %v1089, 23
    %v1091 = vor.u32 4788187, %v1090
    %v1092 = vand.u32 2147483647, %v1091
    %v1094 = vcvt.s32.f32 %v1087
    %v1095 = vmul.f32 %v1094, %v1092
    %v1096 = vxor.u32 %v1095, 2147483648
    %v1097 = vsel %vm1014, %v1096, %v1095
    %v1098 = vsub.s32 4, %v1074
    %v1099 = vsel %vm1014, %v1098, %v1074
    %v1100 = vsel %vm1013, %v1011, %v1097
    %v1101 = vsel %vm1013, 0, %v1099
    %v1102 = vcosq.f32.pop %v1100
    %v1103 = vsinq.f32.pop %v1100
    %vm1104 = vweird.f32 %v1011
    %v1105 = vadd.s32 %v1101, 3
    %v1106 = vand.u32 %v1105, 3
    %vm1107 = vcmp.lt.s32.totalorder %v1106, 2
    %vm1108 = vcmp.eq.s32.totalorder %v1106, 0
    %v1109 = vxor.u32 %v1103, 2147483648
    %v1110 = vsel %vm1108, %v1102, %v1109
    %vm1111 = vcmp.eq.s32.totalorder %v1106, 2
    %v1112 = vxor.u32 %v1102, 2147483648
    %v1113 = vsel %vm1111, %v1112, %v1103
    %v1114 = vsel %vm1107, %v1110, %v1113
    %v1115 = vsel %vm1104, nan, %v1114
    %v1116 = vand.u32 2147483647, %v1011
    %vm1117 = vcmp.le.f32.partialorder %v1116, 0.7853982
    %vm1118 = vcmp.lt.s32.totalorder %v1011, 0
    %v1119 = vand.u32 %v1011, 2139095040
    %v1120 = vshrl.u32 %v1119, 23
    %v1121 = vsub.s32 %v1120, 127
    %v1122 = vand.u32 2147483647, %v1011
    %v1123 = vand.u32 %v1122, 8388607
    %v1124 = vor.u32 %v1123, 8388608
    %v1125 = vsub.s32 0, %v1124
    %v1126 = vadd.s32 %v1121, 1
    %vm1127 = vcmp.gt.s32.totalorder %v1126, 0
    %v1128 = vsel %vm1127, %v1126, 0
    %v1129 = vshrl.u32 %v1128, 5
    %v1130 = vand.u32 %v1128, 31
    %v1131 = vsub.s32 32, %v1130
    %v1132 = vshrl.u32 683565275, %v1131
    %v1133 = vshll.u32 683565275, %v1130
    %v1134 = vshrl.u32 2475754826, %v1131
    %v1135 = vor.u32 %v1133, %v1134
    %v1136 = vshll.u32 2475754826, %v1130
    %v1137 = vshrl.u32 2131351028, %v1131
    %v1138 = vor.u32 %v1136, %v1137
    %v1139 = vshll.u32 2131351028, %v1130
    %v1140 = vshrl.u32 2102212464, %v1131
    %v1141 = vor.u32 %v1139, %v1140
    %v1142 = vshll.u32 2102212464, %v1130
    %v1143 = vshrl.u32 920167782, %v1131
    %v1144 = vor.u32 %v1142, %v1143
    %v1145 = vshll.u32 920167782, %v1130
    %v1146 = vshrl.u32 1326507024, %v1131
    %v1147 = vor.u32 %v1145, %v1146
    %vm1148 = vcmp.lt.s32.totalorder %v1129, 1
    %vm1149 = vcmp.lt.s32.totalorder %v1129, 2
    %vm1150 = vcmp.lt.s32.totalorder %v1129, 3
    %vm1151 = vcmp.lt.s32.totalorder %v1129, 4
    %v1152 = vsel %vm1148, %v1132, %v1135
    %v1153 = vsel %vm1151, %v1141, 2102212464
    %v1154 = vsel %vm1150, %v1138, %v1153
    %v1155 = vsel %vm1149, %v1152, %v1154
    %v1156 = vsel %vm1148, %v1135, %v1138
    %v1157 = vsel %vm1151, %v1144, 920167782
    %v1158 = vsel %vm1150, %v1141, %v1157
    %v1159 = vsel %vm1149, %v1156, %v1158
    %v1160 = vsel %vm1148, %v1138, %v1141
    %v1161 = vsel %vm1151, %v1147, 1326507024
    %v1162 = vsel %vm1150, %v1144, %v1161
    %v1163 = vsel %vm1149, %v1160, %v1162
    %v1164 = vshll.u32 %v1124, 8
    %v1165 = vmul.u32.u64.compose %v1164, %v1163
    %v1166 = vextract.low.u32 %v1165
    %v1167 = vextract.high.u32 %v1165
    %v1168 = vmul.u32.u64.compose %v1164, %v1159
    %v1169 = vextract.low.u32 %v1168
    %v1170 = vextract.high.u32 %v1168
    %v1171 = vmul.u32 %v1164, %v1155
    %v1172 = vadd.s32 %v1167, %v1169
    %vm1173 = vc.u32 %v1167, %v1169
    %v1174 = vadd.s32 %v1170, 1
    %v1175 = vsel %vm1173, %v1174, %v1170
    %v1176 = vadd.s32 %v1171, %v1175
    %v1177 = vadd.s32 %v1176, 536870912
    %v1178 = vshrl.u32 %v1177, 30
    %v1179 = vshll.u32 %v1178, 30
    %v1180 = vsub.s32 %v1176, %v1179
    %vm1181 = vcmp.lt.s32.totalorder %v1180, 0
    %v1182 = vsub.s32 0, %v1180
    %v1183 = vsel %vm1181, %v1182, %v1180
    %v1184 = vclz %v1183
    %v1185 = vsub.s32 %v1184, 2
    %vm1186 = vcmp.gt.s32.totalorder 0, %v1185
    %v1187 = vsel %vm1186, 0, %v1185
    %v1188 = vsub.s32 32, %v1187
    %v1189 = vshll.u32 %v1180, %v1187
    %v1190 = vshrl.u32 %v1172, %v1188
    %v1191 = vor.u32 %v1189, %v1190
    %v1192 = vsub.s32 4294967266, %v1187
    %v1193 = vadd.s32 %v1192, 127
    %v1194 = vshll.u32 %v1193, 23
    %v1195 = vor.u32 4788187, %v1194
    %v1196 = vand.u32 2147483647, %v1195
    %v1198 = vcvt.s32.f32 %v1191
    %v1199 = vmul.f32 %v1198, %v1196
    %v1200 = vxor.u32 %v1199, 2147483648
    %v1201 = vsel %vm1118, %v1200, %v1199
    %v1202 = vsub.s32 4, %v1178
    %v1203 = vsel %vm1118, %v1202, %v1178
    %v1204 = vsel %vm1117, %v1011, %v1201
    %v1205 = vsel %vm1117, 0, %v1203
    %v1206 = vcosq.f32.pop %v1204
    %v1207 = vsinq.f32.pop %v1204
    %vm1208 = vweird.f32 %v1011
    %v1209 = vand.u32 %v1205, 3
    %vm1210 = vcmp.lt.s32.totalorder %v1209, 2
    %vm1211 = vcmp.eq.s32.totalorder %v1209, 0
    %v1212 = vxor.u32 %v1207, 2147483648
    %v1213 = vsel %vm1211, %v1206, %v1212
    %vm1214 = vcmp.eq.s32.totalorder %v1209, 2
    %v1215 = vxor.u32 %v1206, 2147483648
    %v1216 = vsel %vm1214, %v1215, %v1207
    %v1217 = vsel %vm1210, %v1213, %v1216
    %v1218 = vsel %vm1208, nan, %v1217
    %v1219 = vmul.f32 %v914, %v914
    %v1220 = vstv %s924
    %v1221 = vmul.f32 %v1115, %v1220
    %v1222 = vstv %s928
    %v1223 = vmul.f32 %v1222, %v914
    %v1224 = vadd.f32 %v1221, %v1223
    %v1225 = vsub.f32 1.0, %v1218
    %v1226 = vstv %s925
    %v1227 = vmul.f32 %v1225, %v1226
    %v1228 = vmul.f32 %v1219, 0.5
    %v1229 = vmul.f32 %v1222, %v1228
    %v1230 = vadd.f32 %v1227, %v1229
    %v1231 = vsub.f32 %v1011, %v1115
    %v1232 = vstv %s926
    %v1233 = vmul.f32 %v1231, %v1232
    %v1234 = vmul.f32 %v1219, %v914
    %v1235 = vmul.f32 %v1234, 0.16666667
    %v1236 = vmul.f32 %v1222, %v1235
    %v1237 = vadd.f32 %v1233, %v1236
    %s1238 = ssub.f32 0.0, %s919
    %s1239 = ssub.f32 0.0, %s917
    %s1240 = ssub.f32 0.0, %s918
    %s1241 = smul.f32 %s917, %s917
    %s1242 = ssub.f32 %s1241, %s927
    %s1243 = smul.f32 %s917, %s918
    %s1244 = smul.f32 %s917, %s919
    %s1245 = smul.f32 %s918, %s918
    %s1246 = ssub.f32 %s1245, %s927
    %s1247 = smul.f32 %s918, %s919
    %s1248 = smul.f32 %s919, %s919
    %s1249 = ssub.f32 %s1248, %s927
    %s1250 = smul.f32 %s918, %s922
    %s1251 = smul.f32 %s919, %s921
    %s1252 = ssub.f32 %s1250, %s1251
    %s1253 = smul.f32 %s919, %s920
    %s1254 = smul.f32 %s917, %s922
    %s1255 = ssub.f32 %s1253, %s1254
    %s1256 = smul.f32 %s917, %s921
    %s1257 = smul.f32 %s918, %s920
    %s1258 = ssub.f32 %s1256, %s1257
    %s1259 = smul.f32 %s918, %s1258
    %s1260 = smul.f32 %s919, %s1255
    %s1261 = ssub.f32 %s1259, %s1260
    %s1262 = smul.f32 %s919, %s1252
    %s1263 = smul.f32 %s917, %s1258
    %s1264 = ssub.f32 %s1262, %s1263
    %s1265 = smul.f32 %s917, %s1255
    %s1266 = smul.f32 %s918, %s1252
    %s1267 = ssub.f32 %s1265, %s1266
    %v1268 = vstv %s1242
    %v1269 = vmul.f32 %v1230, %v1268
    %v1270 = vadd.f32 %v1269, 1.0
    %v1271 = vstv %s1238
    %v1272 = vmul.f32 %v1224, %v1271
    %v1273 = vstv %s1243
    %v1274 = vmul.f32 %v1230, %v1273
    %v1275 = vadd.f32 %v1272, %v1274
    %v1276 = vmul.f32 %v1224, %v943
    %v1277 = vstv %s1244
    %v1278 = vmul.f32 %v1230, %v1277
    %v1279 = vadd.f32 %v1276, %v1278
    %v1280 = vmul.f32 %v1224, %v946
    %v1281 = vadd.f32 %v1280, %v1274
    %v1282 = vstv %s1246
    %v1283 = vmul.f32 %v1230, %v1282
    %v1284 = vadd.f32 %v1283, 1.0
    %v1285 = vstv %s1239
    %v1286 = vmul.f32 %v1224, %v1285
    %v1287 = vstv %s1247
    %v1288 = vmul.f32 %v1230, %v1287
    %v1289 = vadd.f32 %v1286, %v1288
    %v1290 = vstv %s1240
    %v1291 = vmul.f32 %v1224, %v1290
    %v1292 = vadd.f32 %v1291, %v1278
    %v1293 = vmul.f32 %v1224, %v941
    %v1294 = vadd.f32 %v1293, %v1288
    %v1295 = vstv %s1249
    %v1296 = vmul.f32 %v1230, %v1295
    %v1297 = vadd.f32 %v1296, 1.0
    %v1298 = vmul.f32 %v914, %v968
    %v1299 = vstv %s1252
    %v1300 = vmul.f32 %v1230, %v1299
    %v1301 = vadd.f32 %v1298, %v1300
    %v1302 = vstv %s1261
    %v1303 = vmul.f32 %v1237, %v1302
    %v1304 = vadd.f32 %v1301, %v1303
    %v1305 = vmul.f32 %v914, %v970
    %v1306 = vstv %s1255
    %v1307 = vmul.f32 %v1230, %v1306
    %v1308 = vadd.f32 %v1305, %v1307
    %v1309 = vstv %s1264
    %v1310 = vmul.f32 %v1237, %v1309
    %v1311 = vadd.f32 %v1308, %v1310
    %v1312 = vmul.f32 %v914, %v972
    %v1313 = vstv %s1258
    %v1314 = vmul.f32 %v1230, %v1313
    %v1315 = vadd.f32 %v1312, %v1314
    %v1316 = vstv %s1267
    %v1317 = vmul.f32 %v1237, %v1316
    %v1318 = vadd.f32 %v1315, %v1317
    %v1319 = vmul.f32 %v854, %v1270
    %v1320 = vmul.f32 %v859, %v1281
    %v1321 = vadd.f32 %v1319, %v1320
    %v1322 = vmul.f32 %v864, %v1292
    %v1323 = vadd.f32 %v1321, %v1322
    %v1324 = vmul.f32 %v854, %v1275
    %v1325 = vmul.f32 %v859, %v1284
    %v1326 = vadd.f32 %v1324, %v1325
    %v1327 = vmul.f32 %v864, %v1294
    %v1328 = vadd.f32 %v1326, %v1327
    %v1329 = vmul.f32 %v854, %v1279
    %v1330 = vmul.f32 %v859, %v1289
    %v1331 = vadd.f32 %v1329, %v1330
    %v1332 = vmul.f32 %v864, %v1297
    %v1333 = vadd.f32 %v1331, %v1332
    %v1334 = vmul.f32 %v869, %v1270
    %v1335 = vmul.f32 %v874, %v1281
    %v1336 = vadd.f32 %v1334, %v1335
    %v1337 = vmul.f32 %v879, %v1292
    %v1338 = vadd.f32 %v1336, %v1337
    %v1339 = vmul.f32 %v869, %v1275
    %v1340 = vmul.f32 %v874, %v1284
    %v1341 = vadd.f32 %v1339, %v1340
    %v1342 = vmul.f32 %v879, %v1294
    %v1343 = vadd.f32 %v1341, %v1342
    %v1344 = vmul.f32 %v869, %v1279
    %v1345 = vmul.f32 %v874, %v1289
    %v1346 = vadd.f32 %v1344, %v1345
    %v1347 = vmul.f32 %v879, %v1297
    %v1348 = vadd.f32 %v1346, %v1347
    %v1349 = vmul.f32 %v884, %v1270
    %v1350 = vmul.f32 %v889, %v1281
    %v1351 = vadd.f32 %v1349, %v1350
    %v1352 = vmul.f32 %v894, %v1292
    %v1353 = vadd.f32 %v1351, %v1352
    %v1354 = vmul.f32 %v884, %v1275
    %v1355 = vmul.f32 %v889, %v1284
    %v1356 = vadd.f32 %v1354, %v1355
    %v1357 = vmul.f32 %v894, %v1294
    %v1358 = vadd.f32 %v1356, %v1357
    %v1359 = vmul.f32 %v884, %v1279
    %v1360 = vmul.f32 %v889, %v1289
    %v1361 = vadd.f32 %v1359, %v1360
    %v1362 = vmul.f32 %v894, %v1297
    %v1363 = vadd.f32 %v1361, %v1362
    %v1364 = vmul.f32 %v854, %v1304
    %v1365 = vmul.f32 %v859, %v1311
    %v1366 = vadd.f32 %v1364, %v1365
    %v1367 = vmul.f32 %v864, %v1318
    %v1368 = vadd.f32 %v1366, %v1367
    %v1369 = vadd.f32 %v1368, %v900
    %v1370 = vmul.f32 %v869, %v1304
    %v1371 = vmul.f32 %v874, %v1311
    %v1372 = vadd.f32 %v1370, %v1371
    %v1373 = vmul.f32 %v879, %v1318
    %v1374 = vadd.f32 %v1372, %v1373
    %v1375 = vadd.f32 %v1374, %v906
    %v1376 = vmul.f32 %v884, %v1304
    %v1377 = vmul.f32 %v889, %v1311
    %v1378 = vadd.f32 %v1376, %v1377
    %v1379 = vmul.f32 %v894, %v1318
    %v1380 = vadd.f32 %v1378, %v1379
    %v1381 = vadd.f32 %v1380, %v912
    %v1382 = vstv %s931
    %v1383 = vmul.f32 %v1375, %v1382
    %v1384 = vstv %s930
    %v1385 = vmul.f32 %v1381, %v1384
    %v1386 = vsub.f32 %v1383, %v1385
    %v1387 = vstv %s929
    %v1388 = vmul.f32 %v1381, %v1387
    %v1389 = vmul.f32 %v1369, %v1382
    %v1390 = vsub.f32 %v1388, %v1389
    %v1391 = vmul.f32 %v1369, %v1384
    %v1392 = vmul.f32 %v1375, %v1387
    %v1393 = vsub.f32 %v1391, %v1392
    %v1394 = vstv %s932
    %v1395 = vsub.f32 %v1394, %v1386
    %v1396 = vstv %s933
    %v1397 = vsub.f32 %v1396, %v1390
    %v1398 = vstv %s934
    %v1399 = vsub.f32 %v1398, %v1393
    %v1400 = vmul.f32 %v1323, %v1395
    %v1401 = vmul.f32 %v1338, %v1397
    %v1402 = vadd.f32 %v1400, %v1401
    %v1403 = vmul.f32 %v1353, %v1399
    %v1404 = vadd.f32 %v1402, %v1403
    %v1405 = vmul.f32 %v1328, %v1395
    %v1406 = vmul.f32 %v1343, %v1397
    %v1407 = vadd.f32 %v1405, %v1406
    %v1408 = vmul.f32 %v1358, %v1399
    %v1409 = vadd.f32 %v1407, %v1408
    %v1410 = vmul.f32 %v1333, %v1395
    %v1411 = vmul.f32 %v1348, %v1397
    %v1412 = vadd.f32 %v1410, %v1411
    %v1413 = vmul.f32 %v1363, %v1399
    %v1414 = vadd.f32 %v1412, %v1413
    %s1415 = scalar_lea.vmem [#allocation13], 48
    %1416 = vst [vmem:[%s1415] sm:$0xff] 0.0
    %s1417 = scalar_lea.vmem [#allocation13], 72
    %1418 = vst [vmem:[%s1417] sm:$0xff] %v1404
    %s1419 = scalar_lea.vmem [#allocation13], 56
    %1420 = vst [vmem:[%s1419] sm:$0xff] 0.0
    %s1421 = scalar_lea.vmem [#allocation13], 80
    %1422 = vst [vmem:[%s1421] sm:$0xff] %v1409
    %s1423 = scalar_lea.vmem [#allocation13], 64
    %1424 = vst [vmem:[%s1423] sm:$0xff] 0.0
    %s1425 = scalar_lea.vmem [#allocation13], 88
    %1426 = vst [vmem:[%s1425] sm:$0xff] %v1414
    %v1427 = vstv %s935
    %v1428 = vmul.f32 %v1427, %v916
    %v1429 = vand.u32 2147483647, %v1428
    %vm1430 = vcmp.le.f32.partialorder %v1429, 0.7853982
    %vm1431 = vcmp.lt.s32.totalorder %v1428, 0
    %v1432 = vand.u32 %v1428, 2139095040
    %v1433 = vshrl.u32 %v1432, 23
    %v1434 = vsub.s32 %v1433, 127
    %v1435 = vand.u32 2147483647, %v1428
    %v1436 = vand.u32 %v1435, 8388607
    %v1437 = vor.u32 %v1436, 8388608
    %v1438 = vsub.s32 0, %v1437
    %v1439 = vadd.s32 %v1434, 1
    %vm1440 = vcmp.gt.s32.totalorder %v1439, 0
    %v1441 = vsel %vm1440, %v1439, 0
    %v1442 = vshrl.u32 %v1441, 5
    %v1443 = vand.u32 %v1441, 31
    %v1444 = vsub.s32 32, %v1443
    %v1445 = vshrl.u32 683565275, %v1444
    %v1446 = vshll.u32 683565275, %v1443
    %v1447 = vshrl.u32 2475754826, %v1444
    %v1448 = vor.u32 %v1446, %v1447
    %v1449 = vshll.u32 2475754826, %v1443
    %v1450 = vshrl.u32 2131351028, %v1444
    %v1451 = vor.u32 %v1449, %v1450
    %v1452 = vshll.u32 2131351028, %v1443
    %v1453 = vshrl.u32 2102212464, %v1444
    %v1454 = vor.u32 %v1452, %v1453
    %v1455 = vshll.u32 2102212464, %v1443
    %v1456 = vshrl.u32 920167782, %v1444
    %v1457 = vor.u32 %v1455, %v1456
    %v1458 = vshll.u32 920167782, %v1443
    %v1459 = vshrl.u32 1326507024, %v1444
    %v1460 = vor.u32 %v1458, %v1459
    %vm1461 = vcmp.lt.s32.totalorder %v1442, 1
    %vm1462 = vcmp.lt.s32.totalorder %v1442, 2
    %vm1463 = vcmp.lt.s32.totalorder %v1442, 3
    %vm1464 = vcmp.lt.s32.totalorder %v1442, 4
    %v1465 = vsel %vm1461, %v1445, %v1448
    %v1466 = vsel %vm1464, %v1454, 2102212464
    %v1467 = vsel %vm1463, %v1451, %v1466
    %v1468 = vsel %vm1462, %v1465, %v1467
    %v1469 = vsel %vm1461, %v1448, %v1451
    %v1470 = vsel %vm1464, %v1457, 920167782
    %v1471 = vsel %vm1463, %v1454, %v1470
    %v1472 = vsel %vm1462, %v1469, %v1471
    %v1473 = vsel %vm1461, %v1451, %v1454
    %v1474 = vsel %vm1464, %v1460, 1326507024
    %v1475 = vsel %vm1463, %v1457, %v1474
    %v1476 = vsel %vm1462, %v1473, %v1475
    %v1477 = vshll.u32 %v1437, 8
    %v1478 = vmul.u32.u64.compose %v1477, %v1476
    %v1479 = vextract.low.u32 %v1478
    %v1480 = vextract.high.u32 %v1478
    %v1481 = vmul.u32.u64.compose %v1477, %v1472
    %v1482 = vextract.low.u32 %v1481
    %v1483 = vextract.high.u32 %v1481
    %v1484 = vmul.u32 %v1477, %v1468
    %v1485 = vadd.s32 %v1480, %v1482
    %vm1486 = vc.u32 %v1480, %v1482
    %v1487 = vadd.s32 %v1483, 1
    %v1488 = vsel %vm1486, %v1487, %v1483
    %v1489 = vadd.s32 %v1484, %v1488
    %v1490 = vadd.s32 %v1489, 536870912
    %v1491 = vshrl.u32 %v1490, 30
    %v1492 = vshll.u32 %v1491, 30
    %v1493 = vsub.s32 %v1489, %v1492
    %vm1494 = vcmp.lt.s32.totalorder %v1493, 0
    %v1495 = vsub.s32 0, %v1493
    %v1496 = vsel %vm1494, %v1495, %v1493
    %v1497 = vclz %v1496
    %v1498 = vsub.s32 %v1497, 2
    %vm1499 = vcmp.gt.s32.totalorder 0, %v1498
    %v1500 = vsel %vm1499, 0, %v1498
    %v1501 = vsub.s32 32, %v1500
    %v1502 = vshll.u32 %v1493, %v1500
    %v1503 = vshrl.u32 %v1485, %v1501
    %v1504 = vor.u32 %v1502, %v1503
    %v1505 = vsub.s32 4294967266, %v1500
    %v1506 = vadd.s32 %v1505, 127
    %v1507 = vshll.u32 %v1506, 23
    %v1508 = vor.u32 4788187, %v1507
    %v1509 = vand.u32 2147483647, %v1508
    %v1511 = vcvt.s32.f32 %v1504
    %v1512 = vmul.f32 %v1511, %v1509
    %v1513 = vxor.u32 %v1512, 2147483648
    %v1514 = vsel %vm1431, %v1513, %v1512
    %v1515 = vsub.s32 4, %v1491
    %v1516 = vsel %vm1431, %v1515, %v1491
    %v1517 = vsel %vm1430, %v1428, %v1514
    %v1518 = vsel %vm1430, 0, %v1516
    %v1519 = vcosq.f32.pop %v1517
    %v1520 = vsinq.f32.pop %v1517
    %vm1521 = vweird.f32 %v1428
    %v1522 = vadd.s32 %v1518, 3
    %v1523 = vand.u32 %v1522, 3
    %vm1524 = vcmp.lt.s32.totalorder %v1523, 2
    %vm1525 = vcmp.eq.s32.totalorder %v1523, 0
    %v1526 = vxor.u32 %v1520, 2147483648
    %v1527 = vsel %vm1525, %v1519, %v1526
    %vm1528 = vcmp.eq.s32.totalorder %v1523, 2
    %v1529 = vxor.u32 %v1519, 2147483648
    %v1530 = vsel %vm1528, %v1529, %v1520
    %v1531 = vsel %vm1524, %v1527, %v1530
    %v1532 = vsel %vm1521, nan, %v1531
    %v1533 = vand.u32 2147483647, %v1428
    %vm1534 = vcmp.le.f32.partialorder %v1533, 0.7853982
    %vm1535 = vcmp.lt.s32.totalorder %v1428, 0
    %v1536 = vand.u32 %v1428, 2139095040
    %v1537 = vshrl.u32 %v1536, 23
    %v1538 = vsub.s32 %v1537, 127
    %v1539 = vand.u32 2147483647, %v1428
    %v1540 = vand.u32 %v1539, 8388607
    %v1541 = vor.u32 %v1540, 8388608
    %v1542 = vsub.s32 0, %v1541
    %v1543 = vadd.s32 %v1538, 1
    %vm1544 = vcmp.gt.s32.totalorder %v1543, 0
    %v1545 = vsel %vm1544, %v1543, 0
    %v1546 = vshrl.u32 %v1545, 5
    %v1547 = vand.u32 %v1545, 31
    %v1548 = vsub.s32 32, %v1547
    %v1549 = vshrl.u32 683565275, %v1548
    %v1550 = vshll.u32 683565275, %v1547
    %v1551 = vshrl.u32 2475754826, %v1548
    %v1552 = vor.u32 %v1550, %v1551
    %v1553 = vshll.u32 2475754826, %v1547
    %v1554 = vshrl.u32 2131351028, %v1548
    %v1555 = vor.u32 %v1553, %v1554
    %v1556 = vshll.u32 2131351028, %v1547
    %v1557 = vshrl.u32 2102212464, %v1548
    %v1558 = vor.u32 %v1556, %v1557
    %v1559 = vshll.u32 2102212464, %v1547
    %v1560 = vshrl.u32 920167782, %v1548
    %v1561 = vor.u32 %v1559, %v1560
    %v1562 = vshll.u32 920167782, %v1547
    %v1563 = vshrl.u32 1326507024, %v1548
    %v1564 = vor.u32 %v1562, %v1563
    %vm1565 = vcmp.lt.s32.totalorder %v1546, 1
    %vm1566 = vcmp.lt.s32.totalorder %v1546, 2
    %vm1567 = vcmp.lt.s32.totalorder %v1546, 3
    %vm1568 = vcmp.lt.s32.totalorder %v1546, 4
    %v1569 = vsel %vm1565, %v1549, %v1552
    %v1570 = vsel %vm1568, %v1558, 2102212464
    %v1571 = vsel %vm1567, %v1555, %v1570
    %v1572 = vsel %vm1566, %v1569, %v1571
    %v1573 = vsel %vm1565, %v1552, %v1555
    %v1574 = vsel %vm1568, %v1561, 920167782
    %v1575 = vsel %vm1567, %v1558, %v1574
    %v1576 = vsel %vm1566, %v1573, %v1575
    %v1577 = vsel %vm1565, %v1555, %v1558
    %v1578 = vsel %vm1568, %v1564, 1326507024
    %v1579 = vsel %vm1567, %v1561, %v1578
    %v1580 = vsel %vm1566, %v1577, %v1579
    %v1581 = vshll.u32 %v1541, 8
    %v1582 = vmul.u32.u64.compose %v1581, %v1580
    %v1583 = vextract.low.u32 %v1582
    %v1584 = vextract.high.u32 %v1582
    %v1585 = vmul.u32.u64.compose %v1581, %v1576
    %v1586 = vextract.low.u32 %v1585
    %v1587 = vextract.high.u32 %v1585
    %v1588 = vmul.u32 %v1581, %v1572
    %v1589 = vadd.s32 %v1584, %v1586
    %vm1590 = vc.u32 %v1584, %v1586
    %v1591 = vadd.s32 %v1587, 1
    %v1592 = vsel %vm1590, %v1591, %v1587
    %v1593 = vadd.s32 %v1588, %v1592
    %v1594 = vadd.s32 %v1593, 536870912
    %v1595 = vshrl.u32 %v1594, 30
    %v1596 = vshll.u32 %v1595, 30
    %v1597 = vsub.s32 %v1593, %v1596
    %vm1598 = vcmp.lt.s32.totalorder %v1597, 0
    %v1599 = vsub.s32 0, %v1597
    %v1600 = vsel %vm1598, %v1599, %v1597
    %v1601 = vclz %v1600
    %v1602 = vsub.s32 %v1601, 2
    %vm1603 = vcmp.gt.s32.totalorder 0, %v1602
    %v1604 = vsel %vm1603, 0, %v1602
    %v1605 = vsub.s32 32, %v1604
    %v1606 = vshll.u32 %v1597, %v1604
    %v1607 = vshrl.u32 %v1589, %v1605
    %v1608 = vor.u32 %v1606, %v1607
    %v1609 = vsub.s32 4294967266, %v1604
    %v1610 = vadd.s32 %v1609, 127
    %v1611 = vshll.u32 %v1610, 23
    %v1612 = vor.u32 4788187, %v1611
    %v1613 = vand.u32 2147483647, %v1612
    %v1615 = vcvt.s32.f32 %v1608
    %v1616 = vmul.f32 %v1615, %v1613
    %v1617 = vxor.u32 %v1616, 2147483648
    %v1618 = vsel %vm1535, %v1617, %v1616
    %v1619 = vsub.s32 4, %v1595
    %v1620 = vsel %vm1535, %v1619, %v1595
    %v1621 = vsel %vm1534, %v1428, %v1618
    %v1622 = vsel %vm1534, 0, %v1620
    %v1623 = vcosq.f32.pop %v1621
    %v1624 = vsinq.f32.pop %v1621
    %vm1625 = vweird.f32 %v1428
    %v1626 = vand.u32 %v1622, 3
    %vm1627 = vcmp.lt.s32.totalorder %v1626, 2
    %vm1628 = vcmp.eq.s32.totalorder %v1626, 0
    %v1629 = vxor.u32 %v1624, 2147483648
    %v1630 = vsel %vm1628, %v1623, %v1629
    %vm1631 = vcmp.eq.s32.totalorder %v1626, 2
    %v1632 = vxor.u32 %v1623, 2147483648
    %v1633 = vsel %vm1631, %v1632, %v1624
    %v1634 = vsel %vm1627, %v1630, %v1633
    %v1635 = vsel %vm1625, nan, %v1634
    %v1636 = vmul.f32 %v916, %v916
    %v1637 = vstv %s936
    %v1638 = vmul.f32 %v1532, %v1637
    %v1639 = vstv %s940
    %v1640 = vmul.f32 %v1639, %v916
    %v1641 = vadd.f32 %v1638, %v1640
    %v1642 = vsub.f32 1.0, %v1635
    %v1643 = vstv %s937
    %v1644 = vmul.f32 %v1642, %v1643
    %v1645 = vmul.f32 %v1636, 0.5
    %v1646 = vmul.f32 %v1639, %v1645
    %v1647 = vadd.f32 %v1644, %v1646
    %v1648 = vsub.f32 %v1428, %v1532
    %v1649 = vstv %s938
    %v1650 = vmul.f32 %v1648, %v1649
    %v1651 = vmul.f32 %v1636, %v916
    %v1652 = vmul.f32 %v1651, 0.16666667
    %v1653 = vmul.f32 %v1639, %v1652
    %v1654 = vadd.f32 %v1650, %v1653
    %s1655 = ssub.f32 0.0, %s931
    %s1656 = ssub.f32 0.0, %s929
    %s1657 = ssub.f32 0.0, %s930
    %s1658 = smul.f32 %s929, %s929
    %s1659 = ssub.f32 %s1658, %s939
    %s1660 = smul.f32 %s929, %s930
    %s1661 = smul.f32 %s929, %s931
    %s1662 = smul.f32 %s930, %s930
    %s1663 = ssub.f32 %s1662, %s939
    %s1664 = smul.f32 %s930, %s931
    %s1665 = smul.f32 %s931, %s931
    %s1666 = ssub.f32 %s1665, %s939
    %s1667 = smul.f32 %s930, %s934
    %s1668 = smul.f32 %s931, %s933
    %s1669 = ssub.f32 %s1667, %s1668
    %s1670 = smul.f32 %s931, %s932
    %s1671 = smul.f32 %s929, %s934
    %s1672 = ssub.f32 %s1670, %s1671
    %s1673 = smul.f32 %s929, %s933
    %s1674 = smul.f32 %s930, %s932
    %s1675 = ssub.f32 %s1673, %s1674
    %s1676 = smul.f32 %s930, %s1675
    %s1677 = smul.f32 %s931, %s1672
    %s1678 = ssub.f32 %s1676, %s1677
    %s1679 = smul.f32 %s931, %s1669
    %s1680 = smul.f32 %s929, %s1675
    %s1681 = ssub.f32 %s1679, %s1680
    %s1682 = smul.f32 %s929, %s1672
    %s1683 = smul.f32 %s930, %s1669
    %s1684 = ssub.f32 %s1682, %s1683
    %v1685 = vstv %s1659
    %v1686 = vmul.f32 %v1647, %v1685
    %v1687 = vadd.f32 %v1686, 1.0
    %v1688 = vstv %s1655
    %v1689 = vmul.f32 %v1641, %v1688
    %v1690 = vstv %s1660
    %v1691 = vmul.f32 %v1647, %v1690
    %v1692 = vadd.f32 %v1689, %v1691
    %v1693 = vmul.f32 %v1641, %v1384
    %v1694 = vstv %s1661
    %v1695 = vmul.f32 %v1647, %v1694
    %v1696 = vadd.f32 %v1693, %v1695
    %v1697 = vmul.f32 %v1641, %v1382
    %v1698 = vadd.f32 %v1697, %v1691
    %v1699 = vstv %s1663
    %v1700 = vmul.f32 %v1647, %v1699
    %v1701 = vadd.f32 %v1700, 1.0
    %v1702 = vstv %s1656
    %v1703 = vmul.f32 %v1641, %v1702
    %v1704 = vstv %s1664
    %v1705 = vmul.f32 %v1647, %v1704
    %v1706 = vadd.f32 %v1703, %v1705
    %v1707 = vstv %s1657
    %v1708 = vmul.f32 %v1641, %v1707
    %v1709 = vadd.f32 %v1708, %v1695
    %v1710 = vmul.f32 %v1641, %v1387
    %v1711 = vadd.f32 %v1710, %v1705
    %v1712 = vstv %s1666
    %v1713 = vmul.f32 %v1647, %v1712
    %v1714 = vadd.f32 %v1713, 1.0
    %v1715 = vmul.f32 %v916, %v1394
    %v1716 = vstv %s1669
    %v1717 = vmul.f32 %v1647, %v1716
    %v1718 = vadd.f32 %v1715, %v1717
    %v1719 = vstv %s1678
    %v1720 = vmul.f32 %v1654, %v1719
    %v1721 = vadd.f32 %v1718, %v1720
    %v1722 = vmul.f32 %v916, %v1396
    %v1723 = vstv %s1672
    %v1724 = vmul.f32 %v1647, %v1723
    %v1725 = vadd.f32 %v1722, %v1724
    %v1726 = vstv %s1681
    %v1727 = vmul.f32 %v1654, %v1726
    %v1728 = vadd.f32 %v1725, %v1727
    %v1729 = vmul.f32 %v916, %v1398
    %v1730 = vstv %s1675
    %v1731 = vmul.f32 %v1647, %v1730
    %v1732 = vadd.f32 %v1729, %v1731
    %v1733 = vstv %s1684
    %v1734 = vmul.f32 %v1654, %v1733
    %v1735 = vadd.f32 %v1732, %v1734
    %v1736 = vmul.f32 %v1323, %v1687
    %v1737 = vmul.f32 %v1328, %v1698
    %v1738 = vadd.f32 %v1736, %v1737
    %v1739 = vmul.f32 %v1333, %v1709
    %v1740 = vadd.f32 %v1738, %v1739
    %v1741 = vmul.f32 %v1323, %v1692
    %v1742 = vmul.f32 %v1328, %v1701
    %v1743 = vadd.f32 %v1741, %v1742
    %v1744 = vmul.f32 %v1333, %v1711
    %v1745 = vadd.f32 %v1743, %v1744
    %v1746 = vmul.f32 %v1323, %v1696
    %v1747 = vmul.f32 %v1328, %v1706
    %v1748 = vadd.f32 %v1746, %v1747
    %v1749 = vmul.f32 %v1333, %v1714
    %v1750 = vadd.f32 %v1748, %v1749
    %v1751 = vmul.f32 %v1338, %v1687
    %v1752 = vmul.f32 %v1343, %v1698
    %v1753 = vadd.f32 %v1751, %v1752
    %v1754 = vmul.f32 %v1348, %v1709
    %v1755 = vadd.f32 %v1753, %v1754
    %v1756 = vmul.f32 %v1338, %v1692
    %v1757 = vmul.f32 %v1343, %v1701
    %v1758 = vadd.f32 %v1756, %v1757
    %v1759 = vmul.f32 %v1348, %v1711
    %v1760 = vadd.f32 %v1758, %v1759
    %v1761 = vmul.f32 %v1338, %v1696
    %v1762 = vmul.f32 %v1343, %v1706
    %v1763 = vadd.f32 %v1761, %v1762
    %v1764 = vmul.f32 %v1348, %v1714
    %v1765 = vadd.f32 %v1763, %v1764
    %v1766 = vmul.f32 %v1353, %v1687
    %v1767 = vmul.f32 %v1358, %v1698
    %v1768 = vadd.f32 %v1766, %v1767
    %v1769 = vmul.f32 %v1363, %v1709
    %v1770 = vadd.f32 %v1768, %v1769
    %v1771 = vmul.f32 %v1353, %v1692
    %v1772 = vmul.f32 %v1358, %v1701
    %v1773 = vadd.f32 %v1771, %v1772
    %v1774 = vmul.f32 %v1363, %v1711
    %v1775 = vadd.f32 %v1773, %v1774
    %v1776 = vmul.f32 %v1353, %v1696
    %v1777 = vmul.f32 %v1358, %v1706
    %v1778 = vadd.f32 %v1776, %v1777
    %v1779 = vmul.f32 %v1363, %v1714
    %v1780 = vadd.f32 %v1778, %v1779
    %v1781 = vmul.f32 %v1323, %v1721
    %v1782 = vmul.f32 %v1328, %v1728
    %v1783 = vadd.f32 %v1781, %v1782
    %v1784 = vmul.f32 %v1333, %v1735
    %v1785 = vadd.f32 %v1783, %v1784
    %v1786 = vadd.f32 %v1785, %v1369
    %v1787 = vmul.f32 %v1338, %v1721
    %v1788 = vmul.f32 %v1343, %v1728
    %v1789 = vadd.f32 %v1787, %v1788
    %v1790 = vmul.f32 %v1348, %v1735
    %v1791 = vadd.f32 %v1789, %v1790
    %v1792 = vadd.f32 %v1791, %v1375
    %v1793 = vmul.f32 %v1353, %v1721
    %v1794 = vmul.f32 %v1358, %v1728
    %v1795 = vadd.f32 %v1793, %v1794
    %v1796 = vmul.f32 %v1363, %v1735
    %v1797 = vadd.f32 %v1795, %v1796
    %v1798 = vadd.f32 %v1797, %v1381
    %s1799 = sld [smem:[#allocation9 + $0x10]]
    %s1800 = sld [smem:[#allocation9 + $0x11]]
    %s1801 = sld [smem:[#allocation9 + $0x12]]
    %s1802 = sld [smem:[#allocation9 + $0x14]]
    %s1803 = sld [smem:[#allocation9 + $0x15]]
    %s1804 = sld [smem:[#allocation9 + $0x16]]
    %s1805 = sld [smem:[#allocation9 + $0x18]]
    %s1806 = sld [smem:[#allocation9 + $0x19]]
    %s1807 = sld [smem:[#allocation9 + $0x1a]]
    %s1808 = sld [smem:[#allocation9 + $0x13]]
    %s1809 = sld [smem:[#allocation9 + $0x17]]
    %s1810 = sld [smem:[#allocation9 + $0x1b]]
    %v1811 = vstv %s1799
    %v1812 = vmul.f32 %v1740, %v1811
    %v1813 = vstv %s1802
    %v1814 = vmul.f32 %v1745, %v1813
    %v1815 = vadd.f32 %v1812, %v1814
    %v1816 = vstv %s1805
    %v1817 = vmul.f32 %v1750, %v1816
    %v1818 = vadd.f32 %v1815, %v1817
    %v1819 = vstv %s1800
    %v1820 = vmul.f32 %v1740, %v1819
    %v1821 = vstv %s1803
    %v1822 = vmul.f32 %v1745, %v1821
    %v1823 = vadd.f32 %v1820, %v1822
    %v1824 = vstv %s1806
    %v1825 = vmul.f32 %v1750, %v1824
    %v1826 = vadd.f32 %v1823, %v1825
    %v1827 = vstv %s1801
    %v1828 = vmul.f32 %v1740, %v1827
    %v1829 = vstv %s1804
    %v1830 = vmul.f32 %v1745, %v1829
    %v1831 = vadd.f32 %v1828, %v1830
    %v1832 = vstv %s1807
    %v1833 = vmul.f32 %v1750, %v1832
    %v1834 = vadd.f32 %v1831, %v1833
    %v1835 = vmul.f32 %v1755, %v1811
    %v1836 = vmul.f32 %v1760, %v1813
    %v1837 = vadd.f32 %v1835, %v1836
    %v1838 = vmul.f32 %v1765, %v1816
    %v1839 = vadd.f32 %v1837, %v1838
    %v1840 = vmul.f32 %v1755, %v1819
    %v1841 = vmul.f32 %v1760, %v1821
    %v1842 = vadd.f32 %v1840, %v1841
    %v1843 = vmul.f32 %v1765, %v1824
    %v1844 = vadd.f32 %v1842, %v1843
    %v1845 = vmul.f32 %v1755, %v1827
    %v1846 = vmul.f32 %v1760, %v1829
    %v1847 = vadd.f32 %v1845, %v1846
    %v1848 = vmul.f32 %v1765, %v1832
    %v1849 = vadd.f32 %v1847, %v1848
    %v1850 = vmul.f32 %v1770, %v1811
    %v1851 = vmul.f32 %v1775, %v1813
    %v1852 = vadd.f32 %v1850, %v1851
    %v1853 = vmul.f32 %v1780, %v1816
    %v1854 = vadd.f32 %v1852, %v1853
    %v1855 = vmul.f32 %v1770, %v1819
    %v1856 = vmul.f32 %v1775, %v1821
    %v1857 = vadd.f32 %v1855, %v1856
    %v1858 = vmul.f32 %v1780, %v1824
    %v1859 = vadd.f32 %v1857, %v1858
    %v1860 = vmul.f32 %v1770, %v1827
    %v1861 = vmul.f32 %v1775, %v1829
    %v1862 = vadd.f32 %v1860, %v1861
    %v1863 = vmul.f32 %v1780, %v1832
    %v1864 = vadd.f32 %v1862, %v1863
    %v1865 = vstv %s1808
    %v1866 = vmul.f32 %v1740, %v1865
    %v1867 = vstv %s1809
    %v1868 = vmul.f32 %v1745, %v1867
    %v1869 = vadd.f32 %v1866, %v1868
    %v1870 = vstv %s1810
    %v1871 = vmul.f32 %v1750, %v1870
    %v1872 = vadd.f32 %v1869, %v1871
    %v1873 = vadd.f32 %v1872, %v1786
    %v1874 = vmul.f32 %v1755, %v1865
    %v1875 = vmul.f32 %v1760, %v1867
    %v1876 = vadd.f32 %v1874, %v1875
    %v1877 = vmul.f32 %v1765, %v1870
    %v1878 = vadd.f32 %v1876, %v1877
    %v1879 = vadd.f32 %v1878, %v1792
    %v1880 = vmul.f32 %v1770, %v1865
    %v1881 = vmul.f32 %v1775, %v1867
    %v1882 = vadd.f32 %v1880, %v1881
    %v1883 = vmul.f32 %v1780, %v1870
    %v1884 = vadd.f32 %v1882, %v1883
    %v1885 = vadd.f32 %v1884, %v1798
    %1886 = vst [vmem:[#allocation10] sm:$0xff] %v1818
    %s1887 = scalar_lea.vmem [#allocation10], 8
    %1888 = vst [vmem:[%s1887] sm:$0xff] %v1826
    %s1889 = scalar_lea.vmem [#allocation10], 16
    %1890 = vst [vmem:[%s1889] sm:$0xff] %v1834
    %s1891 = scalar_lea.vmem [#allocation10], 24
    %1892 = vst [vmem:[%s1891] sm:$0xff] %v1873
    %s1893 = scalar_lea.vmem [#allocation10], 32
    %1894 = vst [vmem:[%s1893] sm:$0xff] %v1839
    %s1895 = scalar_lea.vmem [#allocation10], 40
    %1896 = vst [vmem:[%s1895] sm:$0xff] %v1844
    %s1897 = scalar_lea.vmem [#allocation10], 48
    %1898 = vst [vmem:[%s1897] sm:$0xff] %v1849
    %s1899 = scalar_lea.vmem [#allocation10], 56
    %1900 = vst [vmem:[%s1899] sm:$0xff] %v1879
    %s1901 = scalar_lea.vmem [#allocation10], 64
    %1902 = vst [vmem:[%s1901] sm:$0xff] %v1854
    %s1903 = scalar_lea.vmem [#allocation10], 72
    %1904 = vst [vmem:[%s1903] sm:$0xff] %v1859
    %s1905 = scalar_lea.vmem [#allocation10], 80
    %1906 = vst [vmem:[%s1905] sm:$0xff] %v1864
    %s1907 = scalar_lea.vmem [#allocation10], 88
    %1908 = vst [vmem:[%s1907] sm:$0xff] %v1885
    %s1909 = scalar_lea.vmem [#allocation10], 96
    %1910 = vst [vmem:[%s1909] sm:$0xff] 0.0
    %s1911 = scalar_lea.vmem [#allocation10], 104
    %1912 = vst [vmem:[%s1911] sm:$0xff] 0.0
    %s1913 = scalar_lea.vmem [#allocation10], 112
    %1914 = vst [vmem:[%s1913] sm:$0xff] 0.0
    %s1915 = scalar_lea.vmem [#allocation10], 120
    %1916 = vst [vmem:[%s1915] sm:$0xff] 1.0
    %s1917 = scalar_lea.vmem [#allocation2], 32
    %v1918 = vld [vmem:[%s1917] sm:$0xff]
    %s1919 = scalar_lea.vmem [#allocation2], 40
    %v1920 = vld [vmem:[%s1919] sm:$0xff]
    %s1921 = sld [smem:[#allocation6 + $0x18]]
    %s1922 = sld [smem:[#allocation6 + $0x19]]
    %s1923 = sld [smem:[#allocation6 + $0x1a]]
    %s1924 = sld [smem:[#allocation6 + $0x1b]]
    %s1925 = sld [smem:[#allocation6 + $0x1c]]
    %s1926 = sld [smem:[#allocation6 + $0x1d]]
    %s1927 = sld [smem:[#allocation6 + $0x1e]]
    %s1928 = sld [smem:[#allocation6 + $0x1f]]
    %s1929 = sld [smem:[#allocation6 + $0x20]]
    %s1930 = sld [smem:[#allocation6 + $0x21]]
    %s1931 = sld [smem:[#allocation6 + $0x22]]
    %s1932 = sld [smem:[#allocation6 + $0x23]]
    %s1933 = sld [smem:[#allocation7 + $0x18]]
    %s1934 = sld [smem:[#allocation7 + $0x19]]
    %s1935 = sld [smem:[#allocation7 + $0x1a]]
    %s1936 = sld [smem:[#allocation7 + $0x1b]]
    %s1937 = sld [smem:[#allocation7 + $0x1c]]
    %s1938 = sld [smem:[#allocation7 + $0x1d]]
    %s1939 = sld [smem:[#allocation7 + $0x1e]]
    %s1940 = sld [smem:[#allocation7 + $0x1f]]
    %s1941 = sld [smem:[#allocation7 + $0x20]]
    %s1942 = sld [smem:[#allocation7 + $0x21]]
    %s1943 = sld [smem:[#allocation7 + $0x22]]
    %s1944 = sld [smem:[#allocation7 + $0x23]]
    %v1945 = vstv %s1921
    %v1946 = vmul.f32 %v1740, %v1945
    %v1947 = vstv %s1922
    %v1948 = vmul.f32 %v1755, %v1947
    %v1949 = vadd.f32 %v1946, %v1948
    %v1950 = vstv %s1923
    %v1951 = vmul.f32 %v1770, %v1950
    %v1952 = vadd.f32 %v1949, %v1951
    %v1953 = vmul.f32 %v1745, %v1945
    %v1954 = vmul.f32 %v1760, %v1947
    %v1955 = vadd.f32 %v1953, %v1954
    %v1956 = vmul.f32 %v1775, %v1950
    %v1957 = vadd.f32 %v1955, %v1956
    %v1958 = vmul.f32 %v1750, %v1945
    %v1959 = vmul.f32 %v1765, %v1947
    %v1960 = vadd.f32 %v1958, %v1959
    %v1961 = vmul.f32 %v1780, %v1950
    %v1962 = vadd.f32 %v1960, %v1961
    %v1963 = vmul.f32 %v1792, %v1950
    %v1964 = vmul.f32 %v1798, %v1947
    %v1965 = vsub.f32 %v1963, %v1964
    %v1966 = vmul.f32 %v1798, %v1945
    %v1967 = vmul.f32 %v1786, %v1950
    %v1968 = vsub.f32 %v1966, %v1967
    %v1969 = vmul.f32 %v1786, %v1947
    %v1970 = vmul.f32 %v1792, %v1945
    %v1971 = vsub.f32 %v1969, %v1970
    %v1972 = vstv %s1924
    %v1973 = vsub.f32 %v1972, %v1965
    %v1974 = vstv %s1925
    %v1975 = vsub.f32 %v1974, %v1968
    %v1976 = vstv %s1926
    %v1977 = vsub.f32 %v1976, %v1971
    %v1978 = vmul.f32 %v1740, %v1973
    %v1979 = vmul.f32 %v1755, %v1975
    %v1980 = vadd.f32 %v1978, %v1979
    %v1981 = vmul.f32 %v1770, %v1977
    %v1982 = vadd.f32 %v1980, %v1981
    %v1983 = vmul.f32 %v1745, %v1973
    %v1984 = vmul.f32 %v1760, %v1975
    %v1985 = vadd.f32 %v1983, %v1984
    %v1986 = vmul.f32 %v1775, %v1977
    %v1987 = vadd.f32 %v1985, %v1986
    %v1988 = vmul.f32 %v1750, %v1973
    %v1989 = vmul.f32 %v1765, %v1975
    %v1990 = vadd.f32 %v1988, %v1989
    %v1991 = vmul.f32 %v1780, %v1977
    %v1992 = vadd.f32 %v1990, %v1991
    %s1993 = scalar_lea.vmem [#allocation11], 96
    %1994 = vst [vmem:[%s1993] sm:$0xff] %v1952
    %v1995 = vmul.f32 %v1952, %v1982
    %v1996 = vsub.f32 1.0, %v1995
    %v1997 = vmul.f32 %v1996, %v1982
    %s1998 = scalar_lea.vmem [#allocation11], 120
    %1999 = vst [vmem:[%s1998] sm:$0xff] %v1997
    %s2000 = scalar_lea.vmem [#allocation11], 104
    %2001 = vst [vmem:[%s2000] sm:$0xff] %v1957
    %v2002 = vmul.f32 %v1957, %v1987
    %v2003 = vsub.f32 1.0, %v2002
    %v2004 = vmul.f32 %v2003, %v1987
    %s2005 = scalar_lea.vmem [#allocation11], 128
    %2006 = vst [vmem:[%s2005] sm:$0xff] %v2004
    %s2007 = scalar_lea.vmem [#allocation11], 112
    %2008 = vst [vmem:[%s2007] sm:$0xff] %v1962
    %v2009 = vmul.f32 %v1962, %v1992
    %v2010 = vsub.f32 1.0, %v2009
    %v2011 = vmul.f32 %v2010, %v1992
    %s2012 = scalar_lea.vmem [#allocation11], 136
    %2013 = vst [vmem:[%s2012] sm:$0xff] %v2011
    %v2014 = vstv %s1927
    %v2015 = vmul.f32 %v2014, %v1918
    %v2016 = vand.u32 2147483647, %v2015
    %vm2017 = vcmp.le.f32.partialorder %v2016, 0.7853982
    %vm2018 = vcmp.lt.s32.totalorder %v2015, 0
    %v2019 = vand.u32 %v2015, 2139095040
    %v2020 = vshrl.u32 %v2019, 23
    %v2021 = vsub.s32 %v2020, 127
    %v2022 = vand.u32 2147483647, %v2015
    %v2023 = vand.u32 %v2022, 8388607
    %v2024 = vor.u32 %v2023, 8388608
    %v2025 = vsub.s32 0, %v2024
    %v2026 = vadd.s32 %v2021, 1
    %vm2027 = vcmp.gt.s32.totalorder %v2026, 0
    %v2028 = vsel %vm2027, %v2026, 0
    %v2029 = vshrl.u32 %v2028, 5
    %v2030 = vand.u32 %v2028, 31
    %v2031 = vsub.s32 32, %v2030
    %v2032 = vshrl.u32 683565275, %v2031
    %v2033 = vshll.u32 683565275, %v2030
    %v2034 = vshrl.u32 2475754826, %v2031
    %v2035 = vor.u32 %v2033, %v2034
    %v2036 = vshll.u32 2475754826, %v2030
    %v2037 = vshrl.u32 2131351028, %v2031
    %v2038 = vor.u32 %v2036, %v2037
    %v2039 = vshll.u32 2131351028, %v2030
    %v2040 = vshrl.u32 2102212464, %v2031
    %v2041 = vor.u32 %v2039, %v2040
    %v2042 = vshll.u32 2102212464, %v2030
    %v2043 = vshrl.u32 920167782, %v2031
    %v2044 = vor.u32 %v2042, %v2043
    %v2045 = vshll.u32 920167782, %v2030
    %v2046 = vshrl.u32 1326507024, %v2031
    %v2047 = vor.u32 %v2045, %v2046
    %vm2048 = vcmp.lt.s32.totalorder %v2029, 1
    %vm2049 = vcmp.lt.s32.totalorder %v2029, 2
    %vm2050 = vcmp.lt.s32.totalorder %v2029, 3
    %vm2051 = vcmp.lt.s32.totalorder %v2029, 4
    %v2052 = vsel %vm2048, %v2032, %v2035
    %v2053 = vsel %vm2051, %v2041, 2102212464
    %v2054 = vsel %vm2050, %v2038, %v2053
    %v2055 = vsel %vm2049, %v2052, %v2054
    %v2056 = vsel %vm2048, %v2035, %v2038
    %v2057 = vsel %vm2051, %v2044, 920167782
    %v2058 = vsel %vm2050, %v2041, %v2057
    %v2059 = vsel %vm2049, %v2056, %v2058
    %v2060 = vsel %vm2048, %v2038, %v2041
    %v2061 = vsel %vm2051, %v2047, 1326507024
    %v2062 = vsel %vm2050, %v2044, %v2061
    %v2063 = vsel %vm2049, %v2060, %v2062
    %v2064 = vshll.u32 %v2024, 8
    %v2065 = vmul.u32.u64.compose %v2064, %v2063
    %v2066 = vextract.low.u32 %v2065
    %v2067 = vextract.high.u32 %v2065
    %v2068 = vmul.u32.u64.compose %v2064, %v2059
    %v2069 = vextract.low.u32 %v2068
    %v2070 = vextract.high.u32 %v2068
    %v2071 = vmul.u32 %v2064, %v2055
    %v2072 = vadd.s32 %v2067, %v2069
    %vm2073 = vc.u32 %v2067, %v2069
    %v2074 = vadd.s32 %v2070, 1
    %v2075 = vsel %vm2073, %v2074, %v2070
    %v2076 = vadd.s32 %v2071, %v2075
    %v2077 = vadd.s32 %v2076, 536870912
    %v2078 = vshrl.u32 %v2077, 30
    %v2079 = vshll.u32 %v2078, 30
    %v2080 = vsub.s32 %v2076, %v2079
    %vm2081 = vcmp.lt.s32.totalorder %v2080, 0
    %v2082 = vsub.s32 0, %v2080
    %v2083 = vsel %vm2081, %v2082, %v2080
    %v2084 = vclz %v2083
    %v2085 = vsub.s32 %v2084, 2
    %vm2086 = vcmp.gt.s32.totalorder 0, %v2085
    %v2087 = vsel %vm2086, 0, %v2085
    %v2088 = vsub.s32 32, %v2087
    %v2089 = vshll.u32 %v2080, %v2087
    %v2090 = vshrl.u32 %v2072, %v2088
    %v2091 = vor.u32 %v2089, %v2090
    %v2092 = vsub.s32 4294967266, %v2087
    %v2093 = vadd.s32 %v2092, 127
    %v2094 = vshll.u32 %v2093, 23
    %v2095 = vor.u32 4788187, %v2094
    %v2096 = vand.u32 2147483647, %v2095
    %v2098 = vcvt.s32.f32 %v2091
    %v2099 = vmul.f32 %v2098, %v2096
    %v2100 = vxor.u32 %v2099, 2147483648
    %v2101 = vsel %vm2018, %v2100, %v2099
    %v2102 = vsub.s32 4, %v2078
    %v2103 = vsel %vm2018, %v2102, %v2078
    %v2104 = vsel %vm2017, %v2015, %v2101
    %v2105 = vsel %vm2017, 0, %v2103
    %v2106 = vcosq.f32.pop %v2104
    %v2107 = vsinq.f32.pop %v2104
    %vm2108 = vweird.f32 %v2015
    %v2109 = vadd.s32 %v2105, 3
    %v2110 = vand.u32 %v2109, 3
    %vm2111 = vcmp.lt.s32.totalorder %v2110, 2
    %vm2112 = vcmp.eq.s32.totalorder %v2110, 0
    %v2113 = vxor.u32 %v2107, 2147483648
    %v2114 = vsel %vm2112, %v2106, %v2113
    %vm2115 = vcmp.eq.s32.totalorder %v2110, 2
    %v2116 = vxor.u32 %v2106, 2147483648
    %v2117 = vsel %vm2115, %v2116, %v2107
    %v2118 = vsel %vm2111, %v2114, %v2117
    %v2119 = vsel %vm2108, nan, %v2118
    %v2120 = vand.u32 2147483647, %v2015
    %vm2121 = vcmp.le.f32.partialorder %v2120, 0.7853982
    %vm2122 = vcmp.lt.s32.totalorder %v2015, 0
    %v2123 = vand.u32 %v2015, 2139095040
    %v2124 = vshrl.u32 %v2123, 23
    %v2125 = vsub.s32 %v2124, 127
    %v2126 = vand.u32 2147483647, %v2015
    %v2127 = vand.u32 %v2126, 8388607
    %v2128 = vor.u32 %v2127, 8388608
    %v2129 = vsub.s32 0, %v2128
    %v2130 = vadd.s32 %v2125, 1
    %vm2131 = vcmp.gt.s32.totalorder %v2130, 0
    %v2132 = vsel %vm2131, %v2130, 0
    %v2133 = vshrl.u32 %v2132, 5
    %v2134 = vand.u32 %v2132, 31
    %v2135 = vsub.s32 32, %v2134
    %v2136 = vshrl.u32 683565275, %v2135
    %v2137 = vshll.u32 683565275, %v2134
    %v2138 = vshrl.u32 2475754826, %v2135
    %v2139 = vor.u32 %v2137, %v2138
    %v2140 = vshll.u32 2475754826, %v2134
    %v2141 = vshrl.u32 2131351028, %v2135
    %v2142 = vor.u32 %v2140, %v2141
    %v2143 = vshll.u32 2131351028, %v2134
    %v2144 = vshrl.u32 2102212464, %v2135
    %v2145 = vor.u32 %v2143, %v2144
    %v2146 = vshll.u32 2102212464, %v2134
    %v2147 = vshrl.u32 920167782, %v2135
    %v2148 = vor.u32 %v2146, %v2147
    %v2149 = vshll.u32 920167782, %v2134
    %v2150 = vshrl.u32 1326507024, %v2135
    %v2151 = vor.u32 %v2149, %v2150
    %vm2152 = vcmp.lt.s32.totalorder %v2133, 1
    %vm2153 = vcmp.lt.s32.totalorder %v2133, 2
    %vm2154 = vcmp.lt.s32.totalorder %v2133, 3
    %vm2155 = vcmp.lt.s32.totalorder %v2133, 4
    %v2156 = vsel %vm2152, %v2136, %v2139
    %v2157 = vsel %vm2155, %v2145, 2102212464
    %v2158 = vsel %vm2154, %v2142, %v2157
    %v2159 = vsel %vm2153, %v2156, %v2158
    %v2160 = vsel %vm2152, %v2139, %v2142
    %v2161 = vsel %vm2155, %v2148, 920167782
    %v2162 = vsel %vm2154, %v2145, %v2161
    %v2163 = vsel %vm2153, %v2160, %v2162
    %v2164 = vsel %vm2152, %v2142, %v2145
    %v2165 = vsel %vm2155, %v2151, 1326507024
    %v2166 = vsel %vm2154, %v2148, %v2165
    %v2167 = vsel %vm2153, %v2164, %v2166
    %v2168 = vshll.u32 %v2128, 8
    %v2169 = vmul.u32.u64.compose %v2168, %v2167
    %v2170 = vextract.low.u32 %v2169
    %v2171 = vextract.high.u32 %v2169
    %v2172 = vmul.u32.u64.compose %v2168, %v2163
    %v2173 = vextract.low.u32 %v2172
    %v2174 = vextract.high.u32 %v2172
    %v2175 = vmul.u32 %v2168, %v2159
    %v2176 = vadd.s32 %v2171, %v2173
    %vm2177 = vc.u32 %v2171, %v2173
    %v2178 = vadd.s32 %v2174, 1
    %v2179 = vsel %vm2177, %v2178, %v2174
    %v2180 = vadd.s32 %v2175, %v2179
    %v2181 = vadd.s32 %v2180, 536870912
    %v2182 = vshrl.u32 %v2181, 30
    %v2183 = vshll.u32 %v2182, 30
    %v2184 = vsub.s32 %v2180, %v2183
    %vm2185 = vcmp.lt.s32.totalorder %v2184, 0
    %v2186 = vsub.s32 0, %v2184
    %v2187 = vsel %vm2185, %v2186, %v2184
    %v2188 = vclz %v2187
    %v2189 = vsub.s32 %v2188, 2
    %vm2190 = vcmp.gt.s32.totalorder 0, %v2189
    %v2191 = vsel %vm2190, 0, %v2189
    %v2192 = vsub.s32 32, %v2191
    %v2193 = vshll.u32 %v2184, %v2191
    %v2194 = vshrl.u32 %v2176, %v2192
    %v2195 = vor.u32 %v2193, %v2194
    %v2196 = vsub.s32 4294967266, %v2191
    %v2197 = vadd.s32 %v2196, 127
    %v2198 = vshll.u32 %v2197, 23
    %v2199 = vor.u32 4788187, %v2198
    %v2200 = vand.u32 2147483647, %v2199
    %v2202 = vcvt.s32.f32 %v2195
    %v2203 = vmul.f32 %v2202, %v2200
    %v2204 = vxor.u32 %v2203, 2147483648
    %v2205 = vsel %vm2122, %v2204, %v2203
    %v2206 = vsub.s32 4, %v2182
    %v2207 = vsel %vm2122, %v2206, %v2182
    %v2208 = vsel %vm2121, %v2015, %v2205
    %v2209 = vsel %vm2121, 0, %v2207
    %v2210 = vcosq.f32.pop %v2208
    %v2211 = vsinq.f32.pop %v2208
    %vm2212 = vweird.f32 %v2015
    %v2213 = vand.u32 %v2209, 3
    %vm2214 = vcmp.lt.s32.totalorder %v2213, 2
    %vm2215 = vcmp.eq.s32.totalorder %v2213, 0
    %v2216 = vxor.u32 %v2211, 2147483648
    %v2217 = vsel %vm2215, %v2210, %v2216
    %vm2218 = vcmp.eq.s32.totalorder %v2213, 2
    %v2219 = vxor.u32 %v2210, 2147483648
    %v2220 = vsel %vm2218, %v2219, %v2211
    %v2221 = vsel %vm2214, %v2217, %v2220
    %v2222 = vsel %vm2212, nan, %v2221
    %v2223 = vmul.f32 %v1918, %v1918
    %v2224 = vstv %s1928
    %v2225 = vmul.f32 %v2119, %v2224
    %v2226 = vstv %s1932
    %v2227 = vmul.f32 %v2226, %v1918
    %v2228 = vadd.f32 %v2225, %v2227
    %v2229 = vsub.f32 1.0, %v2222
    %v2230 = vstv %s1929
    %v2231 = vmul.f32 %v2229, %v2230
    %v2232 = vmul.f32 %v2223, 0.5
    %v2233 = vmul.f32 %v2226, %v2232
    %v2234 = vadd.f32 %v2231, %v2233
    %v2235 = vsub.f32 %v2015, %v2119
    %v2236 = vstv %s1930
    %v2237 = vmul.f32 %v2235, %v2236
    %v2238 = vmul.f32 %v2223, %v1918
    %v2239 = vmul.f32 %v2238, 0.16666667
    %v2240 = vmul.f32 %v2226, %v2239
    %v2241 = vadd.f32 %v2237, %v2240
    %s2242 = ssub.f32 0.0, %s1923
    %s2243 = ssub.f32 0.0, %s1921
    %s2244 = ssub.f32 0.0, %s1922
    %s2245 = smul.f32 %s1921, %s1921
    %s2246 = ssub.f32 %s2245, %s1931
    %s2247 = smul.f32 %s1921, %s1922
    %s2248 = smul.f32 %s1921, %s1923
    %s2249 = smul.f32 %s1922, %s1922
    %s2250 = ssub.f32 %s2249, %s1931
    %s2251 = smul.f32 %s1922, %s1923
    %s2252 = smul.f32 %s1923, %s1923
    %s2253 = ssub.f32 %s2252, %s1931
    %s2254 = smul.f32 %s1922, %s1926
    %s2255 = smul.f32 %s1923, %s1925
    %s2256 = ssub.f32 %s2254, %s2255
    %s2257 = smul.f32 %s1923, %s1924
    %s2258 = smul.f32 %s1921, %s1926
    %s2259 = ssub.f32 %s2257, %s2258
    %s2260 = smul.f32 %s1921, %s1925
    %s2261 = smul.f32 %s1922, %s1924
    %s2262 = ssub.f32 %s2260, %s2261
    %s2263 = smul.f32 %s1922, %s2262
    %s2264 = smul.f32 %s1923, %s2259
    %s2265 = ssub.f32 %s2263, %s2264
    %s2266 = smul.f32 %s1923, %s2256
    %s2267 = smul.f32 %s1921, %s2262
    %s2268 = ssub.f32 %s2266, %s2267
    %s2269 = smul.f32 %s1921, %s2259
    %s2270 = smul.f32 %s1922, %s2256
    %s2271 = ssub.f32 %s2269, %s2270
    %v2272 = vstv %s2246
    %v2273 = vmul.f32 %v2234, %v2272
    %v2274 = vadd.f32 %v2273, 1.0
    %v2275 = vstv %s2242
    %v2276 = vmul.f32 %v2228, %v2275
    %v2277 = vstv %s2247
    %v2278 = vmul.f32 %v2234, %v2277
    %v2279 = vadd.f32 %v2276, %v2278
    %v2280 = vmul.f32 %v2228, %v1947
    %v2281 = vstv %s2248
    %v2282 = vmul.f32 %v2234, %v2281
    %v2283 = vadd.f32 %v2280, %v2282
    %v2284 = vmul.f32 %v2228, %v1950
    %v2285 = vadd.f32 %v2284, %v2278
    %v2286 = vstv %s2250
    %v2287 = vmul.f32 %v2234, %v2286
    %v2288 = vadd.f32 %v2287, 1.0
    %v2289 = vstv %s2243
    %v2290 = vmul.f32 %v2228, %v2289
    %v2291 = vstv %s2251
    %v2292 = vmul.f32 %v2234, %v2291
    %v2293 = vadd.f32 %v2290, %v2292
    %v2294 = vstv %s2244
    %v2295 = vmul.f32 %v2228, %v2294
    %v2296 = vadd.f32 %v2295, %v2282
    %v2297 = vmul.f32 %v2228, %v1945
    %v2298 = vadd.f32 %v2297, %v2292
    %v2299 = vstv %s2253
    %v2300 = vmul.f32 %v2234, %v2299
    %v2301 = vadd.f32 %v2300, 1.0
    %v2302 = vmul.f32 %v1918, %v1972
    %v2303 = vstv %s2256
    %v2304 = vmul.f32 %v2234, %v2303
    %v2305 = vadd.f32 %v2302, %v2304
    %v2306 = vstv %s2265
    %v2307 = vmul.f32 %v2241, %v2306
    %v2308 = vadd.f32 %v2305, %v2307
    %v2309 = vmul.f32 %v1918, %v1974
    %v2310 = vstv %s2259
    %v2311 = vmul.f32 %v2234, %v2310
    %v2312 = vadd.f32 %v2309, %v2311
    %v2313 = vstv %s2268
    %v2314 = vmul.f32 %v2241, %v2313
    %v2315 = vadd.f32 %v2312, %v2314
    %v2316 = vmul.f32 %v1918, %v1976
    %v2317 = vstv %s2262
    %v2318 = vmul.f32 %v2234, %v2317
    %v2319 = vadd.f32 %v2316, %v2318
    %v2320 = vstv %s2271
    %v2321 = vmul.f32 %v2241, %v2320
    %v2322 = vadd.f32 %v2319, %v2321
    %v2323 = vmul.f32 %v1740, %v2274
    %v2324 = vmul.f32 %v1745, %v2285
    %v2325 = vadd.f32 %v2323, %v2324
    %v2326 = vmul.f32 %v1750, %v2296
    %v2327 = vadd.f32 %v2325, %v2326
    %v2328 = vmul.f32 %v1740, %v2279
    %v2329 = vmul.f32 %v1745, %v2288
    %v2330 = vadd.f32 %v2328, %v2329
    %v2331 = vmul.f32 %v1750, %v2298
    %v2332 = vadd.f32 %v2330, %v2331
    %v2333 = vmul.f32 %v1740, %v2283
    %v2334 = vmul.f32 %v1745, %v2293
    %v2335 = vadd.f32 %v2333, %v2334
    %v2336 = vmul.f32 %v1750, %v2301
    %v2337 = vadd.f32 %v2335, %v2336
    %v2338 = vmul.f32 %v1755, %v2274
    %v2339 = vmul.f32 %v1760, %v2285
    %v2340 = vadd.f32 %v2338, %v2339
    %v2341 = vmul.f32 %v1765, %v2296
    %v2342 = vadd.f32 %v2340, %v2341
    %v2343 = vmul.f32 %v1755, %v2279
    %v2344 = vmul.f32 %v1760, %v2288
    %v2345 = vadd.f32 %v2343, %v2344
    %v2346 = vmul.f32 %v1765, %v2298
    %v2347 = vadd.f32 %v2345, %v2346
    %v2348 = vmul.f32 %v1755, %v2283
    %v2349 = vmul.f32 %v1760, %v2293
    %v2350 = vadd.f32 %v2348, %v2349
    %v2351 = vmul.f32 %v1765, %v2301
    %v2352 = vadd.f32 %v2350, %v2351
    %v2353 = vmul.f32 %v1770, %v2274
    %v2354 = vmul.f32 %v1775, %v2285
    %v2355 = vadd.f32 %v2353, %v2354
    %v2356 = vmul.f32 %v1780, %v2296
    %v2357 = vadd.f32 %v2355, %v2356
    %v2358 = vmul.f32 %v1770, %v2279
    %v2359 = vmul.f32 %v1775, %v2288
    %v2360 = vadd.f32 %v2358, %v2359
    %v2361 = vmul.f32 %v1780, %v2298
    %v2362 = vadd.f32 %v2360, %v2361
    %v2363 = vmul.f32 %v1770, %v2283
    %v2364 = vmul.f32 %v1775, %v2293
    %v2365 = vadd.f32 %v2363, %v2364
    %v2366 = vmul.f32 %v1780, %v2301
    %v2367 = vadd.f32 %v2365, %v2366
    %v2368 = vmul.f32 %v1740, %v2308
    %v2369 = vmul.f32 %v1745, %v2315
    %v2370 = vadd.f32 %v2368, %v2369
    %v2371 = vmul.f32 %v1750, %v2322
    %v2372 = vadd.f32 %v2370, %v2371
    %v2373 = vadd.f32 %v2372, %v1786
    %v2374 = vmul.f32 %v1755, %v2308
    %v2375 = vmul.f32 %v1760, %v2315
    %v2376 = vadd.f32 %v2374, %v2375
    %v2377 = vmul.f32 %v1765, %v2322
    %v2378 = vadd.f32 %v2376, %v2377
    %v2379 = vadd.f32 %v2378, %v1792
    %v2380 = vmul.f32 %v1770, %v2308
    %v2381 = vmul.f32 %v1775, %v2315
    %v2382 = vadd.f32 %v2380, %v2381
    %v2383 = vmul.f32 %v1780, %v2322
    %v2384 = vadd.f32 %v2382, %v2383
    %v2385 = vadd.f32 %v2384, %v1798
    %v2386 = vstv %s1935
    %v2387 = vmul.f32 %v2379, %v2386
    %v2388 = vstv %s1934
    %v2389 = vmul.f32 %v2385, %v2388
    %v2390 = vsub.f32 %v2387, %v2389
    %v2391 = vstv %s1933
    %v2392 = vmul.f32 %v2385, %v2391
    %v2393 = vmul.f32 %v2373, %v2386
    %v2394 = vsub.f32 %v2392, %v2393
    %v2395 = vmul.f32 %v2373, %v2388
    %v2396 = vmul.f32 %v2379, %v2391
    %v2397 = vsub.f32 %v2395, %v2396
    %v2398 = vstv %s1936
    %v2399 = vsub.f32 %v2398, %v2390
    %v2400 = vstv %s1937
    %v2401 = vsub.f32 %v2400, %v2394
    %v2402 = vstv %s1938
    %v2403 = vsub.f32 %v2402, %v2397
    %v2404 = vmul.f32 %v2327, %v2399
    %v2405 = vmul.f32 %v2342, %v2401
    %v2406 = vadd.f32 %v2404, %v2405
    %v2407 = vmul.f32 %v2357, %v2403
    %v2408 = vadd.f32 %v2406, %v2407
    %v2409 = vmul.f32 %v2332, %v2399
    %v2410 = vmul.f32 %v2347, %v2401
    %v2411 = vadd.f32 %v2409, %v2410
    %v2412 = vmul.f32 %v2362, %v2403
    %v2413 = vadd.f32 %v2411, %v2412
    %v2414 = vmul.f32 %v2337, %v2399
    %v2415 = vmul.f32 %v2352, %v2401
    %v2416 = vadd.f32 %v2414, %v2415
    %v2417 = vmul.f32 %v2367, %v2403
    %v2418 = vadd.f32 %v2416, %v2417
    %s2419 = scalar_lea.vmem [#allocation13], 96
    %2420 = vst [vmem:[%s2419] sm:$0xff] 0.0
    %s2421 = scalar_lea.vmem [#allocation13], 120
    %2422 = vst [vmem:[%s2421] sm:$0xff] %v2408
    %s2423 = scalar_lea.vmem [#allocation13], 104
    %2424 = vst [vmem:[%s2423] sm:$0xff] 0.0
    %s2425 = scalar_lea.vmem [#allocation13], 128
    %2426 = vst [vmem:[%s2425] sm:$0xff] %v2413
    %s2427 = scalar_lea.vmem [#allocation13], 112
    %2428 = vst [vmem:[%s2427] sm:$0xff] 0.0
    %s2429 = scalar_lea.vmem [#allocation13], 136
    %2430 = vst [vmem:[%s2429] sm:$0xff] %v2418
    %v2431 = vstv %s1939
    %v2432 = vmul.f32 %v2431, %v1920
    %v2433 = vand.u32 2147483647, %v2432
    %vm2434 = vcmp.le.f32.partialorder %v2433, 0.7853982
    %vm2435 = vcmp.lt.s32.totalorder %v2432, 0
    %v2436 = vand.u32 %v2432, 2139095040
    %v2437 = vshrl.u32 %v2436, 23
    %v2438 = vsub.s32 %v2437, 127
    %v2439 = vand.u32 2147483647, %v2432
    %v2440 = vand.u32 %v2439, 8388607
    %v2441 = vor.u32 %v2440, 8388608
    %v2442 = vsub.s32 0, %v2441
    %v2443 = vadd.s32 %v2438, 1
    %vm2444 = vcmp.gt.s32.totalorder %v2443, 0
    %v2445 = vsel %vm2444, %v2443, 0
    %v2446 = vshrl.u32 %v2445, 5
    %v2447 = vand.u32 %v2445, 31
    %v2448 = vsub.s32 32, %v2447
    %v2449 = vshrl.u32 683565275, %v2448
    %v2450 = vshll.u32 683565275, %v2447
    %v2451 = vshrl.u32 2475754826, %v2448
    %v2452 = vor.u32 %v2450, %v2451
    %v2453 = vshll.u32 2475754826, %v2447
    %v2454 = vshrl.u32 2131351028, %v2448
    %v2455 = vor.u32 %v2453, %v2454
    %v2456 = vshll.u32 2131351028, %v2447
    %v2457 = vshrl.u32 2102212464, %v2448
    %v2458 = vor.u32 %v2456, %v2457
    %v2459 = vshll.u32 2102212464, %v2447
    %v2460 = vshrl.u32 920167782, %v2448
    %v2461 = vor.u32 %v2459, %v2460
    %v2462 = vshll.u32 920167782, %v2447
    %v2463 = vshrl.u32 1326507024, %v2448
    %v2464 = vor.u32 %v2462, %v2463
    %vm2465 = vcmp.lt.s32.totalorder %v2446, 1
    %vm2466 = vcmp.lt.s32.totalorder %v2446, 2
    %vm2467 = vcmp.lt.s32.totalorder %v2446, 3
    %vm2468 = vcmp.lt.s32.totalorder %v2446, 4
    %v2469 = vsel %vm2465, %v2449, %v2452
    %v2470 = vsel %vm2468, %v2458, 2102212464
    %v2471 = vsel %vm2467, %v2455, %v2470
    %v2472 = vsel %vm2466, %v2469, %v2471
    %v2473 = vsel %vm2465, %v2452, %v2455
    %v2474 = vsel %vm2468, %v2461, 920167782
    %v2475 = vsel %vm2467, %v2458, %v2474
    %v2476 = vsel %vm2466, %v2473, %v2475
    %v2477 = vsel %vm2465, %v2455, %v2458
    %v2478 = vsel %vm2468, %v2464, 1326507024
    %v2479 = vsel %vm2467, %v2461, %v2478
    %v2480 = vsel %vm2466, %v2477, %v2479
    %v2481 = vshll.u32 %v2441, 8
    %v2482 = vmul.u32.u64.compose %v2481, %v2480
    %v2483 = vextract.low.u32 %v2482
    %v2484 = vextract.high.u32 %v2482
    %v2485 = vmul.u32.u64.compose %v2481, %v2476
    %v2486 = vextract.low.u32 %v2485
    %v2487 = vextract.high.u32 %v2485
    %v2488 = vmul.u32 %v2481, %v2472
    %v2489 = vadd.s32 %v2484, %v2486
    %vm2490 = vc.u32 %v2484, %v2486
    %v2491 = vadd.s32 %v2487, 1
    %v2492 = vsel %vm2490, %v2491, %v2487
    %v2493 = vadd.s32 %v2488, %v2492
    %v2494 = vadd.s32 %v2493, 536870912
    %v2495 = vshrl.u32 %v2494, 30
    %v2496 = vshll.u32 %v2495, 30
    %v2497 = vsub.s32 %v2493, %v2496
    %vm2498 = vcmp.lt.s32.totalorder %v2497, 0
    %v2499 = vsub.s32 0, %v2497
    %v2500 = vsel %vm2498, %v2499, %v2497
    %v2501 = vclz %v2500
    %v2502 = vsub.s32 %v2501, 2
    %vm2503 = vcmp.gt.s32.totalorder 0, %v2502
    %v2504 = vsel %vm2503, 0, %v2502
    %v2505 = vsub.s32 32, %v2504
    %v2506 = vshll.u32 %v2497, %v2504
    %v2507 = vshrl.u32 %v2489, %v2505
    %v2508 = vor.u32 %v2506, %v2507
    %v2509 = vsub.s32 4294967266, %v2504
    %v2510 = vadd.s32 %v2509, 127
    %v2511 = vshll.u32 %v2510, 23
    %v2512 = vor.u32 4788187, %v2511
    %v2513 = vand.u32 2147483647, %v2512
    %v2515 = vcvt.s32.f32 %v2508
    %v2516 = vmul.f32 %v2515, %v2513
    %v2517 = vxor.u32 %v2516, 2147483648
    %v2518 = vsel %vm2435, %v2517, %v2516
    %v2519 = vsub.s32 4, %v2495
    %v2520 = vsel %vm2435, %v2519, %v2495
    %v2521 = vsel %vm2434, %v2432, %v2518
    %v2522 = vsel %vm2434, 0, %v2520
    %v2523 = vcosq.f32.pop %v2521
    %v2524 = vsinq.f32.pop %v2521
    %vm2525 = vweird.f32 %v2432
    %v2526 = vadd.s32 %v2522, 3
    %v2527 = vand.u32 %v2526, 3
    %vm2528 = vcmp.lt.s32.totalorder %v2527, 2
    %vm2529 = vcmp.eq.s32.totalorder %v2527, 0
    %v2530 = vxor.u32 %v2524, 2147483648
    %v2531 = vsel %vm2529, %v2523, %v2530
    %vm2532 = vcmp.eq.s32.totalorder %v2527, 2
    %v2533 = vxor.u32 %v2523, 2147483648
    %v2534 = vsel %vm2532, %v2533, %v2524
    %v2535 = vsel %vm2528, %v2531, %v2534
    %v2536 = vsel %vm2525, nan, %v2535
    %v2537 = vand.u32 2147483647, %v2432
    %vm2538 = vcmp.le.f32.partialorder %v2537, 0.7853982
    %vm2539 = vcmp.lt.s32.totalorder %v2432, 0
    %v2540 = vand.u32 %v2432, 2139095040
    %v2541 = vshrl.u32 %v2540, 23
    %v2542 = vsub.s32 %v2541, 127
    %v2543 = vand.u32 2147483647, %v2432
    %v2544 = vand.u32 %v2543, 8388607
    %v2545 = vor.u32 %v2544, 8388608
    %v2546 = vsub.s32 0, %v2545
    %v2547 = vadd.s32 %v2542, 1
    %vm2548 = vcmp.gt.s32.totalorder %v2547, 0
    %v2549 = vsel %vm2548, %v2547, 0
    %v2550 = vshrl.u32 %v2549, 5
    %v2551 = vand.u32 %v2549, 31
    %v2552 = vsub.s32 32, %v2551
    %v2553 = vshrl.u32 683565275, %v2552
    %v2554 = vshll.u32 683565275, %v2551
    %v2555 = vshrl.u32 2475754826, %v2552
    %v2556 = vor.u32 %v2554, %v2555
    %v2557 = vshll.u32 2475754826, %v2551
    %v2558 = vshrl.u32 2131351028, %v2552
    %v2559 = vor.u32 %v2557, %v2558
    %v2560 = vshll.u32 2131351028, %v2551
    %v2561 = vshrl.u32 2102212464, %v2552
    %v2562 = vor.u32 %v2560, %v2561
    %v2563 = vshll.u32 2102212464, %v2551
    %v2564 = vshrl.u32 920167782, %v2552
    %v2565 = vor.u32 %v2563, %v2564
    %v2566 = vshll.u32 920167782, %v2551
    %v2567 = vshrl.u32 1326507024, %v2552
    %v2568 = vor.u32 %v2566, %v2567
    %vm2569 = vcmp.lt.s32.totalorder %v2550, 1
    %vm2570 = vcmp.lt.s32.totalorder %v2550, 2
    %vm2571 = vcmp.lt.s32.totalorder %v2550, 3
    %vm2572 = vcmp.lt.s32.totalorder %v2550, 4
    %v2573 = vsel %vm2569, %v2553, %v2556
    %v2574 = vsel %vm2572, %v2562, 2102212464
    %v2575 = vsel %vm2571, %v2559, %v2574
    %v2576 = vsel %vm2570, %v2573, %v2575
    %v2577 = vsel %vm2569, %v2556, %v2559
    %v2578 = vsel %vm2572, %v2565, 920167782
    %v2579 = vsel %vm2571, %v2562, %v2578
    %v2580 = vsel %vm2570, %v2577, %v2579
    %v2581 = vsel %vm2569, %v2559, %v2562
    %v2582 = vsel %vm2572, %v2568, 1326507024
    %v2583 = vsel %vm2571, %v2565, %v2582
    %v2584 = vsel %vm2570, %v2581, %v2583
    %v2585 = vshll.u32 %v2545, 8
    %v2586 = vmul.u32.u64.compose %v2585, %v2584
    %v2587 = vextract.low.u32 %v2586
    %v2588 = vextract.high.u32 %v2586
    %v2589 = vmul.u32.u64.compose %v2585, %v2580
    %v2590 = vextract.low.u32 %v2589
    %v2591 = vextract.high.u32 %v2589
    %v2592 = vmul.u32 %v2585, %v2576
    %v2593 = vadd.s32 %v2588, %v2590
    %vm2594 = vc.u32 %v2588, %v2590
    %v2595 = vadd.s32 %v2591, 1
    %v2596 = vsel %vm2594, %v2595, %v2591
    %v2597 = vadd.s32 %v2592, %v2596
    %v2598 = vadd.s32 %v2597, 536870912
    %v2599 = vshrl.u32 %v2598, 30
    %v2600 = vshll.u32 %v2599, 30
    %v2601 = vsub.s32 %v2597, %v2600
    %vm2602 = vcmp.lt.s32.totalorder %v2601, 0
    %v2603 = vsub.s32 0, %v2601
    %v2604 = vsel %vm2602, %v2603, %v2601
    %v2605 = vclz %v2604
    %v2606 = vsub.s32 %v2605, 2
    %vm2607 = vcmp.gt.s32.totalorder 0, %v2606
    %v2608 = vsel %vm2607, 0, %v2606
    %v2609 = vsub.s32 32, %v2608
    %v2610 = vshll.u32 %v2601, %v2608
    %v2611 = vshrl.u32 %v2593, %v2609
    %v2612 = vor.u32 %v2610, %v2611
    %v2613 = vsub.s32 4294967266, %v2608
    %v2614 = vadd.s32 %v2613, 127
    %v2615 = vshll.u32 %v2614, 23
    %v2616 = vor.u32 4788187, %v2615
    %v2617 = vand.u32 2147483647, %v2616
    %v2619 = vcvt.s32.f32 %v2612
    %v2620 = vmul.f32 %v2619, %v2617
    %v2621 = vxor.u32 %v2620, 2147483648
    %v2622 = vsel %vm2539, %v2621, %v2620
    %v2623 = vsub.s32 4, %v2599
    %v2624 = vsel %vm2539, %v2623, %v2599
    %v2625 = vsel %vm2538, %v2432, %v2622
    %v2626 = vsel %vm2538, 0, %v2624
    %v2627 = vcosq.f32.pop %v2625
    %v2628 = vsinq.f32.pop %v2625
    %vm2629 = vweird.f32 %v2432
    %v2630 = vand.u32 %v2626, 3
    %vm2631 = vcmp.lt.s32.totalorder %v2630, 2
    %vm2632 = vcmp.eq.s32.totalorder %v2630, 0
    %v2633 = vxor.u32 %v2628, 2147483648
    %v2634 = vsel %vm2632, %v2627, %v2633
    %vm2635 = vcmp.eq.s32.totalorder %v2630, 2
    %v2636 = vxor.u32 %v2627, 2147483648
    %v2637 = vsel %vm2635, %v2636, %v2628
    %v2638 = vsel %vm2631, %v2634, %v2637
    %v2639 = vsel %vm2629, nan, %v2638
    %v2640 = vmul.f32 %v1920, %v1920
    %v2641 = vstv %s1940
    %v2642 = vmul.f32 %v2536, %v2641
    %v2643 = vstv %s1944
    %v2644 = vmul.f32 %v2643, %v1920
    %v2645 = vadd.f32 %v2642, %v2644
    %v2646 = vsub.f32 1.0, %v2639
    %v2647 = vstv %s1941
    %v2648 = vmul.f32 %v2646, %v2647
    %v2649 = vmul.f32 %v2640, 0.5
    %v2650 = vmul.f32 %v2643, %v2649
    %v2651 = vadd.f32 %v2648, %v2650
    %v2652 = vsub.f32 %v2432, %v2536
    %v2653 = vstv %s1942
    %v2654 = vmul.f32 %v2652, %v2653
    %v2655 = vmul.f32 %v2640, %v1920
    %v2656 = vmul.f32 %v2655, 0.16666667
    %v2657 = vmul.f32 %v2643, %v2656
    %v2658 = vadd.f32 %v2654, %v2657
    %s2659 = ssub.f32 0.0, %s1935
    %s2660 = ssub.f32 0.0, %s1933
    %s2661 = ssub.f32 0.0, %s1934
    %s2662 = smul.f32 %s1933, %s1933
    %s2663 = ssub.f32 %s2662, %s1943
    %s2664 = smul.f32 %s1933, %s1934
    %s2665 = smul.f32 %s1933, %s1935
    %s2666 = smul.f32 %s1934, %s1934
    %s2667 = ssub.f32 %s2666, %s1943
    %s2668 = smul.f32 %s1934, %s1935
    %s2669 = smul.f32 %s1935, %s1935
    %s2670 = ssub.f32 %s2669, %s1943
    %s2671 = smul.f32 %s1934, %s1938
    %s2672 = smul.f32 %s1935, %s1937
    %s2673 = ssub.f32 %s2671, %s2672
    %s2674 = smul.f32 %s1935, %s1936
    %s2675 = smul.f32 %s1933, %s1938
    %s2676 = ssub.f32 %s2674, %s2675
    %s2677 = smul.f32 %s1933, %s1937
    %s2678 = smul.f32 %s1934, %s1936
    %s2679 = ssub.f32 %s2677, %s2678
    %s2680 = smul.f32 %s1934, %s2679
    %s2681 = smul.f32 %s1935, %s2676
    %s2682 = ssub.f32 %s2680, %s2681
    %s2683 = smul.f32 %s1935, %s2673
    %s2684 = smul.f32 %s1933, %s2679
    %s2685 = ssub.f32 %s2683, %s2684
    %s2686 = smul.f32 %s1933, %s2676
    %s2687 = smul.f32 %s1934, %s2673
    %s2688 = ssub.f32 %s2686, %s2687
    %v2689 = vstv %s2663
    %v2690 = vmul.f32 %v2651, %v2689
    %v2691 = vadd.f32 %v2690, 1.0
    %v2692 = vstv %s2659
    %v2693 = vmul.f32 %v2645, %v2692
    %v2694 = vstv %s2664
    %v2695 = vmul.f32 %v2651, %v2694
    %v2696 = vadd.f32 %v2693, %v2695
    %v2697 = vmul.f32 %v2645, %v2388
    %v2698 = vstv %s2665
    %v2699 = vmul.f32 %v2651, %v2698
    %v2700 = vadd.f32 %v2697, %v2699
    %v2701 = vmul.f32 %v2645, %v2386
    %v2702 = vadd.f32 %v2701, %v2695
    %v2703 = vstv %s2667
    %v2704 = vmul.f32 %v2651, %v2703
    %v2705 = vadd.f32 %v2704, 1.0
    %v2706 = vstv %s2660
    %v2707 = vmul.f32 %v2645, %v2706
    %v2708 = vstv %s2668
    %v2709 = vmul.f32 %v2651, %v2708
    %v2710 = vadd.f32 %v2707, %v2709
    %v2711 = vstv %s2661
    %v2712 = vmul.f32 %v2645, %v2711
    %v2713 = vadd.f32 %v2712, %v2699
    %v2714 = vmul.f32 %v2645, %v2391
    %v2715 = vadd.f32 %v2714, %v2709
    %v2716 = vstv %s2670
    %v2717 = vmul.f32 %v2651, %v2716
    %v2718 = vadd.f32 %v2717, 1.0
    %v2719 = vmul.f32 %v1920, %v2398
    %v2720 = vstv %s2673
    %v2721 = vmul.f32 %v2651, %v2720
    %v2722 = vadd.f32 %v2719, %v2721
    %v2723 = vstv %s2682
    %v2724 = vmul.f32 %v2658, %v2723
    %v2725 = vadd.f32 %v2722, %v2724
    %v2726 = vmul.f32 %v1920, %v2400
    %v2727 = vstv %s2676
    %v2728 = vmul.f32 %v2651, %v2727
    %v2729 = vadd.f32 %v2726, %v2728
    %v2730 = vstv %s2685
    %v2731 = vmul.f32 %v2658, %v2730
    %v2732 = vadd.f32 %v2729, %v2731
    %v2733 = vmul.f32 %v1920, %v2402
    %v2734 = vstv %s2679
    %v2735 = vmul.f32 %v2651, %v2734
    %v2736 = vadd.f32 %v2733, %v2735
    %v2737 = vstv %s2688
    %v2738 = vmul.f32 %v2658, %v2737
    %v2739 = vadd.f32 %v2736, %v2738
    %v2740 = vmul.f32 %v2327, %v2691
    %v2741 = vmul.f32 %v2332, %v2702
    %v2742 = vadd.f32 %v2740, %v2741
    %v2743 = vmul.f32 %v2337, %v2713
    %v2744 = vadd.f32 %v2742, %v2743
    %v2745 = vmul.f32 %v2327, %v2696
    %v2746 = vmul.f32 %v2332, %v2705
    %v2747 = vadd.f32 %v2745, %v2746
    %v2748 = vmul.f32 %v2337, %v2715
    %v2749 = vadd.f32 %v2747, %v2748
    %v2750 = vmul.f32 %v2327, %v2700
    %v2751 = vmul.f32 %v2332, %v2710
    %v2752 = vadd.f32 %v2750, %v2751
    %v2753 = vmul.f32 %v2337, %v2718
    %v2754 = vadd.f32 %v2752, %v2753
    %v2755 = vmul.f32 %v2342, %v2691
    %v2756 = vmul.f32 %v2347, %v2702
    %v2757 = vadd.f32 %v2755, %v2756
    %v2758 = vmul.f32 %v2352, %v2713
    %v2759 = vadd.f32 %v2757, %v2758
    %v2760 = vmul.f32 %v2342, %v2696
    %v2761 = vmul.f32 %v2347, %v2705
    %v2762 = vadd.f32 %v2760, %v2761
    %v2763 = vmul.f32 %v2352, %v2715
    %v2764 = vadd.f32 %v2762, %v2763
    %v2765 = vmul.f32 %v2342, %v2700
    %v2766 = vmul.f32 %v2347, %v2710
    %v2767 = vadd.f32 %v2765, %v2766
    %v2768 = vmul.f32 %v2352, %v2718
    %v2769 = vadd.f32 %v2767, %v2768
    %v2770 = vmul.f32 %v2357, %v2691
    %v2771 = vmul.f32 %v2362, %v2702
    %v2772 = vadd.f32 %v2770, %v2771
    %v2773 = vmul.f32 %v2367, %v2713
    %v2774 = vadd.f32 %v2772, %v2773
    %v2775 = vmul.f32 %v2357, %v2696
    %v2776 = vmul.f32 %v2362, %v2705
    %v2777 = vadd.f32 %v2775, %v2776
    %v2778 = vmul.f32 %v2367, %v2715
    %v2779 = vadd.f32 %v2777, %v2778
    %v2780 = vmul.f32 %v2357, %v2700
    %v2781 = vmul.f32 %v2362, %v2710
    %v2782 = vadd.f32 %v2780, %v2781
    %v2783 = vmul.f32 %v2367, %v2718
    %v2784 = vadd.f32 %v2782, %v2783
    %v2785 = vmul.f32 %v2327, %v2725
    %v2786 = vmul.f32 %v2332, %v2732
    %v2787 = vadd.f32 %v2785, %v2786
    %v2788 = vmul.f32 %v2337, %v2739
    %v2789 = vadd.f32 %v2787, %v2788
    %v2790 = vadd.f32 %v2789, %v2373
    %v2791 = vmul.f32 %v2342, %v2725
    %v2792 = vmul.f32 %v2347, %v2732
    %v2793 = vadd.f32 %v2791, %v2792
    %v2794 = vmul.f32 %v2352, %v2739
    %v2795 = vadd.f32 %v2793, %v2794
    %v2796 = vadd.f32 %v2795, %v2379
    %v2797 = vmul.f32 %v2357, %v2725
    %v2798 = vmul.f32 %v2362, %v2732
    %v2799 = vadd.f32 %v2797, %v2798
    %v2800 = vmul.f32 %v2367, %v2739
    %v2801 = vadd.f32 %v2799, %v2800
    %v2802 = vadd.f32 %v2801, %v2385
    %s2803 = sld [smem:[#allocation9 + $0x20]]
    %s2804 = sld [smem:[#allocation9 + $0x21]]
    %s2805 = sld [smem:[#allocation9 + $0x22]]
    %s2806 = sld [smem:[#allocation9 + $0x24]]
    %s2807 = sld [smem:[#allocation9 + $0x25]]
    %s2808 = sld [smem:[#allocation9 + $0x26]]
    %s2809 = sld [smem:[#allocation9 + $0x28]]
    %s2810 = sld [smem:[#allocation9 + $0x29]]
    %s2811 = sld [smem:[#allocation9 + $0x2a]]
    %s2812 = sld [smem:[#allocation9 + $0x23]]
    %s2813 = sld [smem:[#allocation9 + $0x27]]
    %s2814 = sld [smem:[#allocation9 + $0x2b]]
    %v2815 = vstv %s2803
    %v2816 = vmul.f32 %v2744, %v2815
    %v2817 = vstv %s2806
    %v2818 = vmul.f32 %v2749, %v2817
    %v2819 = vadd.f32 %v2816, %v2818
    %v2820 = vstv %s2809
    %v2821 = vmul.f32 %v2754, %v2820
    %v2822 = vadd.f32 %v2819, %v2821
    %v2823 = vstv %s2804
    %v2824 = vmul.f32 %v2744, %v2823
    %v2825 = vstv %s2807
    %v2826 = vmul.f32 %v2749, %v2825
    %v2827 = vadd.f32 %v2824, %v2826
    %v2828 = vstv %s2810
    %v2829 = vmul.f32 %v2754, %v2828
    %v2830 = vadd.f32 %v2827, %v2829
    %v2831 = vstv %s2805
    %v2832 = vmul.f32 %v2744, %v2831
    %v2833 = vstv %s2808
    %v2834 = vmul.f32 %v2749, %v2833
    %v2835 = vadd.f32 %v2832, %v2834
    %v2836 = vstv %s2811
    %v2837 = vmul.f32 %v2754, %v2836
    %v2838 = vadd.f32 %v2835, %v2837
    %v2839 = vmul.f32 %v2759, %v2815
    %v2840 = vmul.f32 %v2764, %v2817
    %v2841 = vadd.f32 %v2839, %v2840
    %v2842 = vmul.f32 %v2769, %v2820
    %v2843 = vadd.f32 %v2841, %v2842
    %v2844 = vmul.f32 %v2759, %v2823
    %v2845 = vmul.f32 %v2764, %v2825
    %v2846 = vadd.f32 %v2844, %v2845
    %v2847 = vmul.f32 %v2769, %v2828
    %v2848 = vadd.f32 %v2846, %v2847
    %v2849 = vmul.f32 %v2759, %v2831
    %v2850 = vmul.f32 %v2764, %v2833
    %v2851 = vadd.f32 %v2849, %v2850
    %v2852 = vmul.f32 %v2769, %v2836
    %v2853 = vadd.f32 %v2851, %v2852
    %v2854 = vmul.f32 %v2774, %v2815
    %v2855 = vmul.f32 %v2779, %v2817
    %v2856 = vadd.f32 %v2854, %v2855
    %v2857 = vmul.f32 %v2784, %v2820
    %v2858 = vadd.f32 %v2856, %v2857
    %v2859 = vmul.f32 %v2774, %v2823
    %v2860 = vmul.f32 %v2779, %v2825
    %v2861 = vadd.f32 %v2859, %v2860
    %v2862 = vmul.f32 %v2784, %v2828
    %v2863 = vadd.f32 %v2861, %v2862
    %v2864 = vmul.f32 %v2774, %v2831
    %v2865 = vmul.f32 %v2779, %v2833
    %v2866 = vadd.f32 %v2864, %v2865
    %v2867 = vmul.f32 %v2784, %v2836
    %v2868 = vadd.f32 %v2866, %v2867
    %v2869 = vstv %s2812
    %v2870 = vmul.f32 %v2744, %v2869
    %v2871 = vstv %s2813
    %v2872 = vmul.f32 %v2749, %v2871
    %v2873 = vadd.f32 %v2870, %v2872
    %v2874 = vstv %s2814
    %v2875 = vmul.f32 %v2754, %v2874
    %v2876 = vadd.f32 %v2873, %v2875
    %v2877 = vadd.f32 %v2876, %v2790
    %v2878 = vmul.f32 %v2759, %v2869
    %v2879 = vmul.f32 %v2764, %v2871
    %v2880 = vadd.f32 %v2878, %v2879
    %v2881 = vmul.f32 %v2769, %v2874
    %v2882 = vadd.f32 %v2880, %v2881
    %v2883 = vadd.f32 %v2882, %v2796
    %v2884 = vmul.f32 %v2774, %v2869
    %v2885 = vmul.f32 %v2779, %v2871
    %v2886 = vadd.f32 %v2884, %v2885
    %v2887 = vmul.f32 %v2784, %v2874
    %v2888 = vadd.f32 %v2886, %v2887
    %v2889 = vadd.f32 %v2888, %v2802
    %s2890 = scalar_lea.vmem [#allocation10], 128
    %2891 = vst [vmem:[%s2890] sm:$0xff] %v2822
    %s2892 = scalar_lea.vmem [#allocation10], 136
    %2893 = vst [vmem:[%s2892] sm:$0xff] %v2830
    %s2894 = scalar_lea.vmem [#allocation10], 144
    %2895 = vst [vmem:[%s2894] sm:$0xff] %v2838
    %s2896 = scalar_lea.vmem [#allocation10], 152
    %2897 = vst [vmem:[%s2896] sm:$0xff] %v2877
    %s2898 = scalar_lea.vmem [#allocation10], 160
    %2899 = vst [vmem:[%s2898] sm:$0xff] %v2843
    %s2900 = scalar_lea.vmem [#allocation10], 168
    %2901 = vst [vmem:[%s2900] sm:$0xff] %v2848
    %s2902 = scalar_lea.vmem [#allocation10], 176
    %2903 = vst [vmem:[%s2902] sm:$0xff] %v2853
    %s2904 = scalar_lea.vmem [#allocation10], 184
    %2905 = vst [vmem:[%s2904] sm:$0xff] %v2883
    %s2906 = scalar_lea.vmem [#allocation10], 192
    %2907 = vst [vmem:[%s2906] sm:$0xff] %v2858
    %s2908 = scalar_lea.vmem [#allocation10], 200
    %2909 = vst [vmem:[%s2908] sm:$0xff] %v2863
    %s2910 = scalar_lea.vmem [#allocation10], 208
    %2911 = vst [vmem:[%s2910] sm:$0xff] %v2868
    %s2912 = scalar_lea.vmem [#allocation10], 216
    %2913 = vst [vmem:[%s2912] sm:$0xff] %v2889
    %s2914 = scalar_lea.vmem [#allocation10], 224
    %2915 = vst [vmem:[%s2914] sm:$0xff] 0.0
    %s2916 = scalar_lea.vmem [#allocation10], 232
    %2917 = vst [vmem:[%s2916] sm:$0xff] 0.0
    %s2918 = scalar_lea.vmem [#allocation10], 240
    %2919 = vst [vmem:[%s2918] sm:$0xff] 0.0
    %s2920 = scalar_lea.vmem [#allocation10], 248
    %2921 = vst [vmem:[%s2920] sm:$0xff] 1.0
    // Predicated region
    $region34: #{tpu_custom_call.1} parent=1 // pred_check
      _
    $region35: #{tpu_custom_call.1} parent=1 // pred_check_branch
      %2923 = sbr.rel (0) target = $region37
    $region36: #{tpu_custom_call.1} parent=1 // pred_region
      %s2925 = ssub.s32 4096, 4096
      %2926 = vsyncadd [#allocation4], %s2925
      %s2927 = sshll.u32 [#allocation10], 4
      %s2928 = int_to_ptr.vmem [resolvable:$true] %s2927
      %2933 = dma.vmem_to_hbm [thread:$0]  %s2928, 4096, %s4, [#allocation4], 128, 128, 8
    $region37: #{tpu_custom_call.1} parent=1 // pred_fallthru
      _
    // Predicated region
    $region38: #{tpu_custom_call.1} parent=1 // pred_check
      _
    $region39: #{tpu_custom_call.1} parent=1 // pred_check_branch
      %2935 = sbr.rel (0) target = $region41
    $region40: #{tpu_custom_call.1} parent=1 // pred_region
      %s2937 = ssub.s32 2304, 2304
      %2938 = vsyncadd [#allocation12], %s2937
      %s2939 = sshll.u32 [#allocation11], 4
      %s2940 = int_to_ptr.vmem [resolvable:$true] %s2939
      %2945 = dma.vmem_to_hbm [thread:$0]  %s2940, 2304, %s5, [#allocation12], 128, 128, 8
    $region41: #{tpu_custom_call.1} parent=1 // pred_fallthru
      _
    // Predicated region
    $region42: #{tpu_custom_call.1} parent=1 // pred_check
      _
    $region43: #{tpu_custom_call.1} parent=1 // pred_check_branch
      %2947 = sbr.rel (0) target = $region45
    $region44: #{tpu_custom_call.1} parent=1 // pred_region
      %s2949 = ssub.s32 2304, 2304
      %2950 = vsyncadd [#allocation12], %s2949
      %s2951 = sshll.u32 [#allocation13], 4
      %s2952 = int_to_ptr.vmem [resolvable:$true] %s2951
      %2957 = dma.vmem_to_hbm [thread:$0]  %s2952, 2304, %s6, [#allocation12], 128, 128, 8
    $region45: #{tpu_custom_call.1} parent=1 // pred_fallthru
      _
    // Predicated region
    $region46: #{tpu_custom_call.1} parent=1 // pred_check
      _
    $region47: #{tpu_custom_call.1} parent=1 // pred_check_branch
      %2959 = sbr.rel (0) target = $region49
    $region48: #{tpu_custom_call.1} parent=1 // pred_region
      %2960 = dma.done [#allocation4], 4096
    $region49: #{tpu_custom_call.1} parent=1 // pred_fallthru
      _
    // Predicated region
    $region50: #{tpu_custom_call.1} parent=1 // pred_check
      _
    $region51: #{tpu_custom_call.1} parent=1 // pred_check_branch
      %2962 = sbr.rel (0) target = $region53
    $region52: #{tpu_custom_call.1} parent=1 // pred_region
      %2963 = dma.done [#allocation12], 2304
    $region53: #{tpu_custom_call.1} parent=1 // pred_fallthru
      _
    // Predicated region
    $region54: #{tpu_custom_call.1} parent=1 // pred_check
      _
    $region55: #{tpu_custom_call.1} parent=1 // pred_check_branch
      %2965 = sbr.rel (0) target = $region57
    $region56: #{tpu_custom_call.1} parent=1 // pred_region
      %2966 = dma.done [#allocation12], 2304
    $region57: #{tpu_custom_call.1} parent=1 // pred_fallthru
      _
    %2967 = vsyncpa [#allocation3], 1
    %2968 = vsyncpa [#allocation4], 1
    %2969 = vsyncpa [#allocation12], 1
    %2970 = vsyncpa [#allocation5], 1
    %2971 = vsyncpa [#allocation8], 1

</llo_original>
